<compile_context>
chip_gen: v7x
topology: tpu7x:2x2x1
jax: 0.10.0
libtpu: 0.0.40
codegen_flags: <defaults>
</compile_context>

<pallas_src>
import jax
import jax.numpy as jnp
from jax import lax
from jax.experimental import pallas as pl
from jax.experimental.pallas import tpu as pltpu

BN_EPS = 1e-5


# ------------------------------ Pallas kernels --------------------------------

def _conv1_vpu(x, w1t, b1t):
    """1x1 conv with cin=4 as 4 VPU broadcast-FMAs, channel-major.

    x: (4, tn) f32, w1t: (64, 4) f32, b1t: (64, 1) f32 -> relu(w1t @ x + b1t).
    """
    h = w1t[:, 0:1] * x[0:1, :]
    h = h + w1t[:, 1:2] * x[1:2, :]
    h = h + w1t[:, 2:3] * x[2:3, :]
    h = h + w1t[:, 3:4] * x[3:4, :]
    return jnp.maximum(h + b1t, 0.0)


def make_feat_kernel(tn, tiles_per_split, n_valid, needs_mask):
    """Phase 1: per-point features + running channel-wise max (global feature)."""

    def feat_kernel(x_ref, w1_ref, b1_ref, w2_ref, b2_ref, w3_ref, g_ref):
        s = pl.program_id(1)
        t = pl.program_id(2)
        x = x_ref[0]                                                # (4, tn) f32

        # conv1(4->64)+bn1+relu on the VPU (a K=4 matmul would waste the MXU).
        h1 = _conv1_vpu(x, w1_ref[...], b1_ref[...])                # (64, tn)
        # conv2(64->128)+bn2+relu -- bf16 MXU operands, f32 accumulation.
        h2 = jnp.maximum(
            jnp.dot(w2_ref[...], h1.astype(jnp.bfloat16),
                    preferred_element_type=jnp.float32) + b2_ref[...], 0.0)   # (128, tn)
        # conv3(128->1024)+bn3 scale only; the bias b3 is hoisted to the wrapper
        # (max over points of a per-channel-constant add commutes).
        h3 = jnp.dot(w3_ref[...], h2.astype(jnp.bfloat16),
                     preferred_element_type=jnp.float32)            # (1024, tn)

        if needs_mask:
            # Mask lanes belonging to padded points so they never win the max.
            base = (s * tiles_per_split + t) * tn
            lane = lax.broadcasted_iota(jnp.int32, (1, tn), 1)
            valid = (base + lane) < n_valid
            h3 = jnp.where(valid, h3, -jnp.inf)

        # Running max over the point (lane) axis, in the revisited output block.
        @pl.when(t == 0)
        def _():
            g_ref[0, 0] = jnp.full((1024, 1), -jnp.inf, dtype=jnp.float32)
        g_ref[0, 0] = jnp.maximum(g_ref[0, 0], jnp.max(h3, axis=1, keepdims=True))

    return feat_kernel


def head_kernel(x_ref, gb4_ref, w1_ref, b1_ref, w4p_ref,
                w5_ref, b5_ref, w6_ref, b6_ref, w7_ref, b7_ref, out_ref):
    """Phase 2: segmentation head on one point tile (channel-major)."""
    x = x_ref[0]                                                    # (4, tn) f32
    # Recompute the cheap conv1 features instead of staging (64,N) in HBM.
    h1 = _conv1_vpu(x, w1_ref[...], b1_ref[...])                    # (64, tn)

    # Head conv1(1088->512)+bn1+relu: the channel concat [global, point_feat] is
    # a split matmul; the per-batch global part (g @ W4[:1024] + b4) arrives as
    # the precomputed (512,1) column gb4.
    h4 = jnp.maximum(
        jnp.dot(w4p_ref[...], h1.astype(jnp.bfloat16),
                preferred_element_type=jnp.float32) + gb4_ref[0], 0.0)       # (512, tn)
    h5 = jnp.maximum(
        jnp.dot(w5_ref[...], h4.astype(jnp.bfloat16),
                preferred_element_type=jnp.float32) + b5_ref[...], 0.0)      # (256, tn)
    h6 = jnp.maximum(
        jnp.dot(w6_ref[...], h5.astype(jnp.bfloat16),
                preferred_element_type=jnp.float32) + b6_ref[...], 0.0)      # (128, tn)
    # Final 128->1 projection off the MXU: VPU multiply + sublane reduce.
    out_ref[0] = (jnp.sum(h6 * w7_ref[...], axis=0, keepdims=True)
                  + b7_ref[...])                                             # (1, tn)


# ------------------------------ wrapper ---------------------------------------

def _const_spec(shape):
    # Constant block index across the grid -> the block is not re-fetched per step.
    zeros = (0,) * len(shape)
    return pl.BlockSpec(shape, lambda *_: zeros)


def _round_up(x, m):
    return ((x + m - 1) // m) * m


def _choose_tile(n, max_tile):
    max_tile = max(128, (max_tile // 128) * 128)
    return min(max_tile, _round_up(n, 128))


def _vmem_limit_bytes():
    # <= 75% of physical VMEM (48 MiB on v7x's 64 MiB, 96 MiB on v5e/v6e's
    # 128 MiB) so the compiler keeps headroom for scratch / double-buffering.
    try:
        cap = pltpu.get_tpu_info().vmem_capacity_bytes
        return int(min(cap * 3 // 4, 96 << 20))
    except Exception:
        return 48 << 20


def _default_max_tile():
    # 4096 points/tile on 128-MiB-VMEM parts (v5e/v6e), 2048 on v7x (64 MiB).
    try:
        cap = pltpu.get_tpu_info().vmem_capacity_bytes
        return 4096 if cap >= (100 << 20) else 2048
    except Exception:
        return 2048


def pointnet_forward(x_ncl, params, *, max_tile_n=None):
    """x_ncl: (B, 4, N) float32 (PyTorch NCL). Returns (B, N, 1) float32."""
    B, C, N = x_ncl.shape
    assert C == 4
    if max_tile_n is None:
        max_tile_n = _default_max_tile()

    tn = _choose_tile(N, max_tile_n)
    n_pad = _round_up(N, tn)
    nt = n_pad // tn
    needs_mask = n_pad != N
    if needs_mask:
        x_ncl = jnp.pad(x_ncl, ((0, 0), (0, 0), (0, n_pad - N)))
    # Extra parallel split for phase 1 so both v7x TensorCores work even at B=1.
    P = 2 if nt % 2 == 0 else 1
    tps = nt // P
    vmem_limit = _vmem_limit_bytes()

    # -------- phase 1: point features + global max-pooled feature --------
    feat_params = [params["w1t"], params["b1t"], params["w2t"],
                   params["b2t"], params["w3t"]]
    g_part = pl.pallas_call(
        make_feat_kernel(tn, tps, N, needs_mask),
        out_shape=jax.ShapeDtypeStruct((B, P, 1024, 1), jnp.float32),
        grid_spec=pltpu.PrefetchScalarGridSpec(
            num_scalar_prefetch=0,
            grid=(B, P, tps),
            in_specs=[pl.BlockSpec((1, 4, tn), lambda b, s, t: (b, 0, s * tps + t))]
                     + [_const_spec(q.shape) for q in feat_params],
            out_specs=pl.BlockSpec((1, 1, 1024, 1), lambda b, s, t: (b, s, 0, 0)),
        ),
        compiler_params=pltpu.CompilerParams(
            dimension_semantics=("parallel", "parallel", "arbitrary"),
            vmem_limit_bytes=vmem_limit),
    )(x_ncl, *feat_params)

    # Reduce the P split-partials, add the hoisted conv3 bias, and do the
    # per-batch global part of the head's first layer (tiny, plain XLA, f32):
    #   gb4[b] = (max_n h3[b,:,n] + b3) @ W4[:1024] + b4
    g = jnp.max(g_part, axis=1)[:, :, 0] + params["b3"][None, :]     # (B, 1024)
    gb4 = (g @ params["w4g"] + params["b4"][None, :])[:, :, None]    # (B, 512, 1)

    # -------- phase 2: segmentation head, independent per point tile --------
    head_params = [params["w1t"], params["b1t"], params["w4pt"],
                   params["w5t"], params["b5t"], params["w6t"], params["b6t"],
                   params["w7"], params["b7"]]
    out = pl.pallas_call(
        head_kernel,
        out_shape=jax.ShapeDtypeStruct((B, 1, n_pad), jnp.float32),
        grid_spec=pltpu.PrefetchScalarGridSpec(
            num_scalar_prefetch=0,
            grid=(B, nt),
            in_specs=[pl.BlockSpec((1, 4, tn), lambda b, t: (b, 0, t)),
                      pl.BlockSpec((1, 512, 1), lambda b, t: (b, 0, 0))]
                     + [_const_spec(q.shape) for q in head_params],
            out_specs=pl.BlockSpec((1, 1, tn), lambda b, t: (b, 0, t)),
        ),
        compiler_params=pltpu.CompilerParams(
            # All tiles independent -> both TensorCores get work on v7x even at B=1.
            dimension_semantics=("parallel", "parallel"),
            vmem_limit_bytes=vmem_limit),
    )(x_ncl, gb4, *head_params)

    return out[:, 0, :N].reshape(B, N, 1)


# ----------------------- deterministic parameter setup ------------------------

def _init_conv(key, cin, cout):
    kw, kb = jax.random.split(key)
    w = jax.random.normal(kw, (cin, cout), jnp.float32) / jnp.sqrt(float(cin))
    b = 0.01 * jax.random.normal(kb, (cout,), jnp.float32)
    return w, b


def _init_bn(key, c):
    kg, kb, km, kv = jax.random.split(key, 4)
    gamma = 1.0 + 0.1 * jax.random.normal(kg, (c,), jnp.float32)
    beta = 0.1 * jax.random.normal(kb, (c,), jnp.float32)
    mean = 0.1 * jax.random.normal(km, (c,), jnp.float32)
    var = 1.0 + 0.1 * jax.random.uniform(kv, (c,), jnp.float32)
    return gamma, beta, mean, var


def _fold(w, b, bn):
    gamma, beta, mean, var = bn
    scale = gamma / jnp.sqrt(var + BN_EPS)
    return w * scale[None, :], b * scale + (beta - mean * scale)


def make_params(key):
    ks = jax.random.split(key, 14)
    raw = {
        "f1": (_init_conv(ks[0], 4, 64), _init_bn(ks[1], 64)),
        "f2": (_init_conv(ks[2], 64, 128), _init_bn(ks[3], 128)),
        "f3": (_init_conv(ks[4], 128, 1024), _init_bn(ks[5], 1024)),
        "c1": (_init_conv(ks[6], 1088, 512), _init_bn(ks[7], 512)),
        "c2": (_init_conv(ks[8], 512, 256), _init_bn(ks[9], 256)),
        "c3": (_init_conv(ks[10], 256, 128), _init_bn(ks[11], 128)),
        "c4": _init_conv(ks[12], 128, 1),
    }

    # Fold eval-mode BatchNorm into the preceding 1x1 conv: (xW+b)*s+t = x(Ws)+(bs+t)
    def fb(name):
        (w, b), bn = raw[name]
        return _fold(w, b, bn)

    w1, b1 = fb("f1")
    w2, b2 = fb("f2")
    w3, b3 = fb("f3")
    w4, b4 = fb("c1")
    w5, b5 = fb("c2")
    w6, b6 = fb("c3")
    w7, b7 = raw["c4"]

    bf16 = jnp.bfloat16
    folded = dict(
        # channel-major (Cout, Cin) weights; column biases (Cout, 1)
        w1t=w1.T,                        # (64, 4)    f32 (VPU path)
        b1t=b1[:, None],                 # (64, 1)
        w2t=w2.T.astype(bf16),           # (128, 64)
        b2t=b2[:, None],                 # (128, 1)
        w3t=w3.T.astype(bf16),           # (1024, 128)
        b3=b3,                           # (1024,)    hoisted out of the kernel
        # head conv1 split over the channel concat: global part stays f32 (used
        # by the hoisted XLA matmul), point-feature part is a bf16 MXU operand.
        w4g=w4[:1024],                   # (1024, 512) f32
        w4pt=w4[1024:].T.astype(bf16),   # (512, 64)
        b4=b4,                           # (512,)
        w5t=w5.T.astype(bf16),           # (256, 512)
        b5t=b5[:, None],                 # (256, 1)
        w6t=w6.T.astype(bf16),           # (128, 256)
        b6t=b6[:, None],                 # (128, 1)
        w7=w7,                           # (128, 1)   f32 (VPU/XLU final projection)
        b7=b7[None, :],                  # (1, 1)
    )
    return raw, folded


# -------------------- plain-JAX reference (mirrors PyTorch) -------------------

def reference_forward(x, raw):
    """x: (B, 4, N). Mirrors PointNetModel.forward with eval-mode BatchNorm (f32)."""
    def conv(y, wb):
        w, b = wb  # w: (cin, cout)
        return jnp.einsum("io,bin->bon", w, y) + b[None, :, None]

    def bn(y, p):
        gamma, beta, mean, var = p
        return ((y - mean[None, :, None]) / jnp.sqrt(var[None, :, None] + BN_EPS)
                * gamma[None, :, None] + beta[None, :, None])

    B, _, N = x.shape
    # PointNetfeat(global_feat=False)
    h = jax.nn.relu(bn(conv(x, raw["f1"][0]), raw["f1"][1]))
    point_feat = h
    h = jax.nn.relu(bn(conv(h, raw["f2"][0]), raw["f2"][1]))
    h = bn(conv(h, raw["f3"][0]), raw["f3"][1])
    g = jnp.max(h, axis=2, keepdims=True)                            # (B, 1024, 1)
    g = jnp.broadcast_to(g, (B, 1024, N))
    h = jnp.concatenate([g, point_feat], axis=1)                     # (B, 1088, N)
    # head
    h = jax.nn.relu(bn(conv(h, raw["c1"][0]), raw["c1"][1]))
    h = jax.nn.relu(bn(conv(h, raw["c2"][0]), raw["c2"][1]))
    h = jax.nn.relu(bn(conv(h, raw["c3"][0]), raw["c3"][1]))
    h = conv(h, raw["c4"])                                           # (B, 1, N)
    return jnp.transpose(h, (0, 2, 1)).reshape(B, N, 1)


if __name__ == "__main__":
    key = jax.random.PRNGKey(0)
    k_param, k_x = jax.random.split(key)
    raw, folded = make_params(k_param)

    # N=500 is not a multiple of 128 -> exercises pad+mask; with max_tile_n=128
    # it gives 4 tiles -> exercises the P=2 phase-1 split and the multi-tile head.
    B, N = 2, 500
    x = jax.random.normal(k_x, (B, 4, N), jnp.float32)               # PyTorch NCL input

    out = pointnet_forward(x, folded, max_tile_n=128)
    out = jax.block_until_ready(out)
    assert out.shape == (B, N, 1), out.shape

    ref = jax.block_until_ready(reference_forward(x, raw))
    # bf16 MXU operands vs. the all-f32 reference -> loosened tolerance.
    if not jnp.allclose(out, ref, rtol=5e-2, atol=1e-1):
        err = float(jnp.max(jnp.abs(out - ref)))
        raise AssertionError(f"Pallas output does not match reference (max abs err {err})")

    print("KERNEL_OK")
</pallas_src>

<mosaic_0001>
module attributes {stable_mosaic.version = 11 : i64} {
  func.func @feat_kernel(%arg0: i32, %arg1: i32, %arg2: i32, %arg3: memref<1x4x128xf32, #tpu.memory_space<vmem>>, %arg4: memref<64x4xf32, #tpu.memory_space<vmem>>, %arg5: memref<64x1xf32, #tpu.memory_space<vmem>>, %arg6: memref<128x64xbf16, #tpu.memory_space<vmem>>, %arg7: memref<128x1xf32, #tpu.memory_space<vmem>>, %arg8: memref<1024x128xbf16, #tpu.memory_space<vmem>>, %arg9: memref<1x1x1024x1xf32, #tpu.memory_space<vmem>>) attributes {dimension_semantics = [#tpu.dimension_semantics<parallel>, #tpu.dimension_semantics<parallel>, #tpu.dimension_semantics<arbitrary>], iteration_bounds = array<i64: 2, 2, 2>, scalar_prefetch = 0 : i64, scratch_operands = 0 : i64, tpu.core_type = #tpu.core_type<tc>, window_params = [{transform_indices = @transform_0, window_bounds = array<i64: 1, 4, 128>}, {pipeline_mode = #tpu.pipeline_mode<synchronous>, transform_indices = @transform_1, window_bounds = array<i64: 64, 4>}, {pipeline_mode = #tpu.pipeline_mode<synchronous>, transform_indices = @transform_2, window_bounds = array<i64: 64, 1>}, {pipeline_mode = #tpu.pipeline_mode<synchronous>, transform_indices = @transform_3, window_bounds = array<i64: 128, 64>}, {pipeline_mode = #tpu.pipeline_mode<synchronous>, transform_indices = @transform_4, window_bounds = array<i64: 128, 1>}, {pipeline_mode = #tpu.pipeline_mode<synchronous>, transform_indices = @transform_5, window_bounds = array<i64: 1024, 128>}, {transform_indices = @transform_6, window_bounds = array<i64: 1, 1, 1024, 1>}]} {
    %c0 = arith.constant 0 : index
    %c0_0 = arith.constant 0 : index
    %c0_1 = arith.constant 0 : index
    %0 = vector.load %arg3[%c0, %c0_0, %c0_1] : memref<1x4x128xf32, #tpu.memory_space<vmem>>, vector<1x4x128xf32>
    %1 = vector.shape_cast %0 : vector<1x4x128xf32> to vector<4x128xf32>
    %c0_2 = arith.constant 0 : index
    %c0_3 = arith.constant 0 : index
    %2 = vector.load %arg4[%c0_2, %c0_3] : memref<64x4xf32, #tpu.memory_space<vmem>>, vector<64x4xf32>
    %c0_4 = arith.constant 0 : index
    %c0_5 = arith.constant 0 : index
    %3 = vector.load %arg5[%c0_4, %c0_5] : memref<64x1xf32, #tpu.memory_space<vmem>>, vector<64x1xf32>
    %4 = vector.extract_strided_slice %2 {offsets = [0, 0], sizes = [64, 1], strides = [1, 1]} : vector<64x4xf32> to vector<64x1xf32>
    %5 = vector.extract_strided_slice %1 {offsets = [0, 0], sizes = [1, 128], strides = [1, 1]} : vector<4x128xf32> to vector<1x128xf32>
    %6 = vector.broadcast %4 : vector<64x1xf32> to vector<64x128xf32>
    %7 = vector.broadcast %5 : vector<1x128xf32> to vector<64x128xf32>
    %8 = arith.mulf %6, %7 : vector<64x128xf32>
    %9 = vector.extract_strided_slice %2 {offsets = [0, 1], sizes = [64, 1], strides = [1, 1]} : vector<64x4xf32> to vector<64x1xf32>
    %10 = vector.extract_strided_slice %1 {offsets = [1, 0], sizes = [1, 128], strides = [1, 1]} : vector<4x128xf32> to vector<1x128xf32>
    %11 = vector.broadcast %9 : vector<64x1xf32> to vector<64x128xf32>
    %12 = vector.broadcast %10 : vector<1x128xf32> to vector<64x128xf32>
    %13 = arith.mulf %11, %12 : vector<64x128xf32>
    %14 = arith.addf %8, %13 : vector<64x128xf32>
    %15 = vector.extract_strided_slice %2 {offsets = [0, 2], sizes = [64, 1], strides = [1, 1]} : vector<64x4xf32> to vector<64x1xf32>
    %16 = vector.extract_strided_slice %1 {offsets = [2, 0], sizes = [1, 128], strides = [1, 1]} : vector<4x128xf32> to vector<1x128xf32>
    %17 = vector.broadcast %15 : vector<64x1xf32> to vector<64x128xf32>
    %18 = vector.broadcast %16 : vector<1x128xf32> to vector<64x128xf32>
    %19 = arith.mulf %17, %18 : vector<64x128xf32>
    %20 = arith.addf %14, %19 : vector<64x128xf32>
    %21 = vector.extract_strided_slice %2 {offsets = [0, 3], sizes = [64, 1], strides = [1, 1]} : vector<64x4xf32> to vector<64x1xf32>
    %22 = vector.extract_strided_slice %1 {offsets = [3, 0], sizes = [1, 128], strides = [1, 1]} : vector<4x128xf32> to vector<1x128xf32>
    %23 = vector.broadcast %21 : vector<64x1xf32> to vector<64x128xf32>
    %24 = vector.broadcast %22 : vector<1x128xf32> to vector<64x128xf32>
    %25 = arith.mulf %23, %24 : vector<64x128xf32>
    %26 = arith.addf %20, %25 : vector<64x128xf32>
    %27 = vector.broadcast %3 : vector<64x1xf32> to vector<64x128xf32>
    %28 = arith.addf %26, %27 : vector<64x128xf32>
    %cst = arith.constant 0.000000e+00 : f32
    %29 = vector.broadcast %cst : f32 to vector<64x128xf32>
    %30 = arith.maximumf %28, %29 : vector<64x128xf32>
    %c0_6 = arith.constant 0 : index
    %c0_7 = arith.constant 0 : index
    %31 = vector.load %arg6[%c0_6, %c0_7] : memref<128x64xbf16, #tpu.memory_space<vmem>>, vector<128x64xbf16>
    %32 = arith.truncf %30 : vector<64x128xf32> to vector<64x128xbf16>
    %cst_8 = arith.constant dense<0.000000e+00> : vector<128x128xf32>
    %33 = tpu.matmul %31, %32, %cst_8 {dimension_numbers = #tpu.dot_dimension_numbers<[1], [0], [0], [1], [0, 0, 1, 1], [], []>} : vector<128x64xbf16>, vector<64x128xbf16>, vector<128x128xf32> -> vector<128x128xf32>
    %c0_9 = arith.constant 0 : index
    %c0_10 = arith.constant 0 : index
    %34 = vector.load %arg7[%c0_9, %c0_10] : memref<128x1xf32, #tpu.memory_space<vmem>>, vector<128x1xf32>
    %35 = vector.broadcast %34 : vector<128x1xf32> to vector<128x128xf32>
    %36 = arith.addf %33, %35 : vector<128x128xf32>
    %cst_11 = arith.constant 0.000000e+00 : f32
    %37 = vector.broadcast %cst_11 : f32 to vector<128x128xf32>
    %38 = arith.maximumf %36, %37 : vector<128x128xf32>
    %c0_12 = arith.constant 0 : index
    %c0_13 = arith.constant 0 : index
    %39 = vector.load %arg8[%c0_12, %c0_13] : memref<1024x128xbf16, #tpu.memory_space<vmem>>, vector<1024x128xbf16>
    %40 = arith.truncf %38 : vector<128x128xf32> to vector<128x128xbf16>
    %cst_14 = arith.constant dense<0.000000e+00> : vector<1024x128xf32>
    %41 = tpu.matmul %39, %40, %cst_14 {dimension_numbers = #tpu.dot_dimension_numbers<[1], [0], [0], [1], [0, 0, 1, 1], [], []>} : vector<1024x128xbf16>, vector<128x128xbf16>, vector<1024x128xf32> -> vector<1024x128xf32>
    %c2_i32 = arith.constant 2 : i32
    %42 = arith.muli %arg1, %c2_i32 : i32
    %43 = arith.addi %42, %arg2 : i32
    %c128_i32 = arith.constant 128 : i32
    %44 = arith.muli %43, %c128_i32 : i32
    %45 = tpu.iota {dimensions = array<i32: 1>} : vector<1x128xi32>
    %46 = vector.broadcast %44 : i32 to vector<1x128xi32>
    %47 = arith.addi %46, %45 : vector<1x128xi32>
    %c500_i32 = arith.constant 500 : i32
    %48 = vector.broadcast %c500_i32 : i32 to vector<1x128xi32>
    %49 = arith.cmpi slt, %47, %48 : vector<1x128xi32>
    %cst_15 = arith.constant 0xFF800000 : f32
    %50 = vector.shape_cast %49 : vector<1x128xi1> to vector<1x128xi1>
    %51 = vector.broadcast %50 : vector<1x128xi1> to vector<1024x128xi1>
    %52 = vector.broadcast %cst_15 : f32 to vector<1024x128xf32>
    %53 = arith.select %51, %41, %52 : vector<1024x128xi1>, vector<1024x128xf32>
    %c0_i32 = arith.constant 0 : i32
    %54 = arith.cmpi eq, %arg2, %c0_i32 : i32
    %55 = arith.extui %54 : i1 to i32
    %c0_i32_16 = arith.constant 0 : i32
    %56 = arith.cmpi ne, %55, %c0_i32_16 : i32
    scf.if %56 {
      %cst_26 = arith.constant 0xFF800000 : f32
      %65 = vector.broadcast %cst_26 : f32 to vector<1024x1xf32>
      %c0_27 = arith.constant 0 : index
      %c0_28 = arith.constant 0 : index
      %c0_29 = arith.constant 0 : index
      %c0_30 = arith.constant 0 : index
      %66 = vector.load %arg9[%c0_27, %c0_28, %c0_29, %c0_30] : memref<1x1x1024x1xf32, #tpu.memory_space<vmem>>, vector<1x1x1024x1xf32>
      %67 = vector.shape_cast %66 : vector<1x1x1024x1xf32> to vector<1024x1xf32>
      %68 = vector.shape_cast %65 : vector<1024x1xf32> to vector<1x1x1024x1xf32>
      tpu.vector_store %arg9[%c0_27, %c0_28, %c0_29, %c0_30], %68 {strides = array<i32>} : memref<1x1x1024x1xf32, #tpu.memory_space<vmem>>, vector<1x1x1024x1xf32>,
    } else {
    }
    %c0_17 = arith.constant 0 : index
    %c0_18 = arith.constant 0 : index
    %c0_19 = arith.constant 0 : index
    %c0_20 = arith.constant 0 : index
    %57 = vector.load %arg9[%c0_17, %c0_18, %c0_19, %c0_20] : memref<1x1x1024x1xf32, #tpu.memory_space<vmem>>, vector<1x1x1024x1xf32>
    %58 = vector.shape_cast %57 : vector<1x1x1024x1xf32> to vector<1024x1xf32>
    %cst_21 = arith.constant dense<0xFF800000> : vector<1024xf32>
    %59 = vector.multi_reduction <maximumf>, %53, %cst_21 [1] : vector<1024x128xf32> to vector<1024xf32>
    %60 = vector.shape_cast %59 : vector<1024xf32> to vector<1024x1xf32>
    %61 = arith.maximumf %58, %60 : vector<1024x1xf32>
    %c0_22 = arith.constant 0 : index
    %c0_23 = arith.constant 0 : index
    %c0_24 = arith.constant 0 : index
    %c0_25 = arith.constant 0 : index
    %62 = vector.load %arg9[%c0_22, %c0_23, %c0_24, %c0_25] : memref<1x1x1024x1xf32, #tpu.memory_space<vmem>>, vector<1x1x1024x1xf32>
    %63 = vector.shape_cast %62 : vector<1x1x1024x1xf32> to vector<1024x1xf32>
    %64 = vector.shape_cast %61 : vector<1024x1xf32> to vector<1x1x1024x1xf32>
    tpu.vector_store %arg9[%c0_22, %c0_23, %c0_24, %c0_25], %64 {strides = array<i32>} : memref<1x1x1024x1xf32, #tpu.memory_space<vmem>>, vector<1x1x1024x1xf32>,
    return
  }
  func.func @transform_0(%arg0: i32, %arg1: i32, %arg2: i32) -> (i32, i32, i32) {
    %c2_i32 = arith.constant 2 : i32
    %0 = arith.muli %arg1, %c2_i32 : i32
    %1 = arith.addi %0, %arg2 : i32
    %c0_i32 = arith.constant 0 : i32
    %c0_i32_0 = arith.constant 0 : i32
    return %arg0, %c0_i32, %1 : i32, i32, i32
  }
  func.func @transform_1(%arg0: i32, %arg1: i32, %arg2: i32) -> (i32, i32) {
    %c0_i32 = arith.constant 0 : i32
    %c0_i32_0 = arith.constant 0 : i32
    %c0_i32_1 = arith.constant 0 : i32
    return %c0_i32, %c0_i32_0 : i32, i32
  }
  func.func @transform_2(%arg0: i32, %arg1: i32, %arg2: i32) -> (i32, i32) {
    %c0_i32 = arith.constant 0 : i32
    %c0_i32_0 = arith.constant 0 : i32
    %c0_i32_1 = arith.constant 0 : i32
    return %c0_i32, %c0_i32_0 : i32, i32
  }
  func.func @transform_3(%arg0: i32, %arg1: i32, %arg2: i32) -> (i32, i32) {
    %c0_i32 = arith.constant 0 : i32
    %c0_i32_0 = arith.constant 0 : i32
    %c0_i32_1 = arith.constant 0 : i32
    return %c0_i32, %c0_i32_0 : i32, i32
  }
  func.func @transform_4(%arg0: i32, %arg1: i32, %arg2: i32) -> (i32, i32) {
    %c0_i32 = arith.constant 0 : i32
    %c0_i32_0 = arith.constant 0 : i32
    %c0_i32_1 = arith.constant 0 : i32
    return %c0_i32, %c0_i32_0 : i32, i32
  }
  func.func @transform_5(%arg0: i32, %arg1: i32, %arg2: i32) -> (i32, i32) {
    %c0_i32 = arith.constant 0 : i32
    %c0_i32_0 = arith.constant 0 : i32
    %c0_i32_1 = arith.constant 0 : i32
    return %c0_i32, %c0_i32_0 : i32, i32
  }
  func.func @transform_6(%arg0: i32, %arg1: i32, %arg2: i32) -> (i32, i32, i32, i32) {
    %c0_i32 = arith.constant 0 : i32
    %c0_i32_0 = arith.constant 0 : i32
    %c0_i32_1 = arith.constant 0 : i32
    return %arg0, %arg1, %c0_i32, %c0_i32_0 : i32, i32, i32, i32
  }
}

</mosaic_0001>

<llo_original>
// kernel: tpu_custom_call.1
$region0: #{tpu_custom_call.1}
  #allocation0 [shape = 'u32[]', space=smem, size = 0x4, offset = 0x4, fixed_abs, tag = 'smem constant byte address 0x4 - core index']
  #allocation1 [shape = 'u32[144,128]{1,0:T(1,128)}', space=vmem, size = 0x12000, scoped, tag = 'internal scratch']
  %s0 = inlined_call_operand.hbm [shape: f32[2,4,512], index: 0, kind: input, shape index: {}]
  %s1 = inlined_call_operand.vmem [shape: f32[64,4], index: 1, kind: input, shape index: {}]
  %s2 = inlined_call_operand.vmem [shape: f32[64,1], index: 2, kind: input, shape index: {}]
  %s3 = inlined_call_operand.vmem [shape: bf16[128,64], index: 3, kind: input, shape index: {}]
  %s4 = inlined_call_operand.vmem [shape: f32[128,1], index: 4, kind: input, shape index: {}]
  %s5 = inlined_call_operand.hbm [shape: bf16[1024,128], index: 5, kind: input, shape index: {}]
  %s6 = inlined_call_operand.vmem [shape: f32[2,2,1024,1], index: 6, kind: output, shape index: {}]
  %s7 = sld [smem:[#allocation0]]
  $region69: #{tpu_custom_call.1} parent=0
    _
  %s9 = ssub.s32 1, %s7
  %s10 = scalar_select 0, %s9, %s7
  $region1: #{tpu_custom_call.1} parent=0
    #allocation2 [shape = 'u8[4096]{0}', space=vmem, size = 0x1000, scoped, tag = 'input window, operand 0']
    #allocation3 [shape = 's32[2]{0}', space=sflag, size = 0x8, scoped, tag = 'scoped memory for tpu_custom_call.1']
    #allocation4 [shape = 'u8[262144]{0}', space=vmem, size = 0x40000, scoped, tag = 'input window, operand 5, single buffered']
    #allocation5 [shape = 's32[1]{0}', space=sflag, size = 0x4, scoped, tag = 'scoped memory for tpu_custom_call.1']
    %11 = vsyncpa [#allocation3], 0
    %s12 = scalar_lea.sflag [#allocation3], 1
    %13 = vsyncpa %s12, 0
    %14 = vsyncpa [#allocation5], 0
    loop: start=0, step=1, limit=10
    $region2: #{tpu_custom_call.1} parent=1 // loop_pre_header
      _
    $region3: #{tpu_custom_call.1} parent=1 // loop_header
      %s16 = sphi 0, %s20
      %p17 = scmp.ge.s32.totalorder %s16, 10
      %s23 = sphi 0, %s42
      %s24 = sphi 0, %s38
      %s25 = sphi 0, %s34
      %s26 = sphi 0, %s23
      %s27 = sphi 0, %s24
      %s28 = sphi 0, %s25
      %s29 = sphi 0, %s26
      %s30 = sphi 0, %s27
      %s31 = sphi 0, %s28
      %s51 = sphi 0, %s53
      %s54 = sphi 0, %s51
      %s55 = sphi 0, %s54
      %s71 = sphi 0, %s55
      %s75 = sphi 0, %s75
      %s77 = sphi 0, %s75
      %s78 = sphi 0, %s77
      %s92 = sphi 0, %s78
      %s96 = sphi 0, %s96
      %s98 = sphi 0, %s96
      %s99 = sphi 0, %s98
      %s113 = sphi 0, %s99
      %s117 = sphi 0, %s117
      %s119 = sphi 0, %s117
      %s120 = sphi 0, %s119
      %s134 = sphi 0, %s120
      %s138 = sphi 0, %s138
      %s140 = sphi 0, %s138
      %s141 = sphi 0, %s140
      %s155 = sphi 0, %s141
      %s159 = sphi 0, %s159
      %s161 = sphi 0, %s159
      %s162 = sphi 0, %s161
      %s176 = sphi 0, %s162
      %s184 = sphi 0, %s186
      %s187 = sphi 0, %s184
      %s188 = sphi 0, %s187
      %s204 = sphi 0, %s188
    $region4: #{tpu_custom_call.1} parent=1 // loop_header_branch
      %19 = sbr.rel (%p17) target = $region8
    $region5: #{tpu_custom_call.1} parent=1 // loop_body
      %s21 = ssub.s32 %s16, 1
      %s22 = ssub.s32 %s16, 2
      %s32 = sadd.s32 1, %s25
      %p33 = scmp.ge.s32.totalorder %s32, 2
      %s34 = scalar_select %p33, 0, %s32
      %s35 = sadd.s32 1, %s24
      %s36 = scalar_select %p33, %s35, %s24
      %p37 = scmp.ge.s32.totalorder %s36, 2
      %s38 = scalar_select %p37, 0, %s36
      %s39 = sadd.s32 1, %s23
      %s40 = scalar_select %p37, %s39, %s23
      %p41 = scmp.ge.s32.totalorder %s40, 2
      %s42 = scalar_select %p41, 0, %s40
      %s43 = smul.u32 %s24, 2
      %s44 = sadd.s32 %s43, %s25
      %s45 = smul.u32 %s38, 2
      %s46 = sadd.s32 %s45, %s34
      %s47 = ssub.s32 %s23, %s42
      %s48 = ssub.s32 %s44, %s46
      %s49 = sor.u32 %s47, %s48
      %p50 = scmp.eq.s32.totalorder %s49, 0
      %s52 = sadd.s32 %s51, 1
      %s53 = scalar_select %p50, %s51, %s52
      %p56 = pneg %p50
      %p57 = scmp.eq.s32.totalorder %s16, 7
      %p58 = por %p56, %p57
      %p59 = scmp.ne.s32.totalorder %s51, %s54
      %p60 = scmp.eq.s32.totalorder %s16, 0
      %p61 = por %p59, %p60
      %p62 = scmp.ne.s32.totalorder %s51, %s54
      %p63 = scmp.eq.s32.totalorder %s21, 7
      %p64 = por %p62, %p63
      %p65 = scmp.ne.s32.totalorder %s54, %s55
      %p66 = scmp.eq.s32.totalorder %s21, 0
      %p67 = por %p65, %p66
      %p68 = scmp.ne.s32.totalorder %s54, %s55
      %p69 = scmp.eq.s32.totalorder %s22, 7
      %p70 = por %p68, %p69
      %p72 = scmp.ne.s32.totalorder %s55, %s71
      %p73 = scmp.eq.s32.totalorder %s22, 0
      %p74 = por %p72, %p73
      %s76 = sadd.s32 %s75, 1
      %p79 = scmp.eq.s32.totalorder %s16, 7
      %p80 = scmp.ne.s32.totalorder %s75, %s77
      %p81 = scmp.eq.s32.totalorder %s16, 0
      %p82 = por %p80, %p81
      %p83 = scmp.ne.s32.totalorder %s75, %s77
      %p84 = scmp.eq.s32.totalorder %s21, 7
      %p85 = por %p83, %p84
      %p86 = scmp.ne.s32.totalorder %s77, %s78
      %p87 = scmp.eq.s32.totalorder %s21, 0
      %p88 = por %p86, %p87
      %p89 = scmp.ne.s32.totalorder %s77, %s78
      %p90 = scmp.eq.s32.totalorder %s22, 7
      %p91 = por %p89, %p90
      %p93 = scmp.ne.s32.totalorder %s78, %s92
      %p94 = scmp.eq.s32.totalorder %s22, 0
      %p95 = por %p93, %p94
      %s97 = sadd.s32 %s96, 1
      %p100 = scmp.eq.s32.totalorder %s16, 7
      %p101 = scmp.ne.s32.totalorder %s96, %s98
      %p102 = scmp.eq.s32.totalorder %s16, 0
      %p103 = por %p101, %p102
      %p104 = scmp.ne.s32.totalorder %s96, %s98
      %p105 = scmp.eq.s32.totalorder %s21, 7
      %p106 = por %p104, %p105
      %p107 = scmp.ne.s32.totalorder %s98, %s99
      %p108 = scmp.eq.s32.totalorder %s21, 0
      %p109 = por %p107, %p108
      %p110 = scmp.ne.s32.totalorder %s98, %s99
      %p111 = scmp.eq.s32.totalorder %s22, 7
      %p112 = por %p110, %p111
      %p114 = scmp.ne.s32.totalorder %s99, %s113
      %p115 = scmp.eq.s32.totalorder %s22, 0
      %p116 = por %p114, %p115
      %s118 = sadd.s32 %s117, 1
      %p121 = scmp.eq.s32.totalorder %s16, 7
      %p122 = scmp.ne.s32.totalorder %s117, %s119
      %p123 = scmp.eq.s32.totalorder %s16, 0
      %p124 = por %p122, %p123
      %p125 = scmp.ne.s32.totalorder %s117, %s119
      %p126 = scmp.eq.s32.totalorder %s21, 7
      %p127 = por %p125, %p126
      %p128 = scmp.ne.s32.totalorder %s119, %s120
      %p129 = scmp.eq.s32.totalorder %s21, 0
      %p130 = por %p128, %p129
      %p131 = scmp.ne.s32.totalorder %s119, %s120
      %p132 = scmp.eq.s32.totalorder %s22, 7
      %p133 = por %p131, %p132
      %p135 = scmp.ne.s32.totalorder %s120, %s134
      %p136 = scmp.eq.s32.totalorder %s22, 0
      %p137 = por %p135, %p136
      %s139 = sadd.s32 %s138, 1
      %p142 = scmp.eq.s32.totalorder %s16, 7
      %p143 = scmp.ne.s32.totalorder %s138, %s140
      %p144 = scmp.eq.s32.totalorder %s16, 0
      %p145 = por %p143, %p144
      %p146 = scmp.ne.s32.totalorder %s138, %s140
      %p147 = scmp.eq.s32.totalorder %s21, 7
      %p148 = por %p146, %p147
      %p149 = scmp.ne.s32.totalorder %s140, %s141
      %p150 = scmp.eq.s32.totalorder %s21, 0
      %p151 = por %p149, %p150
      %p152 = scmp.ne.s32.totalorder %s140, %s141
      %p153 = scmp.eq.s32.totalorder %s22, 7
      %p154 = por %p152, %p153
      %p156 = scmp.ne.s32.totalorder %s141, %s155
      %p157 = scmp.eq.s32.totalorder %s22, 0
      %p158 = por %p156, %p157
      %s160 = sadd.s32 %s159, 1
      %p163 = scmp.eq.s32.totalorder %s16, 7
      %p164 = scmp.ne.s32.totalorder %s159, %s161
      %p165 = scmp.eq.s32.totalorder %s16, 0
      %p166 = por %p164, %p165
      %p167 = scmp.ne.s32.totalorder %s159, %s161
      %p168 = scmp.eq.s32.totalorder %s21, 7
      %p169 = por %p167, %p168
      %p170 = scmp.ne.s32.totalorder %s161, %s162
      %p171 = scmp.eq.s32.totalorder %s21, 0
      %p172 = por %p170, %p171
      %p173 = scmp.ne.s32.totalorder %s161, %s162
      %p174 = scmp.eq.s32.totalorder %s22, 7
      %p175 = por %p173, %p174
      %p177 = scmp.ne.s32.totalorder %s162, %s176
      %p178 = scmp.eq.s32.totalorder %s22, 0
      %p179 = por %p177, %p178
      %s180 = ssub.s32 %s23, %s42
      %s181 = ssub.s32 %s24, %s38
      %s182 = sor.u32 %s180, %s181
      %p183 = scmp.eq.s32.totalorder %s182, 0
      %s185 = sadd.s32 %s184, 1
      %s186 = scalar_select %p183, %s184, %s185
      %p189 = pneg %p183
      %p190 = scmp.eq.s32.totalorder %s16, 7
      %p191 = por %p189, %p190
      %p192 = scmp.ne.s32.totalorder %s184, %s187
      %p193 = scmp.eq.s32.totalorder %s16, 0
      %p194 = por %p192, %p193
      %p195 = scmp.ne.s32.totalorder %s184, %s187
      %p196 = scmp.eq.s32.totalorder %s21, 7
      %p197 = por %p195, %p196
      %p198 = scmp.ne.s32.totalorder %s187, %s188
      %p199 = scmp.eq.s32.totalorder %s21, 0
      %p200 = por %p198, %p199
      %p201 = scmp.ne.s32.totalorder %s187, %s188
      %p202 = scmp.eq.s32.totalorder %s22, 7
      %p203 = por %p201, %p202
      %p205 = scmp.ne.s32.totalorder %s188, %s204
      %p206 = scmp.eq.s32.totalorder %s22, 0
      %p207 = por %p205, %p206
      %p208 = scmp.le.s32.totalorder 1, %s16
      %p209 = scmp.lt.s32.totalorder %s16, 9
      %p210 = pnand %p208, %p209
      %p211 = pneg %p210
      // Predicated region
      $region9: #{tpu_custom_call.1} parent=5 // pred_check
        _
      $region10: #{tpu_custom_call.1} parent=5 // pred_check_branch
        %213 = sbr.rel (%p210) target = $region12
      $region11: #{tpu_custom_call.1} parent=5 // pred_region
        %s214 = ssub.s32 %s16, 1
        // Predicated region
        $region13: #{tpu_custom_call.1} parent=11 // pred_check
          %p215 = pneg %p88
        $region14: #{tpu_custom_call.1} parent=11 // pred_check_branch
          %217 = sbr.rel (%p215) target = $region16
        $region15: #{tpu_custom_call.1} parent=11 // pred_region
          _
        $region16: #{tpu_custom_call.1} parent=11 // pred_fallthru
          _
        // Predicated region
        $region17: #{tpu_custom_call.1} parent=11 // pred_check
          %p218 = pneg %p109
        $region18: #{tpu_custom_call.1} parent=11 // pred_check_branch
          %220 = sbr.rel (%p218) target = $region20
        $region19: #{tpu_custom_call.1} parent=11 // pred_region
          _
        $region20: #{tpu_custom_call.1} parent=11 // pred_fallthru
          _
        // Predicated region
        $region21: #{tpu_custom_call.1} parent=11 // pred_check
          %p221 = pneg %p130
        $region22: #{tpu_custom_call.1} parent=11 // pred_check_branch
          %223 = sbr.rel (%p221) target = $region24
        $region23: #{tpu_custom_call.1} parent=11 // pred_region
          _
        $region24: #{tpu_custom_call.1} parent=11 // pred_fallthru
          _
        // Predicated region
        $region25: #{tpu_custom_call.1} parent=11 // pred_check
          %p224 = pneg %p151
        $region26: #{tpu_custom_call.1} parent=11 // pred_check_branch
          %226 = sbr.rel (%p224) target = $region28
        $region27: #{tpu_custom_call.1} parent=11 // pred_region
          _
        $region28: #{tpu_custom_call.1} parent=11 // pred_fallthru
          _
        // Predicated region
        $region29: #{tpu_custom_call.1} parent=11 // pred_check
          %p227 = pneg %p172
        $region30: #{tpu_custom_call.1} parent=11 // pred_check_branch
          %229 = sbr.rel (%p227) target = $region32
        $region31: #{tpu_custom_call.1} parent=11 // pred_region
          %s231 = ssub.s32 8192, 8192
          %232 = vsyncadd [#allocation5], %s231
          %s233 = sshll.u32 [#allocation4], 4
          %s234 = int_to_ptr.vmem [resolvable:$true] %s233
          %239 = dma.hbm_to_vmem [thread:$0]  %s5, 8192, %s234, [#allocation5], 64, 64, 4
        $region32: #{tpu_custom_call.1} parent=11 // pred_fallthru
          _
      $region12: #{tpu_custom_call.1} parent=5 // pred_fallthru
        _
      %p240 = scmp.lt.s32.totalorder %s16, 8
      // Predicated region
      $region33: #{tpu_custom_call.1} parent=5 // pred_check
        %p241 = pneg %p240
      $region34: #{tpu_custom_call.1} parent=5 // pred_check_branch
        %243 = sbr.rel (%p241) target = $region36
      $region35: #{tpu_custom_call.1} parent=5 // pred_region
        // Predicated region
        $region37: #{tpu_custom_call.1} parent=35 // pred_check
          %p244 = pneg %p61
        $region38: #{tpu_custom_call.1} parent=35 // pred_check_branch
          %246 = sbr.rel (%p244) target = $region40
        $region39: #{tpu_custom_call.1} parent=35 // pred_region
          %s247 = sand.u32 %s51, 1
          %s248 = scalar_lea.sflag [#allocation3], %s247
          %s249 = sand.u32 %s51, 1
          %s250 = smul.addr %s249, 4
          %s251 = scalar_lea.vmem [#allocation2], %s250
          %s252 = smul.u32 %s24, 2
          %s253 = sadd.s32 %s252, %s25
          %s255 = ssub.s32 64, 64
          %256 = vsyncadd %s248, %s255
          %s257 = smul.addr %s23, 4
          %s258 = sadd.s32 %s253, %s257
          %s259 = smul.addr %s258, 64
          %s260 = scalar_lea.hbm %s0, %s259
          %s262 = sshll.u32 %s251, 4
          %s263 = int_to_ptr.vmem [resolvable:$true] %s262
          %265 = dma.hbm_to_vmem [thread:$0]  %s260, 64, %s263, %s248
        $region40: #{tpu_custom_call.1} parent=35 // pred_fallthru
          _
      $region36: #{tpu_custom_call.1} parent=5 // pred_fallthru
        _
      %p266 = scmp.le.s32.totalorder 1, %s16
      %p267 = scmp.lt.s32.totalorder %s16, 9
      %p268 = pnand %p266, %p267
      %p269 = pneg %p268
      // Predicated region
      $region41: #{tpu_custom_call.1} parent=5 // pred_check
        _
      $region42: #{tpu_custom_call.1} parent=5 // pred_check_branch
        %271 = sbr.rel (%p268) target = $region44
      $region43: #{tpu_custom_call.1} parent=5 // pred_region
        %s272 = ssub.s32 %s16, 1
        %s273 = sand.u32 %s54, 1
        %s274 = scalar_lea.sflag [#allocation3], %s273
        %s275 = sand.u32 %s54, 1
        %s276 = smul.addr %s275, 4
        %s277 = scalar_lea.vmem [#allocation2], %s276
        // Predicated region
        $region45: #{tpu_custom_call.1} parent=43 // pred_check
          %p278 = pneg %p67
        $region46: #{tpu_custom_call.1} parent=43 // pred_check_branch
          %280 = sbr.rel (%p278) target = $region48
        $region47: #{tpu_custom_call.1} parent=43 // pred_region
          %281 = dma.done %s274, 64
        $region48: #{tpu_custom_call.1} parent=43 // pred_fallthru
          _
        // Predicated region
        $region49: #{tpu_custom_call.1} parent=43 // pred_check
          %p282 = pneg %p172
        $region50: #{tpu_custom_call.1} parent=43 // pred_check_branch
          %284 = sbr.rel (%p282) target = $region52
        $region51: #{tpu_custom_call.1} parent=43 // pred_region
          %285 = dma.done [#allocation5], 8192
        $region52: #{tpu_custom_call.1} parent=43 // pred_fallthru
          _
        %s286 = sand.u32 %s54, 1
        %s287 = scalar_lea.sflag [#allocation3], %s286
        %s288 = sand.u32 %s54, 1
        %s289 = smul.addr %s288, 4
        %s290 = scalar_lea.vmem [#allocation2], %s289
        %p291 = pneg %p67
        %p292 = pneg %p64
        %p293 = pneg %p88
        %p294 = pneg %p85
        %p295 = pneg %p109
        %p296 = pneg %p106
        %p297 = pneg %p130
        %p298 = pneg %p127
        %p299 = pneg %p151
        %p300 = pneg %p148
        %p301 = pneg %p172
        %p302 = pneg %p169
        %p303 = pneg %p200
        %p304 = pneg %p197
        %p305 = scmp.lt.s32.totalorder %s26, 1
        %s306 = scalar_select %p305, %s26, 1
        %p307 = scmp.lt.s32.totalorder %s27, 1
        %s308 = scalar_select %p307, %s27, 1
        %s309 = smul.addr %s308, 128
        %s310 = smul.addr %s306, 256
        %s311 = sadd.s32 %s309, %s310
        %s312 = smul.addr %s311, 8
        %s313 = scalar_lea.vmem %s6, %s312
        %s314 = smul.u32 %s27, 2
        %s315 = sadd.s32 %s314, %s28
        %p316 = scmp.lt.s32.totalorder %s26, 1
        %s317 = scalar_select %p316, %s26, 1
        %p318 = scmp.lt.s32.totalorder %s27, 1
        %s319 = scalar_select %p318, %s27, 1
        %s320 = smul.addr %s319, 128
        %s321 = smul.addr %s317, 256
        %s322 = sadd.s32 %s320, %s321
        %s323 = smul.addr %s322, 8
        %s324 = scalar_lea.vmem %s6, %s323
        %v326 = vld [vmem:[%s277] sm:$0xf]
        %v327 = vld [vmem:[%s1] sm:$0xff]
        %v328 = vld [vmem:[%s1 + $0x8] sm:$0xff]
        %v329 = vld [vmem:[%s1 + $0x10] sm:$0xff]
        %v330 = vld [vmem:[%s1 + $0x18] sm:$0xff]
        %v331 = vld [vmem:[%s1 + $0x20] sm:$0xff]
        %v332 = vld [vmem:[%s1 + $0x28] sm:$0xff]
        %v333 = vld [vmem:[%s1 + $0x30] sm:$0xff]
        %v334 = vld [vmem:[%s1 + $0x38] sm:$0xff]
        %v335 = vld [vmem:[%s2] sm:$0xff]
        %v336 = vld [vmem:[%s2 + $0x8] sm:$0xff]
        %v337 = vld [vmem:[%s2 + $0x10] sm:$0xff]
        %v338 = vld [vmem:[%s2 + $0x18] sm:$0xff]
        %v339 = vld [vmem:[%s2 + $0x20] sm:$0xff]
        %v340 = vld [vmem:[%s2 + $0x28] sm:$0xff]
        %v341 = vld [vmem:[%s2 + $0x30] sm:$0xff]
        %v342 = vld [vmem:[%s2 + $0x38] sm:$0xff]
        %344 = vset.pattern.permute.xlu0 0
        %345 = vperm.xlu0 %344, %v327
        %v346 = vpop.permute.xlu0 %345
        %349 = vset.pattern.permute.xlu0 0
        %350 = vperm.xlu0 %349, %v328
        %v351 = vpop.permute.xlu0 %350
        %354 = vset.pattern.permute.xlu0 0
        %355 = vperm.xlu0 %354, %v329
        %v356 = vpop.permute.xlu0 %355
        %359 = vset.pattern.permute.xlu0 0
        %360 = vperm.xlu0 %359, %v330
        %v361 = vpop.permute.xlu0 %360
        %364 = vset.pattern.permute.xlu0 0
        %365 = vperm.xlu0 %364, %v331
        %v366 = vpop.permute.xlu0 %365
        %369 = vset.pattern.permute.xlu0 0
        %370 = vperm.xlu0 %369, %v332
        %v371 = vpop.permute.xlu0 %370
        %374 = vset.pattern.permute.xlu0 0
        %375 = vperm.xlu0 %374, %v333
        %v376 = vpop.permute.xlu0 %375
        %379 = vset.pattern.permute.xlu0 0
        %380 = vperm.xlu0 %379, %v334
        %v381 = vpop.permute.xlu0 %380
        %v383 = vlaneseq
        %v384 = vshrl.u32 %v383, 7
        %v385 = vsub.s32 0, %v384
        %v386 = vrot.slane %v326, %v385
        %v387 = vmul.f32 %v346, %v386
        %v388 = vmul.f32 %v351, %v386
        %v389 = vmul.f32 %v356, %v386
        %v390 = vmul.f32 %v361, %v386
        %v391 = vmul.f32 %v366, %v386
        %v392 = vmul.f32 %v371, %v386
        %v393 = vmul.f32 %v376, %v386
        %v394 = vmul.f32 %v381, %v386
        %395 = vset.pattern.permute.xlu0 1
        %396 = vperm.xlu0 %395, %v327
        %v397 = vpop.permute.xlu0 %396
        %399 = vset.pattern.permute.xlu0 1
        %400 = vperm.xlu0 %399, %v328
        %v401 = vpop.permute.xlu0 %400
        %403 = vset.pattern.permute.xlu0 1
        %404 = vperm.xlu0 %403, %v329
        %v405 = vpop.permute.xlu0 %404
        %407 = vset.pattern.permute.xlu0 1
        %408 = vperm.xlu0 %407, %v330
        %v409 = vpop.permute.xlu0 %408
        %411 = vset.pattern.permute.xlu0 1
        %412 = vperm.xlu0 %411, %v331
        %v413 = vpop.permute.xlu0 %412
        %415 = vset.pattern.permute.xlu0 1
        %416 = vperm.xlu0 %415, %v332
        %v417 = vpop.permute.xlu0 %416
        %419 = vset.pattern.permute.xlu0 1
        %420 = vperm.xlu0 %419, %v333
        %v421 = vpop.permute.xlu0 %420
        %423 = vset.pattern.permute.xlu0 1
        %424 = vperm.xlu0 %423, %v334
        %v425 = vpop.permute.xlu0 %424
        %v427 = vlaneseq
        %v428 = vshrl.u32 %v427, 7
        %v429 = vsub.s32 1, %v428
        %v430 = vrot.slane %v326, %v429
        %v431 = vmul.f32 %v397, %v430
        %v432 = vmul.f32 %v401, %v430
        %v433 = vmul.f32 %v405, %v430
        %v434 = vmul.f32 %v409, %v430
        %v435 = vmul.f32 %v413, %v430
        %v436 = vmul.f32 %v417, %v430
        %v437 = vmul.f32 %v421, %v430
        %v438 = vmul.f32 %v425, %v430
        %v439 = vadd.f32 %v387, %v431
        %v440 = vadd.f32 %v388, %v432
        %v441 = vadd.f32 %v389, %v433
        %v442 = vadd.f32 %v390, %v434
        %v443 = vadd.f32 %v391, %v435
        %v444 = vadd.f32 %v392, %v436
        %v445 = vadd.f32 %v393, %v437
        %v446 = vadd.f32 %v394, %v438
        %447 = vset.pattern.permute.xlu0 2
        %448 = vperm.xlu0 %447, %v327
        %v449 = vpop.permute.xlu0 %448
        %451 = vset.pattern.permute.xlu0 2
        %452 = vperm.xlu0 %451, %v328
        %v453 = vpop.permute.xlu0 %452
        %455 = vset.pattern.permute.xlu0 2
        %456 = vperm.xlu0 %455, %v329
        %v457 = vpop.permute.xlu0 %456
        %459 = vset.pattern.permute.xlu0 2
        %460 = vperm.xlu0 %459, %v330
        %v461 = vpop.permute.xlu0 %460
        %463 = vset.pattern.permute.xlu0 2
        %464 = vperm.xlu0 %463, %v331
        %v465 = vpop.permute.xlu0 %464
        %467 = vset.pattern.permute.xlu0 2
        %468 = vperm.xlu0 %467, %v332
        %v469 = vpop.permute.xlu0 %468
        %471 = vset.pattern.permute.xlu0 2
        %472 = vperm.xlu0 %471, %v333
        %v473 = vpop.permute.xlu0 %472
        %475 = vset.pattern.permute.xlu0 2
        %476 = vperm.xlu0 %475, %v334
        %v477 = vpop.permute.xlu0 %476
        %v479 = vlaneseq
        %v480 = vshrl.u32 %v479, 7
        %v481 = vsub.s32 2, %v480
        %v482 = vrot.slane %v326, %v481
        %v483 = vmul.f32 %v449, %v482
        %v484 = vmul.f32 %v453, %v482
        %v485 = vmul.f32 %v457, %v482
        %v486 = vmul.f32 %v461, %v482
        %v487 = vmul.f32 %v465, %v482
        %v488 = vmul.f32 %v469, %v482
        %v489 = vmul.f32 %v473, %v482
        %v490 = vmul.f32 %v477, %v482
        %v491 = vadd.f32 %v439, %v483
        %v492 = vadd.f32 %v440, %v484
        %v493 = vadd.f32 %v441, %v485
        %v494 = vadd.f32 %v442, %v486
        %v495 = vadd.f32 %v443, %v487
        %v496 = vadd.f32 %v444, %v488
        %v497 = vadd.f32 %v445, %v489
        %v498 = vadd.f32 %v446, %v490
        %499 = vset.pattern.permute.xlu0 3
        %500 = vperm.xlu0 %499, %v327
        %v501 = vpop.permute.xlu0 %500
        %503 = vset.pattern.permute.xlu0 3
        %504 = vperm.xlu0 %503, %v328
        %v505 = vpop.permute.xlu0 %504
        %507 = vset.pattern.permute.xlu0 3
        %508 = vperm.xlu0 %507, %v329
        %v509 = vpop.permute.xlu0 %508
        %511 = vset.pattern.permute.xlu0 3
        %512 = vperm.xlu0 %511, %v330
        %v513 = vpop.permute.xlu0 %512
        %515 = vset.pattern.permute.xlu0 3
        %516 = vperm.xlu0 %515, %v331
        %v517 = vpop.permute.xlu0 %516
        %519 = vset.pattern.permute.xlu0 3
        %520 = vperm.xlu0 %519, %v332
        %v521 = vpop.permute.xlu0 %520
        %523 = vset.pattern.permute.xlu0 3
        %524 = vperm.xlu0 %523, %v333
        %v525 = vpop.permute.xlu0 %524
        %527 = vset.pattern.permute.xlu0 3
        %528 = vperm.xlu0 %527, %v334
        %v529 = vpop.permute.xlu0 %528
        %v531 = vlaneseq
        %v532 = vshrl.u32 %v531, 7
        %v533 = vsub.s32 3, %v532
        %v534 = vrot.slane %v326, %v533
        %v535 = vmul.f32 %v501, %v534
        %v536 = vmul.f32 %v505, %v534
        %v537 = vmul.f32 %v509, %v534
        %v538 = vmul.f32 %v513, %v534
        %v539 = vmul.f32 %v517, %v534
        %v540 = vmul.f32 %v521, %v534
        %v541 = vmul.f32 %v525, %v534
        %v542 = vmul.f32 %v529, %v534
        %v543 = vadd.f32 %v491, %v535
        %v544 = vadd.f32 %v492, %v536
        %v545 = vadd.f32 %v493, %v537
        %v546 = vadd.f32 %v494, %v538
        %v547 = vadd.f32 %v495, %v539
        %v548 = vadd.f32 %v496, %v540
        %v549 = vadd.f32 %v497, %v541
        %v550 = vadd.f32 %v498, %v542
        %552 = vset.pattern.permute.xlu0 0
        %553 = vperm.xlu0 %552, %v335
        %v554 = vpop.permute.xlu0 %553
        %557 = vset.pattern.permute.xlu0 0
        %558 = vperm.xlu0 %557, %v336
        %v559 = vpop.permute.xlu0 %558
        %562 = vset.pattern.permute.xlu0 0
        %563 = vperm.xlu0 %562, %v337
        %v564 = vpop.permute.xlu0 %563
        %567 = vset.pattern.permute.xlu0 0
        %568 = vperm.xlu0 %567, %v338
        %v569 = vpop.permute.xlu0 %568
        %572 = vset.pattern.permute.xlu0 0
        %573 = vperm.xlu0 %572, %v339
        %v574 = vpop.permute.xlu0 %573
        %577 = vset.pattern.permute.xlu0 0
        %578 = vperm.xlu0 %577, %v340
        %v579 = vpop.permute.xlu0 %578
        %582 = vset.pattern.permute.xlu0 0
        %583 = vperm.xlu0 %582, %v341
        %v584 = vpop.permute.xlu0 %583
        %587 = vset.pattern.permute.xlu0 0
        %588 = vperm.xlu0 %587, %v342
        %v589 = vpop.permute.xlu0 %588
        %v591 = vadd.f32 %v543, %v554
        %v592 = vadd.f32 %v544, %v559
        %v593 = vadd.f32 %v545, %v564
        %v594 = vadd.f32 %v546, %v569
        %v595 = vadd.f32 %v547, %v574
        %v596 = vadd.f32 %v548, %v579
        %v597 = vadd.f32 %v549, %v584
        %v598 = vadd.f32 %v550, %v589
        %v599 = vmax.f32 %v591, 0.0
        %v600 = vmax.f32 %v592, 0.0
        %v601 = vmax.f32 %v593, 0.0
        %v602 = vmax.f32 %v594, 0.0
        %v603 = vmax.f32 %v595, 0.0
        %v604 = vmax.f32 %v596, 0.0
        %v605 = vmax.f32 %v597, 0.0
        %v606 = vmax.f32 %v598, 0.0
        %v607 = vld [vmem:[%s3] sm:$0xf]
        %v608 = vld [vmem:[%s3 + $0x4] sm:$0xf]
        %v609 = vld [vmem:[%s3 + $0x8] sm:$0xf]
        %v610 = vld [vmem:[%s3 + $0xc] sm:$0xf]
        %v611 = vld [vmem:[%s3 + $0x10] sm:$0xf]
        %v612 = vld [vmem:[%s3 + $0x14] sm:$0xf]
        %v613 = vld [vmem:[%s3 + $0x18] sm:$0xf]
        %v614 = vld [vmem:[%s3 + $0x1c] sm:$0xf]
        %v615 = vld [vmem:[%s3 + $0x20] sm:$0xf]
        %v616 = vld [vmem:[%s3 + $0x24] sm:$0xf]
        %v617 = vld [vmem:[%s3 + $0x28] sm:$0xf]
        %v618 = vld [vmem:[%s3 + $0x2c] sm:$0xf]
        %v619 = vld [vmem:[%s3 + $0x30] sm:$0xf]
        %v620 = vld [vmem:[%s3 + $0x34] sm:$0xf]
        %v621 = vld [vmem:[%s3 + $0x38] sm:$0xf]
        %v622 = vld [vmem:[%s3 + $0x3c] sm:$0xf]
        %v623 = vpack.c.bf16 %v600, %v599
        %v624 = vpack.c.bf16 %v602, %v601
        %v625 = vpack.c.bf16 %v604, %v603
        %v626 = vpack.c.bf16 %v606, %v605
        %v627 = vld [vmem:[%s4] sm:$0xff]
        %v628 = vld [vmem:[%s4 + $0x8] sm:$0xff]
        %v629 = vld [vmem:[%s4 + $0x10] sm:$0xff]
        %v630 = vld [vmem:[%s4 + $0x18] sm:$0xff]
        %v631 = vld [vmem:[%s4 + $0x20] sm:$0xff]
        %v632 = vld [vmem:[%s4 + $0x28] sm:$0xff]
        %v633 = vld [vmem:[%s4 + $0x30] sm:$0xff]
        %v634 = vld [vmem:[%s4 + $0x38] sm:$0xff]
        %v635 = vld [vmem:[%s4 + $0x40] sm:$0xff]
        %v636 = vld [vmem:[%s4 + $0x48] sm:$0xff]
        %v637 = vld [vmem:[%s4 + $0x50] sm:$0xff]
        %v638 = vld [vmem:[%s4 + $0x58] sm:$0xff]
        %v639 = vld [vmem:[%s4 + $0x60] sm:$0xff]
        %v640 = vld [vmem:[%s4 + $0x68] sm:$0xff]
        %v641 = vld [vmem:[%s4 + $0x70] sm:$0xff]
        %v642 = vld [vmem:[%s4 + $0x78] sm:$0xff]
        %644 = vset.pattern.permute.xlu0 0
        %645 = vperm.xlu0 %644, %v627
        %v646 = vpop.permute.xlu0 %645
        %649 = vset.pattern.permute.xlu0 0
        %650 = vperm.xlu0 %649, %v628
        %v651 = vpop.permute.xlu0 %650
        %654 = vset.pattern.permute.xlu0 0
        %655 = vperm.xlu0 %654, %v629
        %v656 = vpop.permute.xlu0 %655
        %659 = vset.pattern.permute.xlu0 0
        %660 = vperm.xlu0 %659, %v630
        %v661 = vpop.permute.xlu0 %660
        %664 = vset.pattern.permute.xlu0 0
        %665 = vperm.xlu0 %664, %v631
        %v666 = vpop.permute.xlu0 %665
        %669 = vset.pattern.permute.xlu0 0
        %670 = vperm.xlu0 %669, %v632
        %v671 = vpop.permute.xlu0 %670
        %674 = vset.pattern.permute.xlu0 0
        %675 = vperm.xlu0 %674, %v633
        %v676 = vpop.permute.xlu0 %675
        %679 = vset.pattern.permute.xlu0 0
        %680 = vperm.xlu0 %679, %v634
        %v681 = vpop.permute.xlu0 %680
        %684 = vset.pattern.permute.xlu0 0
        %685 = vperm.xlu0 %684, %v635
        %v686 = vpop.permute.xlu0 %685
        %689 = vset.pattern.permute.xlu0 0
        %690 = vperm.xlu0 %689, %v636
        %v691 = vpop.permute.xlu0 %690
        %694 = vset.pattern.permute.xlu0 0
        %695 = vperm.xlu0 %694, %v637
        %v696 = vpop.permute.xlu0 %695
        %699 = vset.pattern.permute.xlu0 0
        %700 = vperm.xlu0 %699, %v638
        %v701 = vpop.permute.xlu0 %700
        %704 = vset.pattern.permute.xlu0 0
        %705 = vperm.xlu0 %704, %v639
        %v706 = vpop.permute.xlu0 %705
        %709 = vset.pattern.permute.xlu0 0
        %710 = vperm.xlu0 %709, %v640
        %v711 = vpop.permute.xlu0 %710
        %714 = vset.pattern.permute.xlu0 0
        %715 = vperm.xlu0 %714, %v641
        %v716 = vpop.permute.xlu0 %715
        %719 = vset.pattern.permute.xlu0 0
        %720 = vperm.xlu0 %719, %v642
        %v721 = vpop.permute.xlu0 %720
        %v739 = vunpack.c.l.b16 %v607
        %v740 = vunpack.c.l.b16 %v608
        %v741 = vunpack.c.l.b16 %v609
        %v742 = vunpack.c.l.b16 %v610
        %v743 = vunpack.c.l.b16 %v611
        %v744 = vunpack.c.l.b16 %v612
        %v745 = vunpack.c.l.b16 %v613
        %v746 = vunpack.c.l.b16 %v614
        %v747 = vunpack.c.l.b16 %v615
        %v748 = vunpack.c.l.b16 %v616
        %v749 = vunpack.c.l.b16 %v617
        %v750 = vunpack.c.l.b16 %v618
        %v751 = vunpack.c.l.b16 %v619
        %v752 = vunpack.c.l.b16 %v620
        %v753 = vunpack.c.l.b16 %v621
        %v754 = vunpack.c.l.b16 %v622
        %v755 = vpack.c.b16 %v740, %v739
        %v756 = vpack.c.b16 %v742, %v741
        %v757 = vpack.c.b16 %v744, %v743
        %v758 = vpack.c.b16 %v746, %v745
        %v759 = vpack.c.b16 %v748, %v747
        %v760 = vpack.c.b16 %v750, %v749
        %v761 = vpack.c.b16 %v752, %v751
        %v762 = vpack.c.b16 %v754, %v753
        %vm763 = vcmask 523264
        %v765 = vsel %vm763, %v755, 0
        %v768 = vsel %vm763, %v756, 0
        %v771 = vsel %vm763, %v757, 0
        %v774 = vsel %vm763, %v758, 0
        %v777 = vsel %vm763, %v759, 0
        %v780 = vsel %vm763, %v760, 0
        %v783 = vsel %vm763, %v761, 0
        %v786 = vsel %vm763, %v762, 0
        %788 = vmatprep.subr.bf16.mxu0 0
        %789 = vmatpush1.bf16.msra.mxu0 %v623
        %790 = vmatprep.subr.bf16.mxu0 0
        %791 = vmatpush1.bf16.msra.mxu0 %v624
        %792 = vmatprep.subr.bf16.mxu0 0
        %793 = vmatpush1.bf16.msra.mxu0 %v625
        %794 = vmatprep.subr.bf16.mxu0 0
        %795 = vmatpush1.bf16.msra.mxu0 %v626
        %796 = vmatprep.subr.bf16.mxu0 0
        %797 = vmatpush1.bf16.msra.mxu0 0
        %798 = vmatprep.subr.bf16.mxu0 0
        %799 = vmatpush1.bf16.msra.mxu0 0
        %800 = vmatprep.subr.bf16.mxu0 0
        %801 = vmatpush1.bf16.msra.mxu0 0
        %802 = vmatprep.subr.bf16.mxu0 0
        %803 = vmatpush1.bf16.msra.mxu0 0
        %804 = vmatprep.subr.bf16.mxu0 0
        %805 = vmatpush1.bf16.msra.mxu0 0
        %806 = vmatprep.subr.bf16.mxu0 0
        %807 = vmatpush1.bf16.msra.mxu0 0
        %808 = vmatprep.subr.bf16.mxu0 0
        %809 = vmatpush1.bf16.msra.mxu0 0
        %810 = vmatprep.subr.bf16.mxu0 0
        %811 = vmatpush1.bf16.msra.mxu0 0
        %812 = vmatprep.subr.bf16.mxu0 0
        %813 = vmatpush1.bf16.msra.mxu0 0
        %814 = vmatprep.subr.bf16.mxu0 0
        %815 = vmatpush1.bf16.msra.mxu0 0
        %816 = vmatprep.subr.bf16.mxu0 0
        %817 = vmatpush1.bf16.msra.mxu0 0
        %818 = vmatprep.subr.bf16.mxu0 0
        %819 = vmatpush1.bf16.msra.mxu0 0
        %820 = vmatprep.mubr.bf16.mxu0 0
        %821 = vmatmul.mubr.bf16.gmra.mrb[0].mxu0 %v765
        %v822 = vpop.f32.mrb[0].mxu0
        %v823 = vadd.f32 %v646, %v822
        %v824 = vpop.f32.mrb[0].mxu0
        %v825 = vpop.f32.mrb[0].mxu0
        %v826 = vadd.f32 %v651, %v825
        %v827 = vpop.f32.mrb[0].mxu0
        %828 = vmatprep.mubr.bf16.mxu0 0
        %829 = vmatmul.mubr.bf16.gmra.mrb[0].mxu0 %v768
        %v830 = vpop.f32.mrb[0].mxu0
        %v831 = vadd.f32 %v656, %v830
        %v832 = vpop.f32.mrb[0].mxu0
        %v833 = vpop.f32.mrb[0].mxu0
        %v834 = vadd.f32 %v661, %v833
        %v835 = vpop.f32.mrb[0].mxu0
        %836 = vmatprep.mubr.bf16.mxu0 0
        %837 = vmatmul.mubr.bf16.gmra.mrb[0].mxu0 %v771
        %v838 = vpop.f32.mrb[0].mxu0
        %v839 = vadd.f32 %v666, %v838
        %v840 = vpop.f32.mrb[0].mxu0
        %v841 = vpop.f32.mrb[0].mxu0
        %v842 = vadd.f32 %v671, %v841
        %v843 = vpop.f32.mrb[0].mxu0
        %844 = vmatprep.mubr.bf16.mxu0 0
        %845 = vmatmul.mubr.bf16.gmra.mrb[0].mxu0 %v774
        %v846 = vpop.f32.mrb[0].mxu0
        %v847 = vadd.f32 %v676, %v846
        %v848 = vpop.f32.mrb[0].mxu0
        %v849 = vpop.f32.mrb[0].mxu0
        %v850 = vadd.f32 %v681, %v849
        %v851 = vpop.f32.mrb[0].mxu0
        %852 = vmatprep.mubr.bf16.mxu0 0
        %853 = vmatmul.mubr.bf16.gmra.mrb[0].mxu0 %v777
        %v854 = vpop.f32.mrb[0].mxu0
        %v855 = vadd.f32 %v686, %v854
        %v856 = vpop.f32.mrb[0].mxu0
        %v857 = vpop.f32.mrb[0].mxu0
        %v858 = vadd.f32 %v691, %v857
        %v859 = vpop.f32.mrb[0].mxu0
        %860 = vmatprep.mubr.bf16.mxu0 0
        %861 = vmatmul.mubr.bf16.gmra.mrb[0].mxu0 %v780
        %v862 = vpop.f32.mrb[0].mxu0
        %v863 = vadd.f32 %v696, %v862
        %v864 = vpop.f32.mrb[0].mxu0
        %v865 = vpop.f32.mrb[0].mxu0
        %v866 = vadd.f32 %v701, %v865
        %v867 = vpop.f32.mrb[0].mxu0
        %868 = vmatprep.mubr.bf16.mxu0 0
        %869 = vmatmul.mubr.bf16.gmra.mrb[0].mxu0 %v783
        %v870 = vpop.f32.mrb[0].mxu0
        %v871 = vadd.f32 %v706, %v870
        %v872 = vpop.f32.mrb[0].mxu0
        %v873 = vpop.f32.mrb[0].mxu0
        %v874 = vadd.f32 %v711, %v873
        %v875 = vpop.f32.mrb[0].mxu0
        %876 = vmatprep.mubr.bf16.mxu0 0
        %877 = vmatmul.mubr.bf16.gmra.mrb[0].mxu0 %v786
        %v878 = vpop.f32.mrb[0].mxu0
        %v879 = vadd.f32 %v716, %v878
        %v880 = vpop.f32.mrb[0].mxu0
        %v881 = vpop.f32.mrb[0].mxu0
        %v882 = vadd.f32 %v721, %v881
        %v883 = vpop.f32.mrb[0].mxu0
        %884 = vdwg.mxu0
        %v885 = vmax.f32 %v823, 0.0
        %v886 = vmax.f32 %v826, 0.0
        %v887 = vmax.f32 %v831, 0.0
        %v888 = vmax.f32 %v834, 0.0
        %v889 = vmax.f32 %v839, 0.0
        %v890 = vmax.f32 %v842, 0.0
        %v891 = vmax.f32 %v847, 0.0
        %v892 = vmax.f32 %v850, 0.0
        %v893 = vmax.f32 %v855, 0.0
        %v894 = vmax.f32 %v858, 0.0
        %v895 = vmax.f32 %v863, 0.0
        %v896 = vmax.f32 %v866, 0.0
        %v897 = vmax.f32 %v871, 0.0
        %v898 = vmax.f32 %v874, 0.0
        %v899 = vmax.f32 %v879, 0.0
        %v900 = vmax.f32 %v882, 0.0
        %v901 = vld [vmem:[#allocation4] sm:$0xf]
        %v902 = vld [vmem:[#allocation4 + $0x4] sm:$0xf]
        %v903 = vld [vmem:[#allocation4 + $0x8] sm:$0xf]
        %v904 = vld [vmem:[#allocation4 + $0xc] sm:$0xf]
        %v905 = vld [vmem:[#allocation4 + $0x10] sm:$0xf]
        %v906 = vld [vmem:[#allocation4 + $0x14] sm:$0xf]
        %v907 = vld [vmem:[#allocation4 + $0x18] sm:$0xf]
        %v908 = vld [vmem:[#allocation4 + $0x1c] sm:$0xf]
        %v909 = vld [vmem:[#allocation4 + $0x20] sm:$0xf]
        %v910 = vld [vmem:[#allocation4 + $0x24] sm:$0xf]
        %v911 = vld [vmem:[#allocation4 + $0x28] sm:$0xf]
        %v912 = vld [vmem:[#allocation4 + $0x2c] sm:$0xf]
        %v913 = vld [vmem:[#allocation4 + $0x30] sm:$0xf]
        %v914 = vld [vmem:[#allocation4 + $0x34] sm:$0xf]
        %v915 = vld [vmem:[#allocation4 + $0x38] sm:$0xf]
        %v916 = vld [vmem:[#allocation4 + $0x3c] sm:$0xf]
        %v917 = vld [vmem:[#allocation4 + $0x40] sm:$0xf]
        %v918 = vld [vmem:[#allocation4 + $0x44] sm:$0xf]
        %v919 = vld [vmem:[#allocation4 + $0x48] sm:$0xf]
        %v920 = vld [vmem:[#allocation4 + $0x4c] sm:$0xf]
        %v921 = vld [vmem:[#allocation4 + $0x50] sm:$0xf]
        %v922 = vld [vmem:[#allocation4 + $0x54] sm:$0xf]
        %v923 = vld [vmem:[#allocation4 + $0x58] sm:$0xf]
        %v924 = vld [vmem:[#allocation4 + $0x5c] sm:$0xf]
        %v925 = vld [vmem:[#allocation4 + $0x60] sm:$0xf]
        %v926 = vld [vmem:[#allocation4 + $0x64] sm:$0xf]
        %v927 = vld [vmem:[#allocation4 + $0x68] sm:$0xf]
        %v928 = vld [vmem:[#allocation4 + $0x6c] sm:$0xf]
        %v929 = vld [vmem:[#allocation4 + $0x70] sm:$0xf]
        %v930 = vld [vmem:[#allocation4 + $0x74] sm:$0xf]
        %v931 = vld [vmem:[#allocation4 + $0x78] sm:$0xf]
        %v932 = vld [vmem:[#allocation4 + $0x7c] sm:$0xf]
        %v933 = vld [vmem:[#allocation4 + $0x80] sm:$0xf]
        %v934 = vld [vmem:[#allocation4 + $0x84] sm:$0xf]
        %v935 = vld [vmem:[#allocation4 + $0x88] sm:$0xf]
        %v936 = vld [vmem:[#allocation4 + $0x8c] sm:$0xf]
        %v937 = vld [vmem:[#allocation4 + $0x90] sm:$0xf]
        %v938 = vld [vmem:[#allocation4 + $0x94] sm:$0xf]
        %v939 = vld [vmem:[#allocation4 + $0x98] sm:$0xf]
        %v940 = vld [vmem:[#allocation4 + $0x9c] sm:$0xf]
        %v941 = vld [vmem:[#allocation4 + $0xa0] sm:$0xf]
        %v942 = vld [vmem:[#allocation4 + $0xa4] sm:$0xf]
        %v943 = vld [vmem:[#allocation4 + $0xa8] sm:$0xf]
        %v944 = vld [vmem:[#allocation4 + $0xac] sm:$0xf]
        %v945 = vld [vmem:[#allocation4 + $0xb0] sm:$0xf]
        %v946 = vld [vmem:[#allocation4 + $0xb4] sm:$0xf]
        %v947 = vld [vmem:[#allocation4 + $0xb8] sm:$0xf]
        %v948 = vld [vmem:[#allocation4 + $0xbc] sm:$0xf]
        %v949 = vld [vmem:[#allocation4 + $0xc0] sm:$0xf]
        %v950 = vld [vmem:[#allocation4 + $0xc4] sm:$0xf]
        %v951 = vld [vmem:[#allocation4 + $0xc8] sm:$0xf]
        %v952 = vld [vmem:[#allocation4 + $0xcc] sm:$0xf]
        %v953 = vld [vmem:[#allocation4 + $0xd0] sm:$0xf]
        %v954 = vld [vmem:[#allocation4 + $0xd4] sm:$0xf]
        %v955 = vld [vmem:[#allocation4 + $0xd8] sm:$0xf]
        %v956 = vld [vmem:[#allocation4 + $0xdc] sm:$0xf]
        %v957 = vld [vmem:[#allocation4 + $0xe0] sm:$0xf]
        %v958 = vld [vmem:[#allocation4 + $0xe4] sm:$0xf]
        %v959 = vld [vmem:[#allocation4 + $0xe8] sm:$0xf]
        %v960 = vld [vmem:[#allocation4 + $0xec] sm:$0xf]
        %v961 = vld [vmem:[#allocation4 + $0xf0] sm:$0xf]
        %v962 = vld [vmem:[#allocation4 + $0xf4] sm:$0xf]
        %v963 = vld [vmem:[#allocation4 + $0xf8] sm:$0xf]
        %v964 = vld [vmem:[#allocation4 + $0xfc] sm:$0xf]
        %v965 = vld [vmem:[#allocation4 + $0x100] sm:$0xf]
        %v966 = vld [vmem:[#allocation4 + $0x104] sm:$0xf]
        %v967 = vld [vmem:[#allocation4 + $0x108] sm:$0xf]
        %v968 = vld [vmem:[#allocation4 + $0x10c] sm:$0xf]
        %v969 = vld [vmem:[#allocation4 + $0x110] sm:$0xf]
        %v970 = vld [vmem:[#allocation4 + $0x114] sm:$0xf]
        %v971 = vld [vmem:[#allocation4 + $0x118] sm:$0xf]
        %v972 = vld [vmem:[#allocation4 + $0x11c] sm:$0xf]
        %v973 = vld [vmem:[#allocation4 + $0x120] sm:$0xf]
        %v974 = vld [vmem:[#allocation4 + $0x124] sm:$0xf]
        %v975 = vld [vmem:[#allocation4 + $0x128] sm:$0xf]
        %v976 = vld [vmem:[#allocation4 + $0x12c] sm:$0xf]
        %v977 = vld [vmem:[#allocation4 + $0x130] sm:$0xf]
        %v978 = vld [vmem:[#allocation4 + $0x134] sm:$0xf]
        %v979 = vld [vmem:[#allocation4 + $0x138] sm:$0xf]
        %v980 = vld [vmem:[#allocation4 + $0x13c] sm:$0xf]
        %v981 = vld [vmem:[#allocation4 + $0x140] sm:$0xf]
        %v982 = vld [vmem:[#allocation4 + $0x144] sm:$0xf]
        %v983 = vld [vmem:[#allocation4 + $0x148] sm:$0xf]
        %v984 = vld [vmem:[#allocation4 + $0x14c] sm:$0xf]
        %v985 = vld [vmem:[#allocation4 + $0x150] sm:$0xf]
        %v986 = vld [vmem:[#allocation4 + $0x154] sm:$0xf]
        %v987 = vld [vmem:[#allocation4 + $0x158] sm:$0xf]
        %v988 = vld [vmem:[#allocation4 + $0x15c] sm:$0xf]
        %v989 = vld [vmem:[#allocation4 + $0x160] sm:$0xf]
        %v990 = vld [vmem:[#allocation4 + $0x164] sm:$0xf]
        %v991 = vld [vmem:[#allocation4 + $0x168] sm:$0xf]
        %v992 = vld [vmem:[#allocation4 + $0x16c] sm:$0xf]
        %v993 = vld [vmem:[#allocation4 + $0x170] sm:$0xf]
        %v994 = vld [vmem:[#allocation4 + $0x174] sm:$0xf]
        %v995 = vld [vmem:[#allocation4 + $0x178] sm:$0xf]
        %v996 = vld [vmem:[#allocation4 + $0x17c] sm:$0xf]
        %v997 = vld [vmem:[#allocation4 + $0x180] sm:$0xf]
        %v998 = vld [vmem:[#allocation4 + $0x184] sm:$0xf]
        %v999 = vld [vmem:[#allocation4 + $0x188] sm:$0xf]
        %v1000 = vld [vmem:[#allocation4 + $0x18c] sm:$0xf]
        %v1001 = vld [vmem:[#allocation4 + $0x190] sm:$0xf]
        %v1002 = vld [vmem:[#allocation4 + $0x194] sm:$0xf]
        %v1003 = vld [vmem:[#allocation4 + $0x198] sm:$0xf]
        %v1004 = vld [vmem:[#allocation4 + $0x19c] sm:$0xf]
        %v1005 = vld [vmem:[#allocation4 + $0x1a0] sm:$0xf]
        %v1006 = vld [vmem:[#allocation4 + $0x1a4] sm:$0xf]
        %v1007 = vld [vmem:[#allocation4 + $0x1a8] sm:$0xf]
        %v1008 = vld [vmem:[#allocation4 + $0x1ac] sm:$0xf]
        %v1009 = vld [vmem:[#allocation4 + $0x1b0] sm:$0xf]
        %v1010 = vld [vmem:[#allocation4 + $0x1b4] sm:$0xf]
        %v1011 = vld [vmem:[#allocation4 + $0x1b8] sm:$0xf]
        %v1012 = vld [vmem:[#allocation4 + $0x1bc] sm:$0xf]
        %v1013 = vld [vmem:[#allocation4 + $0x1c0] sm:$0xf]
        %v1014 = vld [vmem:[#allocation4 + $0x1c4] sm:$0xf]
        %v1015 = vld [vmem:[#allocation4 + $0x1c8] sm:$0xf]
        %v1016 = vld [vmem:[#allocation4 + $0x1cc] sm:$0xf]
        %v1017 = vld [vmem:[#allocation4 + $0x1d0] sm:$0xf]
        %v1018 = vld [vmem:[#allocation4 + $0x1d4] sm:$0xf]
        %v1019 = vld [vmem:[#allocation4 + $0x1d8] sm:$0xf]
        %v1020 = vld [vmem:[#allocation4 + $0x1dc] sm:$0xf]
        %v1021 = vld [vmem:[#allocation4 + $0x1e0] sm:$0xf]
        %v1022 = vld [vmem:[#allocation4 + $0x1e4] sm:$0xf]
        %v1023 = vld [vmem:[#allocation4 + $0x1e8] sm:$0xf]
        %v1024 = vld [vmem:[#allocation4 + $0x1ec] sm:$0xf]
        %v1025 = vld [vmem:[#allocation4 + $0x1f0] sm:$0xf]
        %v1026 = vld [vmem:[#allocation4 + $0x1f4] sm:$0xf]
        %v1027 = vld [vmem:[#allocation4 + $0x1f8] sm:$0xf]
        %v1028 = vld [vmem:[#allocation4 + $0x1fc] sm:$0xf]
        %v1029 = vpack.c.bf16 %v886, %v885
        %v1030 = vpack.c.bf16 %v888, %v887
        %v1031 = vpack.c.bf16 %v890, %v889
        %v1032 = vpack.c.bf16 %v892, %v891
        %v1033 = vpack.c.bf16 %v894, %v893
        %v1034 = vpack.c.bf16 %v896, %v895
        %v1035 = vpack.c.bf16 %v898, %v897
        %v1036 = vpack.c.bf16 %v900, %v899
        %v1165 = vunpack.c.l.b16 %v901
        %v1166 = vunpack.c.l.b16 %v902
        %v1167 = vunpack.c.l.b16 %v903
        %v1168 = vunpack.c.l.b16 %v904
        %v1169 = vunpack.c.l.b16 %v905
        %v1170 = vunpack.c.l.b16 %v906
        %v1171 = vunpack.c.l.b16 %v907
        %v1172 = vunpack.c.l.b16 %v908
        %v1173 = vunpack.c.l.b16 %v909
        %v1174 = vunpack.c.l.b16 %v910
        %v1175 = vunpack.c.l.b16 %v911
        %v1176 = vunpack.c.l.b16 %v912
        %v1177 = vunpack.c.l.b16 %v913
        %v1178 = vunpack.c.l.b16 %v914
        %v1179 = vunpack.c.l.b16 %v915
        %v1180 = vunpack.c.l.b16 %v916
        %v1181 = vunpack.c.l.b16 %v917
        %v1182 = vunpack.c.l.b16 %v918
        %v1183 = vunpack.c.l.b16 %v919
        %v1184 = vunpack.c.l.b16 %v920
        %v1185 = vunpack.c.l.b16 %v921
        %v1186 = vunpack.c.l.b16 %v922
        %v1187 = vunpack.c.l.b16 %v923
        %v1188 = vunpack.c.l.b16 %v924
        %v1189 = vunpack.c.l.b16 %v925
        %v1190 = vunpack.c.l.b16 %v926
        %v1191 = vunpack.c.l.b16 %v927
        %v1192 = vunpack.c.l.b16 %v928
        %v1193 = vunpack.c.l.b16 %v929
        %v1194 = vunpack.c.l.b16 %v930
        %v1195 = vunpack.c.l.b16 %v931
        %v1196 = vunpack.c.l.b16 %v932
        %v1197 = vunpack.c.l.b16 %v933
        %v1198 = vunpack.c.l.b16 %v934
        %v1199 = vunpack.c.l.b16 %v935
        %v1200 = vunpack.c.l.b16 %v936
        %v1201 = vunpack.c.l.b16 %v937
        %v1202 = vunpack.c.l.b16 %v938
        %v1203 = vunpack.c.l.b16 %v939
        %v1204 = vunpack.c.l.b16 %v940
        %v1205 = vunpack.c.l.b16 %v941
        %v1206 = vunpack.c.l.b16 %v942
        %v1207 = vunpack.c.l.b16 %v943
        %v1208 = vunpack.c.l.b16 %v944
        %v1209 = vunpack.c.l.b16 %v945
        %v1210 = vunpack.c.l.b16 %v946
        %v1211 = vunpack.c.l.b16 %v947
        %v1212 = vunpack.c.l.b16 %v948
        %v1213 = vunpack.c.l.b16 %v949
        %v1214 = vunpack.c.l.b16 %v950
        %v1215 = vunpack.c.l.b16 %v951
        %v1216 = vunpack.c.l.b16 %v952
        %v1217 = vunpack.c.l.b16 %v953
        %v1218 = vunpack.c.l.b16 %v954
        %v1219 = vunpack.c.l.b16 %v955
        %v1220 = vunpack.c.l.b16 %v956
        %v1221 = vunpack.c.l.b16 %v957
        %v1222 = vunpack.c.l.b16 %v958
        %v1223 = vunpack.c.l.b16 %v959
        %v1224 = vunpack.c.l.b16 %v960
        %v1225 = vunpack.c.l.b16 %v961
        %v1226 = vunpack.c.l.b16 %v962
        %v1227 = vunpack.c.l.b16 %v963
        %v1228 = vunpack.c.l.b16 %v964
        %v1229 = vunpack.c.l.b16 %v965
        %v1230 = vunpack.c.l.b16 %v966
        %v1231 = vunpack.c.l.b16 %v967
        %v1232 = vunpack.c.l.b16 %v968
        %v1233 = vunpack.c.l.b16 %v969
        %v1234 = vunpack.c.l.b16 %v970
        %v1235 = vunpack.c.l.b16 %v971
        %v1236 = vunpack.c.l.b16 %v972
        %v1237 = vunpack.c.l.b16 %v973
        %v1238 = vunpack.c.l.b16 %v974
        %v1239 = vunpack.c.l.b16 %v975
        %v1240 = vunpack.c.l.b16 %v976
        %v1241 = vunpack.c.l.b16 %v977
        %v1242 = vunpack.c.l.b16 %v978
        %v1243 = vunpack.c.l.b16 %v979
        %v1244 = vunpack.c.l.b16 %v980
        %v1245 = vunpack.c.l.b16 %v981
        %v1246 = vunpack.c.l.b16 %v982
        %v1247 = vunpack.c.l.b16 %v983
        %v1248 = vunpack.c.l.b16 %v984
        %v1249 = vunpack.c.l.b16 %v985
        %v1250 = vunpack.c.l.b16 %v986
        %v1251 = vunpack.c.l.b16 %v987
        %v1252 = vunpack.c.l.b16 %v988
        %v1253 = vunpack.c.l.b16 %v989
        %v1254 = vunpack.c.l.b16 %v990
        %v1255 = vunpack.c.l.b16 %v991
        %v1256 = vunpack.c.l.b16 %v992
        %v1257 = vunpack.c.l.b16 %v993
        %v1258 = vunpack.c.l.b16 %v994
        %v1259 = vunpack.c.l.b16 %v995
        %v1260 = vunpack.c.l.b16 %v996
        %v1261 = vunpack.c.l.b16 %v997
        %v1262 = vunpack.c.l.b16 %v998
        %v1263 = vunpack.c.l.b16 %v999
        %v1264 = vunpack.c.l.b16 %v1000
        %v1265 = vunpack.c.l.b16 %v1001
        %v1266 = vunpack.c.l.b16 %v1002
        %v1267 = vunpack.c.l.b16 %v1003
        %v1268 = vunpack.c.l.b16 %v1004
        %v1269 = vunpack.c.l.b16 %v1005
        %v1270 = vunpack.c.l.b16 %v1006
        %v1271 = vunpack.c.l.b16 %v1007
        %v1272 = vunpack.c.l.b16 %v1008
        %v1273 = vunpack.c.l.b16 %v1009
        %v1274 = vunpack.c.l.b16 %v1010
        %v1275 = vunpack.c.l.b16 %v1011
        %v1276 = vunpack.c.l.b16 %v1012
        %v1277 = vunpack.c.l.b16 %v1013
        %v1278 = vunpack.c.l.b16 %v1014
        %v1279 = vunpack.c.l.b16 %v1015
        %v1280 = vunpack.c.l.b16 %v1016
        %v1281 = vunpack.c.l.b16 %v1017
        %v1282 = vunpack.c.l.b16 %v1018
        %v1283 = vunpack.c.l.b16 %v1019
        %v1284 = vunpack.c.l.b16 %v1020
        %v1285 = vunpack.c.l.b16 %v1021
        %v1286 = vunpack.c.l.b16 %v1022
        %v1287 = vunpack.c.l.b16 %v1023
        %v1288 = vunpack.c.l.b16 %v1024
        %v1289 = vunpack.c.l.b16 %v1025
        %v1290 = vunpack.c.l.b16 %v1026
        %v1291 = vunpack.c.l.b16 %v1027
        %v1292 = vunpack.c.l.b16 %v1028
        %v1293 = vpack.c.b16 %v1166, %v1165
        %v1294 = vpack.c.b16 %v1168, %v1167
        %v1295 = vpack.c.b16 %v1170, %v1169
        %v1296 = vpack.c.b16 %v1172, %v1171
        %v1297 = vpack.c.b16 %v1174, %v1173
        %v1298 = vpack.c.b16 %v1176, %v1175
        %v1299 = vpack.c.b16 %v1178, %v1177
        %v1300 = vpack.c.b16 %v1180, %v1179
        %v1301 = vpack.c.b16 %v1182, %v1181
        %v1302 = vpack.c.b16 %v1184, %v1183
        %v1303 = vpack.c.b16 %v1186, %v1185
        %v1304 = vpack.c.b16 %v1188, %v1187
        %v1305 = vpack.c.b16 %v1190, %v1189
        %v1306 = vpack.c.b16 %v1192, %v1191
        %v1307 = vpack.c.b16 %v1194, %v1193
        %v1308 = vpack.c.b16 %v1196, %v1195
        %v1309 = vpack.c.b16 %v1198, %v1197
        %v1310 = vpack.c.b16 %v1200, %v1199
        %v1311 = vpack.c.b16 %v1202, %v1201
        %v1312 = vpack.c.b16 %v1204, %v1203
        %v1313 = vpack.c.b16 %v1206, %v1205
        %v1314 = vpack.c.b16 %v1208, %v1207
        %v1315 = vpack.c.b16 %v1210, %v1209
        %v1316 = vpack.c.b16 %v1212, %v1211
        %v1317 = vpack.c.b16 %v1214, %v1213
        %v1318 = vpack.c.b16 %v1216, %v1215
        %v1319 = vpack.c.b16 %v1218, %v1217
        %v1320 = vpack.c.b16 %v1220, %v1219
        %v1321 = vpack.c.b16 %v1222, %v1221
        %v1322 = vpack.c.b16 %v1224, %v1223
        %v1323 = vpack.c.b16 %v1226, %v1225
        %v1324 = vpack.c.b16 %v1228, %v1227
        %v1325 = vpack.c.b16 %v1230, %v1229
        %v1326 = vpack.c.b16 %v1232, %v1231
        %v1327 = vpack.c.b16 %v1234, %v1233
        %v1328 = vpack.c.b16 %v1236, %v1235
        %v1329 = vpack.c.b16 %v1238, %v1237
        %v1330 = vpack.c.b16 %v1240, %v1239
        %v1331 = vpack.c.b16 %v1242, %v1241
        %v1332 = vpack.c.b16 %v1244, %v1243
        %v1333 = vpack.c.b16 %v1246, %v1245
        %v1334 = vpack.c.b16 %v1248, %v1247
        %v1335 = vpack.c.b16 %v1250, %v1249
        %v1336 = vpack.c.b16 %v1252, %v1251
        %v1337 = vpack.c.b16 %v1254, %v1253
        %v1338 = vpack.c.b16 %v1256, %v1255
        %v1339 = vpack.c.b16 %v1258, %v1257
        %v1340 = vpack.c.b16 %v1260, %v1259
        %v1341 = vpack.c.b16 %v1262, %v1261
        %v1342 = vpack.c.b16 %v1264, %v1263
        %v1343 = vpack.c.b16 %v1266, %v1265
        %v1344 = vpack.c.b16 %v1268, %v1267
        %v1345 = vpack.c.b16 %v1270, %v1269
        %v1346 = vpack.c.b16 %v1272, %v1271
        %v1347 = vpack.c.b16 %v1274, %v1273
        %v1348 = vpack.c.b16 %v1276, %v1275
        %v1349 = vpack.c.b16 %v1278, %v1277
        %v1350 = vpack.c.b16 %v1280, %v1279
        %v1351 = vpack.c.b16 %v1282, %v1281
        %v1352 = vpack.c.b16 %v1284, %v1283
        %v1353 = vpack.c.b16 %v1286, %v1285
        %v1354 = vpack.c.b16 %v1288, %v1287
        %v1355 = vpack.c.b16 %v1290, %v1289
        %v1356 = vpack.c.b16 %v1292, %v1291
        %1421 = vmatprep.subr.bf16.mxu0 0
        %1422 = vmatpush1.bf16.msra.mxu0 %v1029
        %1423 = vmatprep.subr.bf16.mxu0 0
        %1424 = vmatpush1.bf16.msra.mxu0 %v1030
        %1425 = vmatprep.subr.bf16.mxu0 0
        %1426 = vmatpush1.bf16.msra.mxu0 %v1031
        %1427 = vmatprep.subr.bf16.mxu0 0
        %1428 = vmatpush1.bf16.msra.mxu0 %v1032
        %1429 = vmatprep.subr.bf16.mxu0 0
        %1430 = vmatpush1.bf16.msra.mxu0 %v1033
        %1431 = vmatprep.subr.bf16.mxu0 0
        %1432 = vmatpush1.bf16.msra.mxu0 %v1034
        %1433 = vmatprep.subr.bf16.mxu0 0
        %1434 = vmatpush1.bf16.msra.mxu0 %v1035
        %1435 = vmatprep.subr.bf16.mxu0 0
        %1436 = vmatpush1.bf16.msra.mxu0 %v1036
        %1437 = vmatprep.subr.bf16.mxu0 0
        %1438 = vmatpush1.bf16.msra.mxu0 0
        %1439 = vmatprep.subr.bf16.mxu0 0
        %1440 = vmatpush1.bf16.msra.mxu0 0
        %1441 = vmatprep.subr.bf16.mxu0 0
        %1442 = vmatpush1.bf16.msra.mxu0 0
        %1443 = vmatprep.subr.bf16.mxu0 0
        %1444 = vmatpush1.bf16.msra.mxu0 0
        %1445 = vmatprep.subr.bf16.mxu0 0
        %1446 = vmatpush1.bf16.msra.mxu0 0
        %1447 = vmatprep.subr.bf16.mxu0 0
        %1448 = vmatpush1.bf16.msra.mxu0 0
        %1449 = vmatprep.subr.bf16.mxu0 0
        %1450 = vmatpush1.bf16.msra.mxu0 0
        %1451 = vmatprep.subr.bf16.mxu0 0
        %1452 = vmatpush1.bf16.msra.mxu0 0
        %1453 = vmatprep.mubr.bf16.mxu0 0
        %1454 = vmatmul.mubr.bf16.gmra.mrb[0].mxu0 %v1293
        %v1455 = vpop.f32.mrb[0].mxu0
        %v1456 = vadd.f32 0.0, %v1455
        %v1457 = vpop.f32.mrb[0].mxu0
        %v1458 = vpop.f32.mrb[0].mxu0
        %v1459 = vadd.f32 0.0, %v1458
        %v1460 = vpop.f32.mrb[0].mxu0
        %1461 = vmatprep.mubr.bf16.mxu0 0
        %1462 = vmatmul.mubr.bf16.gmra.mrb[0].mxu0 %v1294
        %v1463 = vpop.f32.mrb[0].mxu0
        %v1464 = vadd.f32 0.0, %v1463
        %v1465 = vpop.f32.mrb[0].mxu0
        %v1466 = vpop.f32.mrb[0].mxu0
        %v1467 = vadd.f32 0.0, %v1466
        %v1468 = vpop.f32.mrb[0].mxu0
        %1469 = vmatprep.mubr.bf16.mxu0 0
        %1470 = vmatmul.mubr.bf16.gmra.mrb[0].mxu0 %v1295
        %v1471 = vpop.f32.mrb[0].mxu0
        %v1472 = vadd.f32 0.0, %v1471
        %v1473 = vpop.f32.mrb[0].mxu0
        %v1474 = vpop.f32.mrb[0].mxu0
        %v1475 = vadd.f32 0.0, %v1474
        %v1476 = vpop.f32.mrb[0].mxu0
        %1477 = vmatprep.mubr.bf16.mxu0 0
        %1478 = vmatmul.mubr.bf16.gmra.mrb[0].mxu0 %v1296
        %v1479 = vpop.f32.mrb[0].mxu0
        %v1480 = vadd.f32 0.0, %v1479
        %v1481 = vpop.f32.mrb[0].mxu0
        %v1482 = vpop.f32.mrb[0].mxu0
        %v1483 = vadd.f32 0.0, %v1482
        %v1484 = vpop.f32.mrb[0].mxu0
        %1485 = vmatprep.mubr.bf16.mxu0 0
        %1486 = vmatmul.mubr.bf16.gmra.mrb[0].mxu0 %v1297
        %v1487 = vpop.f32.mrb[0].mxu0
        %v1488 = vadd.f32 0.0, %v1487
        %v1489 = vpop.f32.mrb[0].mxu0
        %v1490 = vpop.f32.mrb[0].mxu0
        %v1491 = vadd.f32 0.0, %v1490
        %v1492 = vpop.f32.mrb[0].mxu0
        %1493 = vmatprep.mubr.bf16.mxu0 0
        %1494 = vmatmul.mubr.bf16.gmra.mrb[0].mxu0 %v1298
        %v1495 = vpop.f32.mrb[0].mxu0
        %v1496 = vadd.f32 0.0, %v1495
        %v1497 = vpop.f32.mrb[0].mxu0
        %v1498 = vpop.f32.mrb[0].mxu0
        %v1499 = vadd.f32 0.0, %v1498
        %v1500 = vpop.f32.mrb[0].mxu0
        %1501 = vmatprep.mubr.bf16.mxu0 0
        %1502 = vmatmul.mubr.bf16.gmra.mrb[0].mxu0 %v1299
        %v1503 = vpop.f32.mrb[0].mxu0
        %v1504 = vadd.f32 0.0, %v1503
        %v1505 = vpop.f32.mrb[0].mxu0
        %v1506 = vpop.f32.mrb[0].mxu0
        %v1507 = vadd.f32 0.0, %v1506
        %v1508 = vpop.f32.mrb[0].mxu0
        %1509 = vmatprep.mubr.bf16.mxu0 0
        %1510 = vmatmul.mubr.bf16.gmra.mrb[0].mxu0 %v1300
        %v1511 = vpop.f32.mrb[0].mxu0
        %v1512 = vadd.f32 0.0, %v1511
        %v1513 = vpop.f32.mrb[0].mxu0
        %v1514 = vpop.f32.mrb[0].mxu0
        %v1515 = vadd.f32 0.0, %v1514
        %v1516 = vpop.f32.mrb[0].mxu0
        %1517 = vmatprep.mubr.bf16.mxu0 0
        %1518 = vmatmul.mubr.bf16.gmra.mrb[0].mxu0 %v1301
        %v1519 = vpop.f32.mrb[0].mxu0
        %v1520 = vadd.f32 0.0, %v1519
        %v1521 = vpop.f32.mrb[0].mxu0
        %v1522 = vpop.f32.mrb[0].mxu0
        %v1523 = vadd.f32 0.0, %v1522
        %v1524 = vpop.f32.mrb[0].mxu0
        %1525 = vmatprep.mubr.bf16.mxu0 0
        %1526 = vmatmul.mubr.bf16.gmra.mrb[0].mxu0 %v1302
        %v1527 = vpop.f32.mrb[0].mxu0
        %v1528 = vadd.f32 0.0, %v1527
        %v1529 = vpop.f32.mrb[0].mxu0
        %v1530 = vpop.f32.mrb[0].mxu0
        %v1531 = vadd.f32 0.0, %v1530
        %v1532 = vpop.f32.mrb[0].mxu0
        %1533 = vmatprep.mubr.bf16.mxu0 0
        %1534 = vmatmul.mubr.bf16.gmra.mrb[0].mxu0 %v1303
        %v1535 = vpop.f32.mrb[0].mxu0
        %v1536 = vadd.f32 0.0, %v1535
        %v1537 = vpop.f32.mrb[0].mxu0
        %v1538 = vpop.f32.mrb[0].mxu0
        %v1539 = vadd.f32 0.0, %v1538
        %v1540 = vpop.f32.mrb[0].mxu0
        %1541 = vmatprep.mubr.bf16.mxu0 0
        %1542 = vmatmul.mubr.bf16.gmra.mrb[0].mxu0 %v1304
        %v1543 = vpop.f32.mrb[0].mxu0
        %v1544 = vadd.f32 0.0, %v1543
        %v1545 = vpop.f32.mrb[0].mxu0
        %v1546 = vpop.f32.mrb[0].mxu0
        %v1547 = vadd.f32 0.0, %v1546
        %v1548 = vpop.f32.mrb[0].mxu0
        %1549 = vmatprep.mubr.bf16.mxu0 0
        %1550 = vmatmul.mubr.bf16.gmra.mrb[0].mxu0 %v1305
        %v1551 = vpop.f32.mrb[0].mxu0
        %v1552 = vadd.f32 0.0, %v1551
        %v1553 = vpop.f32.mrb[0].mxu0
        %v1554 = vpop.f32.mrb[0].mxu0
        %v1555 = vadd.f32 0.0, %v1554
        %v1556 = vpop.f32.mrb[0].mxu0
        %1557 = vmatprep.mubr.bf16.mxu0 0
        %1558 = vmatmul.mubr.bf16.gmra.mrb[0].mxu0 %v1306
        %v1559 = vpop.f32.mrb[0].mxu0
        %v1560 = vadd.f32 0.0, %v1559
        %v1561 = vpop.f32.mrb[0].mxu0
        %v1562 = vpop.f32.mrb[0].mxu0
        %v1563 = vadd.f32 0.0, %v1562
        %v1564 = vpop.f32.mrb[0].mxu0
        %1565 = vmatprep.mubr.bf16.mxu0 0
        %1566 = vmatmul.mubr.bf16.gmra.mrb[0].mxu0 %v1307
        %v1567 = vpop.f32.mrb[0].mxu0
        %v1568 = vadd.f32 0.0, %v1567
        %v1569 = vpop.f32.mrb[0].mxu0
        %v1570 = vpop.f32.mrb[0].mxu0
        %v1571 = vadd.f32 0.0, %v1570
        %v1572 = vpop.f32.mrb[0].mxu0
        %1573 = vmatprep.mubr.bf16.mxu0 0
        %1574 = vmatmul.mubr.bf16.gmra.mrb[0].mxu0 %v1308
        %v1575 = vpop.f32.mrb[0].mxu0
        %v1576 = vadd.f32 0.0, %v1575
        %v1577 = vpop.f32.mrb[0].mxu0
        %v1578 = vpop.f32.mrb[0].mxu0
        %v1579 = vadd.f32 0.0, %v1578
        %v1580 = vpop.f32.mrb[0].mxu0
        %1581 = vmatprep.mubr.bf16.mxu0 0
        %1582 = vmatmul.mubr.bf16.gmra.mrb[0].mxu0 %v1309
        %v1583 = vpop.f32.mrb[0].mxu0
        %v1584 = vadd.f32 0.0, %v1583
        %v1585 = vpop.f32.mrb[0].mxu0
        %v1586 = vpop.f32.mrb[0].mxu0
        %v1587 = vadd.f32 0.0, %v1586
        %v1588 = vpop.f32.mrb[0].mxu0
        %1589 = vmatprep.mubr.bf16.mxu0 0
        %1590 = vmatmul.mubr.bf16.gmra.mrb[0].mxu0 %v1310
        %v1591 = vpop.f32.mrb[0].mxu0
        %v1592 = vadd.f32 0.0, %v1591
        %v1593 = vpop.f32.mrb[0].mxu0
        %v1594 = vpop.f32.mrb[0].mxu0
        %v1595 = vadd.f32 0.0, %v1594
        %v1596 = vpop.f32.mrb[0].mxu0
        %1597 = vmatprep.mubr.bf16.mxu0 0
        %1598 = vmatmul.mubr.bf16.gmra.mrb[0].mxu0 %v1311
        %v1599 = vpop.f32.mrb[0].mxu0
        %v1600 = vadd.f32 0.0, %v1599
        %v1601 = vpop.f32.mrb[0].mxu0
        %v1602 = vpop.f32.mrb[0].mxu0
        %v1603 = vadd.f32 0.0, %v1602
        %v1604 = vpop.f32.mrb[0].mxu0
        %1605 = vmatprep.mubr.bf16.mxu0 0
        %1606 = vmatmul.mubr.bf16.gmra.mrb[0].mxu0 %v1312
        %v1607 = vpop.f32.mrb[0].mxu0
        %v1608 = vadd.f32 0.0, %v1607
        %v1609 = vpop.f32.mrb[0].mxu0
        %v1610 = vpop.f32.mrb[0].mxu0
        %v1611 = vadd.f32 0.0, %v1610
        %v1612 = vpop.f32.mrb[0].mxu0
        %1613 = vmatprep.mubr.bf16.mxu0 0
        %1614 = vmatmul.mubr.bf16.gmra.mrb[0].mxu0 %v1313
        %v1615 = vpop.f32.mrb[0].mxu0
        %v1616 = vadd.f32 0.0, %v1615
        %v1617 = vpop.f32.mrb[0].mxu0
        %v1618 = vpop.f32.mrb[0].mxu0
        %v1619 = vadd.f32 0.0, %v1618
        %v1620 = vpop.f32.mrb[0].mxu0
        %1621 = vmatprep.mubr.bf16.mxu0 0
        %1622 = vmatmul.mubr.bf16.gmra.mrb[0].mxu0 %v1314
        %v1623 = vpop.f32.mrb[0].mxu0
        %v1624 = vadd.f32 0.0, %v1623
        %v1625 = vpop.f32.mrb[0].mxu0
        %v1626 = vpop.f32.mrb[0].mxu0
        %v1627 = vadd.f32 0.0, %v1626
        %v1628 = vpop.f32.mrb[0].mxu0
        %1629 = vmatprep.mubr.bf16.mxu0 0
        %1630 = vmatmul.mubr.bf16.gmra.mrb[0].mxu0 %v1315
        %v1631 = vpop.f32.mrb[0].mxu0
        %v1632 = vadd.f32 0.0, %v1631
        %v1633 = vpop.f32.mrb[0].mxu0
        %v1634 = vpop.f32.mrb[0].mxu0
        %v1635 = vadd.f32 0.0, %v1634
        %v1636 = vpop.f32.mrb[0].mxu0
        %1637 = vmatprep.mubr.bf16.mxu0 0
        %1638 = vmatmul.mubr.bf16.gmra.mrb[0].mxu0 %v1316
        %v1639 = vpop.f32.mrb[0].mxu0
        %v1640 = vadd.f32 0.0, %v1639
        %v1641 = vpop.f32.mrb[0].mxu0
        %v1642 = vpop.f32.mrb[0].mxu0
        %v1643 = vadd.f32 0.0, %v1642
        %v1644 = vpop.f32.mrb[0].mxu0
        %1645 = vmatprep.mubr.bf16.mxu0 0
        %1646 = vmatmul.mubr.bf16.gmra.mrb[0].mxu0 %v1317
        %v1647 = vpop.f32.mrb[0].mxu0
        %v1648 = vadd.f32 0.0, %v1647
        %v1649 = vpop.f32.mrb[0].mxu0
        %v1650 = vpop.f32.mrb[0].mxu0
        %v1651 = vadd.f32 0.0, %v1650
        %v1652 = vpop.f32.mrb[0].mxu0
        %1653 = vmatprep.mubr.bf16.mxu0 0
        %1654 = vmatmul.mubr.bf16.gmra.mrb[0].mxu0 %v1318
        %v1655 = vpop.f32.mrb[0].mxu0
        %v1656 = vadd.f32 0.0, %v1655
        %v1657 = vpop.f32.mrb[0].mxu0
        %v1658 = vpop.f32.mrb[0].mxu0
        %v1659 = vadd.f32 0.0, %v1658
        %v1660 = vpop.f32.mrb[0].mxu0
        %1661 = vmatprep.mubr.bf16.mxu0 0
        %1662 = vmatmul.mubr.bf16.gmra.mrb[0].mxu0 %v1319
        %v1663 = vpop.f32.mrb[0].mxu0
        %v1664 = vadd.f32 0.0, %v1663
        %v1665 = vpop.f32.mrb[0].mxu0
        %v1666 = vpop.f32.mrb[0].mxu0
        %v1667 = vadd.f32 0.0, %v1666
        %v1668 = vpop.f32.mrb[0].mxu0
        %1669 = vmatprep.mubr.bf16.mxu0 0
        %1670 = vmatmul.mubr.bf16.gmra.mrb[0].mxu0 %v1320
        %v1671 = vpop.f32.mrb[0].mxu0
        %v1672 = vadd.f32 0.0, %v1671
        %v1673 = vpop.f32.mrb[0].mxu0
        %v1674 = vpop.f32.mrb[0].mxu0
        %v1675 = vadd.f32 0.0, %v1674
        %v1676 = vpop.f32.mrb[0].mxu0
        %1677 = vmatprep.mubr.bf16.mxu0 0
        %1678 = vmatmul.mubr.bf16.gmra.mrb[0].mxu0 %v1321
        %v1679 = vpop.f32.mrb[0].mxu0
        %v1680 = vadd.f32 0.0, %v1679
        %v1681 = vpop.f32.mrb[0].mxu0
        %v1682 = vpop.f32.mrb[0].mxu0
        %v1683 = vadd.f32 0.0, %v1682
        %v1684 = vpop.f32.mrb[0].mxu0
        %1685 = vmatprep.mubr.bf16.mxu0 0
        %1686 = vmatmul.mubr.bf16.gmra.mrb[0].mxu0 %v1322
        %v1687 = vpop.f32.mrb[0].mxu0
        %v1688 = vadd.f32 0.0, %v1687
        %v1689 = vpop.f32.mrb[0].mxu0
        %v1690 = vpop.f32.mrb[0].mxu0
        %v1691 = vadd.f32 0.0, %v1690
        %v1692 = vpop.f32.mrb[0].mxu0
        %1693 = vmatprep.mubr.bf16.mxu0 0
        %1694 = vmatmul.mubr.bf16.gmra.mrb[0].mxu0 %v1323
        %v1695 = vpop.f32.mrb[0].mxu0
        %v1696 = vadd.f32 0.0, %v1695
        %v1697 = vpop.f32.mrb[0].mxu0
        %v1698 = vpop.f32.mrb[0].mxu0
        %v1699 = vadd.f32 0.0, %v1698
        %v1700 = vpop.f32.mrb[0].mxu0
        %1701 = vmatprep.mubr.bf16.mxu0 0
        %1702 = vmatmul.mubr.bf16.gmra.mrb[0].mxu0 %v1324
        %v1703 = vpop.f32.mrb[0].mxu0
        %v1704 = vadd.f32 0.0, %v1703
        %v1705 = vpop.f32.mrb[0].mxu0
        %v1706 = vpop.f32.mrb[0].mxu0
        %v1707 = vadd.f32 0.0, %v1706
        %v1708 = vpop.f32.mrb[0].mxu0
        %1709 = vmatprep.mubr.bf16.mxu0 0
        %1710 = vmatmul.mubr.bf16.gmra.mrb[0].mxu0 %v1325
        %v1711 = vpop.f32.mrb[0].mxu0
        %v1712 = vadd.f32 0.0, %v1711
        %v1713 = vpop.f32.mrb[0].mxu0
        %v1714 = vpop.f32.mrb[0].mxu0
        %v1715 = vadd.f32 0.0, %v1714
        %v1716 = vpop.f32.mrb[0].mxu0
        %1717 = vmatprep.mubr.bf16.mxu0 0
        %1718 = vmatmul.mubr.bf16.gmra.mrb[0].mxu0 %v1326
        %v1719 = vpop.f32.mrb[0].mxu0
        %v1720 = vadd.f32 0.0, %v1719
        %v1721 = vpop.f32.mrb[0].mxu0
        %v1722 = vpop.f32.mrb[0].mxu0
        %v1723 = vadd.f32 0.0, %v1722
        %v1724 = vpop.f32.mrb[0].mxu0
        %1725 = vmatprep.mubr.bf16.mxu0 0
        %1726 = vmatmul.mubr.bf16.gmra.mrb[0].mxu0 %v1327
        %v1727 = vpop.f32.mrb[0].mxu0
        %v1728 = vadd.f32 0.0, %v1727
        %v1729 = vpop.f32.mrb[0].mxu0
        %v1730 = vpop.f32.mrb[0].mxu0
        %v1731 = vadd.f32 0.0, %v1730
        %v1732 = vpop.f32.mrb[0].mxu0
        %1733 = vmatprep.mubr.bf16.mxu0 0
        %1734 = vmatmul.mubr.bf16.gmra.mrb[0].mxu0 %v1328
        %v1735 = vpop.f32.mrb[0].mxu0
        %v1736 = vadd.f32 0.0, %v1735
        %v1737 = vpop.f32.mrb[0].mxu0
        %v1738 = vpop.f32.mrb[0].mxu0
        %v1739 = vadd.f32 0.0, %v1738
        %v1740 = vpop.f32.mrb[0].mxu0
        %1741 = vmatprep.mubr.bf16.mxu0 0
        %1742 = vmatmul.mubr.bf16.gmra.mrb[0].mxu0 %v1329
        %v1743 = vpop.f32.mrb[0].mxu0
        %v1744 = vadd.f32 0.0, %v1743
        %v1745 = vpop.f32.mrb[0].mxu0
        %v1746 = vpop.f32.mrb[0].mxu0
        %v1747 = vadd.f32 0.0, %v1746
        %v1748 = vpop.f32.mrb[0].mxu0
        %1749 = vmatprep.mubr.bf16.mxu0 0
        %1750 = vmatmul.mubr.bf16.gmra.mrb[0].mxu0 %v1330
        %v1751 = vpop.f32.mrb[0].mxu0
        %v1752 = vadd.f32 0.0, %v1751
        %v1753 = vpop.f32.mrb[0].mxu0
        %v1754 = vpop.f32.mrb[0].mxu0
        %v1755 = vadd.f32 0.0, %v1754
        %v1756 = vpop.f32.mrb[0].mxu0
        %1757 = vmatprep.mubr.bf16.mxu0 0
        %1758 = vmatmul.mubr.bf16.gmra.mrb[0].mxu0 %v1331
        %v1759 = vpop.f32.mrb[0].mxu0
        %v1760 = vadd.f32 0.0, %v1759
        %v1761 = vpop.f32.mrb[0].mxu0
        %v1762 = vpop.f32.mrb[0].mxu0
        %v1763 = vadd.f32 0.0, %v1762
        %v1764 = vpop.f32.mrb[0].mxu0
        %1765 = vmatprep.mubr.bf16.mxu0 0
        %1766 = vmatmul.mubr.bf16.gmra.mrb[0].mxu0 %v1332
        %v1767 = vpop.f32.mrb[0].mxu0
        %v1768 = vadd.f32 0.0, %v1767
        %v1769 = vpop.f32.mrb[0].mxu0
        %v1770 = vpop.f32.mrb[0].mxu0
        %v1771 = vadd.f32 0.0, %v1770
        %v1772 = vpop.f32.mrb[0].mxu0
        %1773 = vmatprep.mubr.bf16.mxu0 0
        %1774 = vmatmul.mubr.bf16.gmra.mrb[0].mxu0 %v1333
        %v1775 = vpop.f32.mrb[0].mxu0
        %v1776 = vadd.f32 0.0, %v1775
        %v1777 = vpop.f32.mrb[0].mxu0
        %v1778 = vpop.f32.mrb[0].mxu0
        %v1779 = vadd.f32 0.0, %v1778
        %v1780 = vpop.f32.mrb[0].mxu0
        %1781 = vmatprep.mubr.bf16.mxu0 0
        %1782 = vmatmul.mubr.bf16.gmra.mrb[0].mxu0 %v1334
        %v1783 = vpop.f32.mrb[0].mxu0
        %v1784 = vadd.f32 0.0, %v1783
        %v1785 = vpop.f32.mrb[0].mxu0
        %v1786 = vpop.f32.mrb[0].mxu0
        %v1787 = vadd.f32 0.0, %v1786
        %v1788 = vpop.f32.mrb[0].mxu0
        %1789 = vmatprep.mubr.bf16.mxu0 0
        %1790 = vmatmul.mubr.bf16.gmra.mrb[0].mxu0 %v1335
        %v1791 = vpop.f32.mrb[0].mxu0
        %v1792 = vadd.f32 0.0, %v1791
        %v1793 = vpop.f32.mrb[0].mxu0
        %v1794 = vpop.f32.mrb[0].mxu0
        %v1795 = vadd.f32 0.0, %v1794
        %v1796 = vpop.f32.mrb[0].mxu0
        %1797 = vmatprep.mubr.bf16.mxu0 0
        %1798 = vmatmul.mubr.bf16.gmra.mrb[0].mxu0 %v1336
        %v1799 = vpop.f32.mrb[0].mxu0
        %v1800 = vadd.f32 0.0, %v1799
        %v1801 = vpop.f32.mrb[0].mxu0
        %v1802 = vpop.f32.mrb[0].mxu0
        %v1803 = vadd.f32 0.0, %v1802
        %v1804 = vpop.f32.mrb[0].mxu0
        %1805 = vmatprep.mubr.bf16.mxu0 0
        %1806 = vmatmul.mubr.bf16.gmra.mrb[0].mxu0 %v1337
        %v1807 = vpop.f32.mrb[0].mxu0
        %v1808 = vadd.f32 0.0, %v1807
        %v1809 = vpop.f32.mrb[0].mxu0
        %v1810 = vpop.f32.mrb[0].mxu0
        %v1811 = vadd.f32 0.0, %v1810
        %v1812 = vpop.f32.mrb[0].mxu0
        %1813 = vmatprep.mubr.bf16.mxu0 0
        %1814 = vmatmul.mubr.bf16.gmra.mrb[0].mxu0 %v1338
        %v1815 = vpop.f32.mrb[0].mxu0
        %v1816 = vadd.f32 0.0, %v1815
        %v1817 = vpop.f32.mrb[0].mxu0
        %v1818 = vpop.f32.mrb[0].mxu0
        %v1819 = vadd.f32 0.0, %v1818
        %v1820 = vpop.f32.mrb[0].mxu0
        %1821 = vmatprep.mubr.bf16.mxu0 0
        %1822 = vmatmul.mubr.bf16.gmra.mrb[0].mxu0 %v1339
        %v1823 = vpop.f32.mrb[0].mxu0
        %v1824 = vadd.f32 0.0, %v1823
        %v1825 = vpop.f32.mrb[0].mxu0
        %v1826 = vpop.f32.mrb[0].mxu0
        %v1827 = vadd.f32 0.0, %v1826
        %v1828 = vpop.f32.mrb[0].mxu0
        %1829 = vmatprep.mubr.bf16.mxu0 0
        %1830 = vmatmul.mubr.bf16.gmra.mrb[0].mxu0 %v1340
        %v1831 = vpop.f32.mrb[0].mxu0
        %v1832 = vadd.f32 0.0, %v1831
        %v1833 = vpop.f32.mrb[0].mxu0
        %v1834 = vpop.f32.mrb[0].mxu0
        %v1835 = vadd.f32 0.0, %v1834
        %v1836 = vpop.f32.mrb[0].mxu0
        %1837 = vmatprep.mubr.bf16.mxu0 0
        %1838 = vmatmul.mubr.bf16.gmra.mrb[0].mxu0 %v1341
        %v1839 = vpop.f32.mrb[0].mxu0
        %v1840 = vadd.f32 0.0, %v1839
        %v1841 = vpop.f32.mrb[0].mxu0
        %v1842 = vpop.f32.mrb[0].mxu0
        %v1843 = vadd.f32 0.0, %v1842
        %v1844 = vpop.f32.mrb[0].mxu0
        %1845 = vmatprep.mubr.bf16.mxu0 0
        %1846 = vmatmul.mubr.bf16.gmra.mrb[0].mxu0 %v1342
        %v1847 = vpop.f32.mrb[0].mxu0
        %v1848 = vadd.f32 0.0, %v1847
        %v1849 = vpop.f32.mrb[0].mxu0
        %v1850 = vpop.f32.mrb[0].mxu0
        %v1851 = vadd.f32 0.0, %v1850
        %v1852 = vpop.f32.mrb[0].mxu0
        %1853 = vmatprep.mubr.bf16.mxu0 0
        %1854 = vmatmul.mubr.bf16.gmra.mrb[0].mxu0 %v1343
        %v1855 = vpop.f32.mrb[0].mxu0
        %v1856 = vadd.f32 0.0, %v1855
        %v1857 = vpop.f32.mrb[0].mxu0
        %v1858 = vpop.f32.mrb[0].mxu0
        %v1859 = vadd.f32 0.0, %v1858
        %v1860 = vpop.f32.mrb[0].mxu0
        %1861 = vmatprep.mubr.bf16.mxu0 0
        %1862 = vmatmul.mubr.bf16.gmra.mrb[0].mxu0 %v1344
        %v1863 = vpop.f32.mrb[0].mxu0
        %v1864 = vadd.f32 0.0, %v1863
        %v1865 = vpop.f32.mrb[0].mxu0
        %v1866 = vpop.f32.mrb[0].mxu0
        %v1867 = vadd.f32 0.0, %v1866
        %v1868 = vpop.f32.mrb[0].mxu0
        %1869 = vmatprep.mubr.bf16.mxu0 0
        %1870 = vmatmul.mubr.bf16.gmra.mrb[0].mxu0 %v1345
        %v1871 = vpop.f32.mrb[0].mxu0
        %v1872 = vadd.f32 0.0, %v1871
        %v1873 = vpop.f32.mrb[0].mxu0
        %v1874 = vpop.f32.mrb[0].mxu0
        %v1875 = vadd.f32 0.0, %v1874
        %v1876 = vpop.f32.mrb[0].mxu0
        %1877 = vmatprep.mubr.bf16.mxu0 0
        %1878 = vmatmul.mubr.bf16.gmra.mrb[0].mxu0 %v1346
        %v1879 = vpop.f32.mrb[0].mxu0
        %v1880 = vadd.f32 0.0, %v1879
        %v1881 = vpop.f32.mrb[0].mxu0
        %v1882 = vpop.f32.mrb[0].mxu0
        %v1883 = vadd.f32 0.0, %v1882
        %v1884 = vpop.f32.mrb[0].mxu0
        %1885 = vmatprep.mubr.bf16.mxu0 0
        %1886 = vmatmul.mubr.bf16.gmra.mrb[0].mxu0 %v1347
        %v1887 = vpop.f32.mrb[0].mxu0
        %v1888 = vadd.f32 0.0, %v1887
        %v1889 = vpop.f32.mrb[0].mxu0
        %v1890 = vpop.f32.mrb[0].mxu0
        %v1891 = vadd.f32 0.0, %v1890
        %v1892 = vpop.f32.mrb[0].mxu0
        %1893 = vmatprep.mubr.bf16.mxu0 0
        %1894 = vmatmul.mubr.bf16.gmra.mrb[0].mxu0 %v1348
        %v1895 = vpop.f32.mrb[0].mxu0
        %v1896 = vadd.f32 0.0, %v1895
        %v1897 = vpop.f32.mrb[0].mxu0
        %v1898 = vpop.f32.mrb[0].mxu0
        %v1899 = vadd.f32 0.0, %v1898
        %v1900 = vpop.f32.mrb[0].mxu0
        %1901 = vmatprep.mubr.bf16.mxu0 0
        %1902 = vmatmul.mubr.bf16.gmra.mrb[0].mxu0 %v1349
        %v1903 = vpop.f32.mrb[0].mxu0
        %v1904 = vadd.f32 0.0, %v1903
        %v1905 = vpop.f32.mrb[0].mxu0
        %v1906 = vpop.f32.mrb[0].mxu0
        %v1907 = vadd.f32 0.0, %v1906
        %v1908 = vpop.f32.mrb[0].mxu0
        %1909 = vmatprep.mubr.bf16.mxu0 0
        %1910 = vmatmul.mubr.bf16.gmra.mrb[0].mxu0 %v1350
        %v1911 = vpop.f32.mrb[0].mxu0
        %v1912 = vadd.f32 0.0, %v1911
        %v1913 = vpop.f32.mrb[0].mxu0
        %v1914 = vpop.f32.mrb[0].mxu0
        %v1915 = vadd.f32 0.0, %v1914
        %v1916 = vpop.f32.mrb[0].mxu0
        %1917 = vmatprep.mubr.bf16.mxu0 0
        %1918 = vmatmul.mubr.bf16.gmra.mrb[0].mxu0 %v1351
        %v1919 = vpop.f32.mrb[0].mxu0
        %v1920 = vadd.f32 0.0, %v1919
        %v1921 = vpop.f32.mrb[0].mxu0
        %v1922 = vpop.f32.mrb[0].mxu0
        %v1923 = vadd.f32 0.0, %v1922
        %v1924 = vpop.f32.mrb[0].mxu0
        %1925 = vmatprep.mubr.bf16.mxu0 0
        %1926 = vmatmul.mubr.bf16.gmra.mrb[0].mxu0 %v1352
        %v1927 = vpop.f32.mrb[0].mxu0
        %v1928 = vadd.f32 0.0, %v1927
        %v1929 = vpop.f32.mrb[0].mxu0
        %v1930 = vpop.f32.mrb[0].mxu0
        %v1931 = vadd.f32 0.0, %v1930
        %v1932 = vpop.f32.mrb[0].mxu0
        %1933 = vmatprep.mubr.bf16.mxu0 0
        %1934 = vmatmul.mubr.bf16.gmra.mrb[0].mxu0 %v1353
        %v1935 = vpop.f32.mrb[0].mxu0
        %v1936 = vadd.f32 0.0, %v1935
        %v1937 = vpop.f32.mrb[0].mxu0
        %v1938 = vpop.f32.mrb[0].mxu0
        %v1939 = vadd.f32 0.0, %v1938
        %v1940 = vpop.f32.mrb[0].mxu0
        %1941 = vmatprep.mubr.bf16.mxu0 0
        %1942 = vmatmul.mubr.bf16.gmra.mrb[0].mxu0 %v1354
        %v1943 = vpop.f32.mrb[0].mxu0
        %v1944 = vadd.f32 0.0, %v1943
        %v1945 = vpop.f32.mrb[0].mxu0
        %v1946 = vpop.f32.mrb[0].mxu0
        %v1947 = vadd.f32 0.0, %v1946
        %v1948 = vpop.f32.mrb[0].mxu0
        %1949 = vmatprep.mubr.bf16.mxu0 0
        %1950 = vmatmul.mubr.bf16.gmra.mrb[0].mxu0 %v1355
        %v1951 = vpop.f32.mrb[0].mxu0
        %v1952 = vadd.f32 0.0, %v1951
        %v1953 = vpop.f32.mrb[0].mxu0
        %v1954 = vpop.f32.mrb[0].mxu0
        %v1955 = vadd.f32 0.0, %v1954
        %v1956 = vpop.f32.mrb[0].mxu0
        %1957 = vmatprep.mubr.bf16.mxu0 0
        %1958 = vmatmul.mubr.bf16.gmra.mrb[0].mxu0 %v1356
        %v1959 = vpop.f32.mrb[0].mxu0
        %v1960 = vadd.f32 0.0, %v1959
        %v1961 = vpop.f32.mrb[0].mxu0
        %v1962 = vpop.f32.mrb[0].mxu0
        %v1963 = vadd.f32 0.0, %v1962
        %v1964 = vpop.f32.mrb[0].mxu0
        %1965 = vdwg.mxu0
        %s1966 = smul.u32 %s27, 2
        %s1967 = sadd.s32 %s1966, %s28
        %s1968 = smul.u32 %s1967, 128
        %v1969 = vlaneseq
        %v1970 = vand.u32 %v1969, 127
        %v1971 = vstv %s1968
        %v1972 = vadd.s32 %v1971, %v1970
        %vm1973 = vcmp.lt.s32.totalorder %v1972, 500
        %v1974 = vsel %vm1973, 1, 0
        %vm1975 = vcmp.eq.s32.totalorder %v1974, 1
        %v1976 = vsel %vm1975, %v1456, -inf
        %v1977 = vsel %vm1975, %v1459, -inf
        %v1978 = vsel %vm1975, %v1464, -inf
        %v1979 = vsel %vm1975, %v1467, -inf
        %v1980 = vsel %vm1975, %v1472, -inf
        %v1981 = vsel %vm1975, %v1475, -inf
        %v1982 = vsel %vm1975, %v1480, -inf
        %v1983 = vsel %vm1975, %v1483, -inf
        %v1984 = vsel %vm1975, %v1488, -inf
        %v1985 = vsel %vm1975, %v1491, -inf
        %v1986 = vsel %vm1975, %v1496, -inf
        %v1987 = vsel %vm1975, %v1499, -inf
        %v1988 = vsel %vm1975, %v1504, -inf
        %v1989 = vsel %vm1975, %v1507, -inf
        %v1990 = vsel %vm1975, %v1512, -inf
        %v1991 = vsel %vm1975, %v1515, -inf
        %v1992 = vsel %vm1975, %v1520, -inf
        %v1993 = vsel %vm1975, %v1523, -inf
        %v1994 = vsel %vm1975, %v1528, -inf
        %v1995 = vsel %vm1975, %v1531, -inf
        %v1996 = vsel %vm1975, %v1536, -inf
        %v1997 = vsel %vm1975, %v1539, -inf
        %v1998 = vsel %vm1975, %v1544, -inf
        %v1999 = vsel %vm1975, %v1547, -inf
        %v2000 = vsel %vm1975, %v1552, -inf
        %v2001 = vsel %vm1975, %v1555, -inf
        %v2002 = vsel %vm1975, %v1560, -inf
        %v2003 = vsel %vm1975, %v1563, -inf
        %v2004 = vsel %vm1975, %v1568, -inf
        %v2005 = vsel %vm1975, %v1571, -inf
        %v2006 = vsel %vm1975, %v1576, -inf
        %v2007 = vsel %vm1975, %v1579, -inf
        %v2008 = vsel %vm1975, %v1584, -inf
        %v2009 = vsel %vm1975, %v1587, -inf
        %v2010 = vsel %vm1975, %v1592, -inf
        %v2011 = vsel %vm1975, %v1595, -inf
        %v2012 = vsel %vm1975, %v1600, -inf
        %v2013 = vsel %vm1975, %v1603, -inf
        %v2014 = vsel %vm1975, %v1608, -inf
        %v2015 = vsel %vm1975, %v1611, -inf
        %v2016 = vsel %vm1975, %v1616, -inf
        %v2017 = vsel %vm1975, %v1619, -inf
        %v2018 = vsel %vm1975, %v1624, -inf
        %v2019 = vsel %vm1975, %v1627, -inf
        %v2020 = vsel %vm1975, %v1632, -inf
        %v2021 = vsel %vm1975, %v1635, -inf
        %v2022 = vsel %vm1975, %v1640, -inf
        %v2023 = vsel %vm1975, %v1643, -inf
        %v2024 = vsel %vm1975, %v1648, -inf
        %v2025 = vsel %vm1975, %v1651, -inf
        %v2026 = vsel %vm1975, %v1656, -inf
        %v2027 = vsel %vm1975, %v1659, -inf
        %v2028 = vsel %vm1975, %v1664, -inf
        %v2029 = vsel %vm1975, %v1667, -inf
        %v2030 = vsel %vm1975, %v1672, -inf
        %v2031 = vsel %vm1975, %v1675, -inf
        %v2032 = vsel %vm1975, %v1680, -inf
        %v2033 = vsel %vm1975, %v1683, -inf
        %v2034 = vsel %vm1975, %v1688, -inf
        %v2035 = vsel %vm1975, %v1691, -inf
        %v2036 = vsel %vm1975, %v1696, -inf
        %v2037 = vsel %vm1975, %v1699, -inf
        %v2038 = vsel %vm1975, %v1704, -inf
        %v2039 = vsel %vm1975, %v1707, -inf
        %v2040 = vsel %vm1975, %v1712, -inf
        %v2041 = vsel %vm1975, %v1715, -inf
        %v2042 = vsel %vm1975, %v1720, -inf
        %v2043 = vsel %vm1975, %v1723, -inf
        %v2044 = vsel %vm1975, %v1728, -inf
        %v2045 = vsel %vm1975, %v1731, -inf
        %v2046 = vsel %vm1975, %v1736, -inf
        %v2047 = vsel %vm1975, %v1739, -inf
        %v2048 = vsel %vm1975, %v1744, -inf
        %v2049 = vsel %vm1975, %v1747, -inf
        %v2050 = vsel %vm1975, %v1752, -inf
        %v2051 = vsel %vm1975, %v1755, -inf
        %v2052 = vsel %vm1975, %v1760, -inf
        %v2053 = vsel %vm1975, %v1763, -inf
        %v2054 = vsel %vm1975, %v1768, -inf
        %v2055 = vsel %vm1975, %v1771, -inf
        %v2056 = vsel %vm1975, %v1776, -inf
        %v2057 = vsel %vm1975, %v1779, -inf
        %v2058 = vsel %vm1975, %v1784, -inf
        %v2059 = vsel %vm1975, %v1787, -inf
        %v2060 = vsel %vm1975, %v1792, -inf
        %v2061 = vsel %vm1975, %v1795, -inf
        %v2062 = vsel %vm1975, %v1800, -inf
        %v2063 = vsel %vm1975, %v1803, -inf
        %v2064 = vsel %vm1975, %v1808, -inf
        %v2065 = vsel %vm1975, %v1811, -inf
        %v2066 = vsel %vm1975, %v1816, -inf
        %v2067 = vsel %vm1975, %v1819, -inf
        %v2068 = vsel %vm1975, %v1824, -inf
        %v2069 = vsel %vm1975, %v1827, -inf
        %v2070 = vsel %vm1975, %v1832, -inf
        %v2071 = vsel %vm1975, %v1835, -inf
        %v2072 = vsel %vm1975, %v1840, -inf
        %v2073 = vsel %vm1975, %v1843, -inf
        %v2074 = vsel %vm1975, %v1848, -inf
        %v2075 = vsel %vm1975, %v1851, -inf
        %v2076 = vsel %vm1975, %v1856, -inf
        %v2077 = vsel %vm1975, %v1859, -inf
        %v2078 = vsel %vm1975, %v1864, -inf
        %v2079 = vsel %vm1975, %v1867, -inf
        %v2080 = vsel %vm1975, %v1872, -inf
        %v2081 = vsel %vm1975, %v1875, -inf
        %v2082 = vsel %vm1975, %v1880, -inf
        %v2083 = vsel %vm1975, %v1883, -inf
        %v2084 = vsel %vm1975, %v1888, -inf
        %v2085 = vsel %vm1975, %v1891, -inf
        %v2086 = vsel %vm1975, %v1896, -inf
        %v2087 = vsel %vm1975, %v1899, -inf
        %v2088 = vsel %vm1975, %v1904, -inf
        %v2089 = vsel %vm1975, %v1907, -inf
        %v2090 = vsel %vm1975, %v1912, -inf
        %v2091 = vsel %vm1975, %v1915, -inf
        %v2092 = vsel %vm1975, %v1920, -inf
        %v2093 = vsel %vm1975, %v1923, -inf
        %v2094 = vsel %vm1975, %v1928, -inf
        %v2095 = vsel %vm1975, %v1931, -inf
        %v2096 = vsel %vm1975, %v1936, -inf
        %v2097 = vsel %vm1975, %v1939, -inf
        %v2098 = vsel %vm1975, %v1944, -inf
        %v2099 = vsel %vm1975, %v1947, -inf
        %v2100 = vsel %vm1975, %v1952, -inf
        %v2101 = vsel %vm1975, %v1955, -inf
        %v2102 = vsel %vm1975, %v1960, -inf
        %v2103 = vsel %vm1975, %v1963, -inf
        %p2104 = scmp.eq.s32.totalorder %s28, 0
        // Predicated region
        $region53: #{tpu_custom_call.1} parent=43 // pred_check
          %p2105 = pneg %p2104
        $region54: #{tpu_custom_call.1} parent=43 // pred_check_branch
          %2107 = sbr.rel (%p2105) target = $region56
        $region55: #{tpu_custom_call.1} parent=43 // pred_region
          %vm2108 = vcmask 7168
          %2109 = vst.msk [vmem:[%s324] sm:$0xff] %vm2108, -inf
          %2110 = vst.msk [vmem:[%s324 + $0x8] sm:$0xff] %vm2108, -inf
          %2111 = vst.msk [vmem:[%s324 + $0x10] sm:$0xff] %vm2108, -inf
          %2112 = vst.msk [vmem:[%s324 + $0x18] sm:$0xff] %vm2108, -inf
          %2113 = vst.msk [vmem:[%s324 + $0x20] sm:$0xff] %vm2108, -inf
          %2114 = vst.msk [vmem:[%s324 + $0x28] sm:$0xff] %vm2108, -inf
          %2115 = vst.msk [vmem:[%s324 + $0x30] sm:$0xff] %vm2108, -inf
          %2116 = vst.msk [vmem:[%s324 + $0x38] sm:$0xff] %vm2108, -inf
          %2117 = vst.msk [vmem:[%s324 + $0x40] sm:$0xff] %vm2108, -inf
          %2118 = vst.msk [vmem:[%s324 + $0x48] sm:$0xff] %vm2108, -inf
          %2119 = vst.msk [vmem:[%s324 + $0x50] sm:$0xff] %vm2108, -inf
          %2120 = vst.msk [vmem:[%s324 + $0x58] sm:$0xff] %vm2108, -inf
          %2121 = vst.msk [vmem:[%s324 + $0x60] sm:$0xff] %vm2108, -inf
          %2122 = vst.msk [vmem:[%s324 + $0x68] sm:$0xff] %vm2108, -inf
          %2123 = vst.msk [vmem:[%s324 + $0x70] sm:$0xff] %vm2108, -inf
          %2124 = vst.msk [vmem:[%s324 + $0x78] sm:$0xff] %vm2108, -inf
          %2125 = vst.msk [vmem:[%s324 + $0x80] sm:$0xff] %vm2108, -inf
          %2126 = vst.msk [vmem:[%s324 + $0x88] sm:$0xff] %vm2108, -inf
          %2127 = vst.msk [vmem:[%s324 + $0x90] sm:$0xff] %vm2108, -inf
          %2128 = vst.msk [vmem:[%s324 + $0x98] sm:$0xff] %vm2108, -inf
          %2129 = vst.msk [vmem:[%s324 + $0xa0] sm:$0xff] %vm2108, -inf
          %2130 = vst.msk [vmem:[%s324 + $0xa8] sm:$0xff] %vm2108, -inf
          %2131 = vst.msk [vmem:[%s324 + $0xb0] sm:$0xff] %vm2108, -inf
          %2132 = vst.msk [vmem:[%s324 + $0xb8] sm:$0xff] %vm2108, -inf
          %2133 = vst.msk [vmem:[%s324 + $0xc0] sm:$0xff] %vm2108, -inf
          %2134 = vst.msk [vmem:[%s324 + $0xc8] sm:$0xff] %vm2108, -inf
          %2135 = vst.msk [vmem:[%s324 + $0xd0] sm:$0xff] %vm2108, -inf
          %2136 = vst.msk [vmem:[%s324 + $0xd8] sm:$0xff] %vm2108, -inf
          %2137 = vst.msk [vmem:[%s324 + $0xe0] sm:$0xff] %vm2108, -inf
          %2138 = vst.msk [vmem:[%s324 + $0xe8] sm:$0xff] %vm2108, -inf
          %2139 = vst.msk [vmem:[%s324 + $0xf0] sm:$0xff] %vm2108, -inf
          %2140 = vst.msk [vmem:[%s324 + $0xf8] sm:$0xff] %vm2108, -inf
          %2141 = vst.msk [vmem:[%s324 + $0x100] sm:$0xff] %vm2108, -inf
          %2142 = vst.msk [vmem:[%s324 + $0x108] sm:$0xff] %vm2108, -inf
          %2143 = vst.msk [vmem:[%s324 + $0x110] sm:$0xff] %vm2108, -inf
          %2144 = vst.msk [vmem:[%s324 + $0x118] sm:$0xff] %vm2108, -inf
          %2145 = vst.msk [vmem:[%s324 + $0x120] sm:$0xff] %vm2108, -inf
          %2146 = vst.msk [vmem:[%s324 + $0x128] sm:$0xff] %vm2108, -inf
          %2147 = vst.msk [vmem:[%s324 + $0x130] sm:$0xff] %vm2108, -inf
          %2148 = vst.msk [vmem:[%s324 + $0x138] sm:$0xff] %vm2108, -inf
          %2149 = vst.msk [vmem:[%s324 + $0x140] sm:$0xff] %vm2108, -inf
          %2150 = vst.msk [vmem:[%s324 + $0x148] sm:$0xff] %vm2108, -inf
          %2151 = vst.msk [vmem:[%s324 + $0x150] sm:$0xff] %vm2108, -inf
          %2152 = vst.msk [vmem:[%s324 + $0x158] sm:$0xff] %vm2108, -inf
          %2153 = vst.msk [vmem:[%s324 + $0x160] sm:$0xff] %vm2108, -inf
          %2154 = vst.msk [vmem:[%s324 + $0x168] sm:$0xff] %vm2108, -inf
          %2155 = vst.msk [vmem:[%s324 + $0x170] sm:$0xff] %vm2108, -inf
          %2156 = vst.msk [vmem:[%s324 + $0x178] sm:$0xff] %vm2108, -inf
          %2157 = vst.msk [vmem:[%s324 + $0x180] sm:$0xff] %vm2108, -inf
          %2158 = vst.msk [vmem:[%s324 + $0x188] sm:$0xff] %vm2108, -inf
          %2159 = vst.msk [vmem:[%s324 + $0x190] sm:$0xff] %vm2108, -inf
          %2160 = vst.msk [vmem:[%s324 + $0x198] sm:$0xff] %vm2108, -inf
          %2161 = vst.msk [vmem:[%s324 + $0x1a0] sm:$0xff] %vm2108, -inf
          %2162 = vst.msk [vmem:[%s324 + $0x1a8] sm:$0xff] %vm2108, -inf
          %2163 = vst.msk [vmem:[%s324 + $0x1b0] sm:$0xff] %vm2108, -inf
          %2164 = vst.msk [vmem:[%s324 + $0x1b8] sm:$0xff] %vm2108, -inf
          %2165 = vst.msk [vmem:[%s324 + $0x1c0] sm:$0xff] %vm2108, -inf
          %2166 = vst.msk [vmem:[%s324 + $0x1c8] sm:$0xff] %vm2108, -inf
          %2167 = vst.msk [vmem:[%s324 + $0x1d0] sm:$0xff] %vm2108, -inf
          %2168 = vst.msk [vmem:[%s324 + $0x1d8] sm:$0xff] %vm2108, -inf
          %2169 = vst.msk [vmem:[%s324 + $0x1e0] sm:$0xff] %vm2108, -inf
          %2170 = vst.msk [vmem:[%s324 + $0x1e8] sm:$0xff] %vm2108, -inf
          %2171 = vst.msk [vmem:[%s324 + $0x1f0] sm:$0xff] %vm2108, -inf
          %2172 = vst.msk [vmem:[%s324 + $0x1f8] sm:$0xff] %vm2108, -inf
          %2173 = vst.msk [vmem:[%s324 + $0x200] sm:$0xff] %vm2108, -inf
          %2174 = vst.msk [vmem:[%s324 + $0x208] sm:$0xff] %vm2108, -inf
          %2175 = vst.msk [vmem:[%s324 + $0x210] sm:$0xff] %vm2108, -inf
          %2176 = vst.msk [vmem:[%s324 + $0x218] sm:$0xff] %vm2108, -inf
          %2177 = vst.msk [vmem:[%s324 + $0x220] sm:$0xff] %vm2108, -inf
          %2178 = vst.msk [vmem:[%s324 + $0x228] sm:$0xff] %vm2108, -inf
          %2179 = vst.msk [vmem:[%s324 + $0x230] sm:$0xff] %vm2108, -inf
          %2180 = vst.msk [vmem:[%s324 + $0x238] sm:$0xff] %vm2108, -inf
          %2181 = vst.msk [vmem:[%s324 + $0x240] sm:$0xff] %vm2108, -inf
          %2182 = vst.msk [vmem:[%s324 + $0x248] sm:$0xff] %vm2108, -inf
          %2183 = vst.msk [vmem:[%s324 + $0x250] sm:$0xff] %vm2108, -inf
          %2184 = vst.msk [vmem:[%s324 + $0x258] sm:$0xff] %vm2108, -inf
          %2185 = vst.msk [vmem:[%s324 + $0x260] sm:$0xff] %vm2108, -inf
          %2186 = vst.msk [vmem:[%s324 + $0x268] sm:$0xff] %vm2108, -inf
          %2187 = vst.msk [vmem:[%s324 + $0x270] sm:$0xff] %vm2108, -inf
          %2188 = vst.msk [vmem:[%s324 + $0x278] sm:$0xff] %vm2108, -inf
          %2189 = vst.msk [vmem:[%s324 + $0x280] sm:$0xff] %vm2108, -inf
          %2190 = vst.msk [vmem:[%s324 + $0x288] sm:$0xff] %vm2108, -inf
          %2191 = vst.msk [vmem:[%s324 + $0x290] sm:$0xff] %vm2108, -inf
          %2192 = vst.msk [vmem:[%s324 + $0x298] sm:$0xff] %vm2108, -inf
          %2193 = vst.msk [vmem:[%s324 + $0x2a0] sm:$0xff] %vm2108, -inf
          %2194 = vst.msk [vmem:[%s324 + $0x2a8] sm:$0xff] %vm2108, -inf
          %2195 = vst.msk [vmem:[%s324 + $0x2b0] sm:$0xff] %vm2108, -inf
          %2196 = vst.msk [vmem:[%s324 + $0x2b8] sm:$0xff] %vm2108, -inf
          %2197 = vst.msk [vmem:[%s324 + $0x2c0] sm:$0xff] %vm2108, -inf
          %2198 = vst.msk [vmem:[%s324 + $0x2c8] sm:$0xff] %vm2108, -inf
          %2199 = vst.msk [vmem:[%s324 + $0x2d0] sm:$0xff] %vm2108, -inf
          %2200 = vst.msk [vmem:[%s324 + $0x2d8] sm:$0xff] %vm2108, -inf
          %2201 = vst.msk [vmem:[%s324 + $0x2e0] sm:$0xff] %vm2108, -inf
          %2202 = vst.msk [vmem:[%s324 + $0x2e8] sm:$0xff] %vm2108, -inf
          %2203 = vst.msk [vmem:[%s324 + $0x2f0] sm:$0xff] %vm2108, -inf
          %2204 = vst.msk [vmem:[%s324 + $0x2f8] sm:$0xff] %vm2108, -inf
          %2205 = vst.msk [vmem:[%s324 + $0x300] sm:$0xff] %vm2108, -inf
          %2206 = vst.msk [vmem:[%s324 + $0x308] sm:$0xff] %vm2108, -inf
          %2207 = vst.msk [vmem:[%s324 + $0x310] sm:$0xff] %vm2108, -inf
          %2208 = vst.msk [vmem:[%s324 + $0x318] sm:$0xff] %vm2108, -inf
          %2209 = vst.msk [vmem:[%s324 + $0x320] sm:$0xff] %vm2108, -inf
          %2210 = vst.msk [vmem:[%s324 + $0x328] sm:$0xff] %vm2108, -inf
          %2211 = vst.msk [vmem:[%s324 + $0x330] sm:$0xff] %vm2108, -inf
          %2212 = vst.msk [vmem:[%s324 + $0x338] sm:$0xff] %vm2108, -inf
          %2213 = vst.msk [vmem:[%s324 + $0x340] sm:$0xff] %vm2108, -inf
          %2214 = vst.msk [vmem:[%s324 + $0x348] sm:$0xff] %vm2108, -inf
          %2215 = vst.msk [vmem:[%s324 + $0x350] sm:$0xff] %vm2108, -inf
          %2216 = vst.msk [vmem:[%s324 + $0x358] sm:$0xff] %vm2108, -inf
          %2217 = vst.msk [vmem:[%s324 + $0x360] sm:$0xff] %vm2108, -inf
          %2218 = vst.msk [vmem:[%s324 + $0x368] sm:$0xff] %vm2108, -inf
          %2219 = vst.msk [vmem:[%s324 + $0x370] sm:$0xff] %vm2108, -inf
          %2220 = vst.msk [vmem:[%s324 + $0x378] sm:$0xff] %vm2108, -inf
          %2221 = vst.msk [vmem:[%s324 + $0x380] sm:$0xff] %vm2108, -inf
          %2222 = vst.msk [vmem:[%s324 + $0x388] sm:$0xff] %vm2108, -inf
          %2223 = vst.msk [vmem:[%s324 + $0x390] sm:$0xff] %vm2108, -inf
          %2224 = vst.msk [vmem:[%s324 + $0x398] sm:$0xff] %vm2108, -inf
          %2225 = vst.msk [vmem:[%s324 + $0x3a0] sm:$0xff] %vm2108, -inf
          %2226 = vst.msk [vmem:[%s324 + $0x3a8] sm:$0xff] %vm2108, -inf
          %2227 = vst.msk [vmem:[%s324 + $0x3b0] sm:$0xff] %vm2108, -inf
          %2228 = vst.msk [vmem:[%s324 + $0x3b8] sm:$0xff] %vm2108, -inf
          %2229 = vst.msk [vmem:[%s324 + $0x3c0] sm:$0xff] %vm2108, -inf
          %2230 = vst.msk [vmem:[%s324 + $0x3c8] sm:$0xff] %vm2108, -inf
          %2231 = vst.msk [vmem:[%s324 + $0x3d0] sm:$0xff] %vm2108, -inf
          %2232 = vst.msk [vmem:[%s324 + $0x3d8] sm:$0xff] %vm2108, -inf
          %2233 = vst.msk [vmem:[%s324 + $0x3e0] sm:$0xff] %vm2108, -inf
          %2234 = vst.msk [vmem:[%s324 + $0x3e8] sm:$0xff] %vm2108, -inf
          %2235 = vst.msk [vmem:[%s324 + $0x3f0] sm:$0xff] %vm2108, -inf
          %2236 = vst.msk [vmem:[%s324 + $0x3f8] sm:$0xff] %vm2108, -inf
        $region56: #{tpu_custom_call.1} parent=43 // pred_fallthru
          _
        %v2237 = vld [vmem:[%s324] sm:$0xff]
        %v2238 = vld [vmem:[%s324 + $0x8] sm:$0xff]
        %v2239 = vld [vmem:[%s324 + $0x10] sm:$0xff]
        %v2240 = vld [vmem:[%s324 + $0x18] sm:$0xff]
        %v2241 = vld [vmem:[%s324 + $0x20] sm:$0xff]
        %v2242 = vld [vmem:[%s324 + $0x28] sm:$0xff]
        %v2243 = vld [vmem:[%s324 + $0x30] sm:$0xff]
        %v2244 = vld [vmem:[%s324 + $0x38] sm:$0xff]
        %v2245 = vld [vmem:[%s324 + $0x40] sm:$0xff]
        %v2246 = vld [vmem:[%s324 + $0x48] sm:$0xff]
        %v2247 = vld [vmem:[%s324 + $0x50] sm:$0xff]
        %v2248 = vld [vmem:[%s324 + $0x58] sm:$0xff]
        %v2249 = vld [vmem:[%s324 + $0x60] sm:$0xff]
        %v2250 = vld [vmem:[%s324 + $0x68] sm:$0xff]
        %v2251 = vld [vmem:[%s324 + $0x70] sm:$0xff]
        %v2252 = vld [vmem:[%s324 + $0x78] sm:$0xff]
        %v2253 = vld [vmem:[%s324 + $0x80] sm:$0xff]
        %v2254 = vld [vmem:[%s324 + $0x88] sm:$0xff]
        %v2255 = vld [vmem:[%s324 + $0x90] sm:$0xff]
        %v2256 = vld [vmem:[%s324 + $0x98] sm:$0xff]
        %v2257 = vld [vmem:[%s324 + $0xa0] sm:$0xff]
        %v2258 = vld [vmem:[%s324 + $0xa8] sm:$0xff]
        %v2259 = vld [vmem:[%s324 + $0xb0] sm:$0xff]
        %v2260 = vld [vmem:[%s324 + $0xb8] sm:$0xff]
        %v2261 = vld [vmem:[%s324 + $0xc0] sm:$0xff]
        %v2262 = vld [vmem:[%s324 + $0xc8] sm:$0xff]
        %v2263 = vld [vmem:[%s324 + $0xd0] sm:$0xff]
        %v2264 = vld [vmem:[%s324 + $0xd8] sm:$0xff]
        %v2265 = vld [vmem:[%s324 + $0xe0] sm:$0xff]
        %v2266 = vld [vmem:[%s324 + $0xe8] sm:$0xff]
        %v2267 = vld [vmem:[%s324 + $0xf0] sm:$0xff]
        %v2268 = vld [vmem:[%s324 + $0xf8] sm:$0xff]
        %v2269 = vld [vmem:[%s324 + $0x100] sm:$0xff]
        %v2270 = vld [vmem:[%s324 + $0x108] sm:$0xff]
        %v2271 = vld [vmem:[%s324 + $0x110] sm:$0xff]
        %v2272 = vld [vmem:[%s324 + $0x118] sm:$0xff]
        %v2273 = vld [vmem:[%s324 + $0x120] sm:$0xff]
        %v2274 = vld [vmem:[%s324 + $0x128] sm:$0xff]
        %v2275 = vld [vmem:[%s324 + $0x130] sm:$0xff]
        %v2276 = vld [vmem:[%s324 + $0x138] sm:$0xff]
        %v2277 = vld [vmem:[%s324 + $0x140] sm:$0xff]
        %v2278 = vld [vmem:[%s324 + $0x148] sm:$0xff]
        %v2279 = vld [vmem:[%s324 + $0x150] sm:$0xff]
        %v2280 = vld [vmem:[%s324 + $0x158] sm:$0xff]
        %v2281 = vld [vmem:[%s324 + $0x160] sm:$0xff]
        %v2282 = vld [vmem:[%s324 + $0x168] sm:$0xff]
        %v2283 = vld [vmem:[%s324 + $0x170] sm:$0xff]
        %v2284 = vld [vmem:[%s324 + $0x178] sm:$0xff]
        %v2285 = vld [vmem:[%s324 + $0x180] sm:$0xff]
        %v2286 = vld [vmem:[%s324 + $0x188] sm:$0xff]
        %v2287 = vld [vmem:[%s324 + $0x190] sm:$0xff]
        %v2288 = vld [vmem:[%s324 + $0x198] sm:$0xff]
        %v2289 = vld [vmem:[%s324 + $0x1a0] sm:$0xff]
        %v2290 = vld [vmem:[%s324 + $0x1a8] sm:$0xff]
        %v2291 = vld [vmem:[%s324 + $0x1b0] sm:$0xff]
        %v2292 = vld [vmem:[%s324 + $0x1b8] sm:$0xff]
        %v2293 = vld [vmem:[%s324 + $0x1c0] sm:$0xff]
        %v2294 = vld [vmem:[%s324 + $0x1c8] sm:$0xff]
        %v2295 = vld [vmem:[%s324 + $0x1d0] sm:$0xff]
        %v2296 = vld [vmem:[%s324 + $0x1d8] sm:$0xff]
        %v2297 = vld [vmem:[%s324 + $0x1e0] sm:$0xff]
        %v2298 = vld [vmem:[%s324 + $0x1e8] sm:$0xff]
        %v2299 = vld [vmem:[%s324 + $0x1f0] sm:$0xff]
        %v2300 = vld [vmem:[%s324 + $0x1f8] sm:$0xff]
        %v2301 = vld [vmem:[%s324 + $0x200] sm:$0xff]
        %v2302 = vld [vmem:[%s324 + $0x208] sm:$0xff]
        %v2303 = vld [vmem:[%s324 + $0x210] sm:$0xff]
        %v2304 = vld [vmem:[%s324 + $0x218] sm:$0xff]
        %v2305 = vld [vmem:[%s324 + $0x220] sm:$0xff]
        %v2306 = vld [vmem:[%s324 + $0x228] sm:$0xff]
        %v2307 = vld [vmem:[%s324 + $0x230] sm:$0xff]
        %v2308 = vld [vmem:[%s324 + $0x238] sm:$0xff]
        %v2309 = vld [vmem:[%s324 + $0x240] sm:$0xff]
        %v2310 = vld [vmem:[%s324 + $0x248] sm:$0xff]
        %v2311 = vld [vmem:[%s324 + $0x250] sm:$0xff]
        %v2312 = vld [vmem:[%s324 + $0x258] sm:$0xff]
        %v2313 = vld [vmem:[%s324 + $0x260] sm:$0xff]
        %v2314 = vld [vmem:[%s324 + $0x268] sm:$0xff]
        %v2315 = vld [vmem:[%s324 + $0x270] sm:$0xff]
        %v2316 = vld [vmem:[%s324 + $0x278] sm:$0xff]
        %v2317 = vld [vmem:[%s324 + $0x280] sm:$0xff]
        %v2318 = vld [vmem:[%s324 + $0x288] sm:$0xff]
        %v2319 = vld [vmem:[%s324 + $0x290] sm:$0xff]
        %v2320 = vld [vmem:[%s324 + $0x298] sm:$0xff]
        %v2321 = vld [vmem:[%s324 + $0x2a0] sm:$0xff]
        %v2322 = vld [vmem:[%s324 + $0x2a8] sm:$0xff]
        %v2323 = vld [vmem:[%s324 + $0x2b0] sm:$0xff]
        %v2324 = vld [vmem:[%s324 + $0x2b8] sm:$0xff]
        %v2325 = vld [vmem:[%s324 + $0x2c0] sm:$0xff]
        %v2326 = vld [vmem:[%s324 + $0x2c8] sm:$0xff]
        %v2327 = vld [vmem:[%s324 + $0x2d0] sm:$0xff]
        %v2328 = vld [vmem:[%s324 + $0x2d8] sm:$0xff]
        %v2329 = vld [vmem:[%s324 + $0x2e0] sm:$0xff]
        %v2330 = vld [vmem:[%s324 + $0x2e8] sm:$0xff]
        %v2331 = vld [vmem:[%s324 + $0x2f0] sm:$0xff]
        %v2332 = vld [vmem:[%s324 + $0x2f8] sm:$0xff]
        %v2333 = vld [vmem:[%s324 + $0x300] sm:$0xff]
        %v2334 = vld [vmem:[%s324 + $0x308] sm:$0xff]
        %v2335 = vld [vmem:[%s324 + $0x310] sm:$0xff]
        %v2336 = vld [vmem:[%s324 + $0x318] sm:$0xff]
        %v2337 = vld [vmem:[%s324 + $0x320] sm:$0xff]
        %v2338 = vld [vmem:[%s324 + $0x328] sm:$0xff]
        %v2339 = vld [vmem:[%s324 + $0x330] sm:$0xff]
        %v2340 = vld [vmem:[%s324 + $0x338] sm:$0xff]
        %v2341 = vld [vmem:[%s324 + $0x340] sm:$0xff]
        %v2342 = vld [vmem:[%s324 + $0x348] sm:$0xff]
        %v2343 = vld [vmem:[%s324 + $0x350] sm:$0xff]
        %v2344 = vld [vmem:[%s324 + $0x358] sm:$0xff]
        %v2345 = vld [vmem:[%s324 + $0x360] sm:$0xff]
        %v2346 = vld [vmem:[%s324 + $0x368] sm:$0xff]
        %v2347 = vld [vmem:[%s324 + $0x370] sm:$0xff]
        %v2348 = vld [vmem:[%s324 + $0x378] sm:$0xff]
        %v2349 = vld [vmem:[%s324 + $0x380] sm:$0xff]
        %v2350 = vld [vmem:[%s324 + $0x388] sm:$0xff]
        %v2351 = vld [vmem:[%s324 + $0x390] sm:$0xff]
        %v2352 = vld [vmem:[%s324 + $0x398] sm:$0xff]
        %v2353 = vld [vmem:[%s324 + $0x3a0] sm:$0xff]
        %v2354 = vld [vmem:[%s324 + $0x3a8] sm:$0xff]
        %v2355 = vld [vmem:[%s324 + $0x3b0] sm:$0xff]
        %v2356 = vld [vmem:[%s324 + $0x3b8] sm:$0xff]
        %v2357 = vld [vmem:[%s324 + $0x3c0] sm:$0xff]
        %v2358 = vld [vmem:[%s324 + $0x3c8] sm:$0xff]
        %v2359 = vld [vmem:[%s324 + $0x3d0] sm:$0xff]
        %v2360 = vld [vmem:[%s324 + $0x3d8] sm:$0xff]
        %v2361 = vld [vmem:[%s324 + $0x3e0] sm:$0xff]
        %v2362 = vld [vmem:[%s324 + $0x3e8] sm:$0xff]
        %v2363 = vld [vmem:[%s324 + $0x3f0] sm:$0xff]
        %v2364 = vld [vmem:[%s324 + $0x3f8] sm:$0xff]
        %2365 = vmax.xlane.f32.xlu0 %v1976
        %v2366 = vpop.xlane.xlu0 %2365
        %2367 = vmax.xlane.f32.xlu0 %v1977
        %v2368 = vpop.xlane.xlu0 %2367
        %2369 = vmax.xlane.f32.xlu0 %v1978
        %v2370 = vpop.xlane.xlu0 %2369
        %2371 = vmax.xlane.f32.xlu0 %v1979
        %v2372 = vpop.xlane.xlu0 %2371
        %2373 = vmax.xlane.f32.xlu0 %v1980
        %v2374 = vpop.xlane.xlu0 %2373
        %2375 = vmax.xlane.f32.xlu0 %v1981
        %v2376 = vpop.xlane.xlu0 %2375
        %2377 = vmax.xlane.f32.xlu0 %v1982
        %v2378 = vpop.xlane.xlu0 %2377
        %2379 = vmax.xlane.f32.xlu0 %v1983
        %v2380 = vpop.xlane.xlu0 %2379
        %2381 = vmax.xlane.f32.xlu0 %v1984
        %v2382 = vpop.xlane.xlu0 %2381
        %2383 = vmax.xlane.f32.xlu0 %v1985
        %v2384 = vpop.xlane.xlu0 %2383
        %2385 = vmax.xlane.f32.xlu0 %v1986
        %v2386 = vpop.xlane.xlu0 %2385
        %2387 = vmax.xlane.f32.xlu0 %v1987
        %v2388 = vpop.xlane.xlu0 %2387
        %2389 = vmax.xlane.f32.xlu0 %v1988
        %v2390 = vpop.xlane.xlu0 %2389
        %2391 = vmax.xlane.f32.xlu0 %v1989
        %v2392 = vpop.xlane.xlu0 %2391
        %2393 = vmax.xlane.f32.xlu0 %v1990
        %v2394 = vpop.xlane.xlu0 %2393
        %2395 = vmax.xlane.f32.xlu0 %v1991
        %v2396 = vpop.xlane.xlu0 %2395
        %2397 = vmax.xlane.f32.xlu0 %v1992
        %v2398 = vpop.xlane.xlu0 %2397
        %2399 = vmax.xlane.f32.xlu0 %v1993
        %v2400 = vpop.xlane.xlu0 %2399
        %2401 = vmax.xlane.f32.xlu0 %v1994
        %v2402 = vpop.xlane.xlu0 %2401
        %2403 = vmax.xlane.f32.xlu0 %v1995
        %v2404 = vpop.xlane.xlu0 %2403
        %2405 = vmax.xlane.f32.xlu0 %v1996
        %v2406 = vpop.xlane.xlu0 %2405
        %2407 = vmax.xlane.f32.xlu0 %v1997
        %v2408 = vpop.xlane.xlu0 %2407
        %2409 = vmax.xlane.f32.xlu0 %v1998
        %v2410 = vpop.xlane.xlu0 %2409
        %2411 = vmax.xlane.f32.xlu0 %v1999
        %v2412 = vpop.xlane.xlu0 %2411
        %2413 = vmax.xlane.f32.xlu0 %v2000
        %v2414 = vpop.xlane.xlu0 %2413
        %2415 = vmax.xlane.f32.xlu0 %v2001
        %v2416 = vpop.xlane.xlu0 %2415
        %2417 = vmax.xlane.f32.xlu0 %v2002
        %v2418 = vpop.xlane.xlu0 %2417
        %2419 = vmax.xlane.f32.xlu0 %v2003
        %v2420 = vpop.xlane.xlu0 %2419
        %2421 = vmax.xlane.f32.xlu0 %v2004
        %v2422 = vpop.xlane.xlu0 %2421
        %2423 = vmax.xlane.f32.xlu0 %v2005
        %v2424 = vpop.xlane.xlu0 %2423
        %2425 = vmax.xlane.f32.xlu0 %v2006
        %v2426 = vpop.xlane.xlu0 %2425
        %2427 = vmax.xlane.f32.xlu0 %v2007
        %v2428 = vpop.xlane.xlu0 %2427
        %2429 = vmax.xlane.f32.xlu0 %v2008
        %v2430 = vpop.xlane.xlu0 %2429
        %2431 = vmax.xlane.f32.xlu0 %v2009
        %v2432 = vpop.xlane.xlu0 %2431
        %2433 = vmax.xlane.f32.xlu0 %v2010
        %v2434 = vpop.xlane.xlu0 %2433
        %2435 = vmax.xlane.f32.xlu0 %v2011
        %v2436 = vpop.xlane.xlu0 %2435
        %2437 = vmax.xlane.f32.xlu0 %v2012
        %v2438 = vpop.xlane.xlu0 %2437
        %2439 = vmax.xlane.f32.xlu0 %v2013
        %v2440 = vpop.xlane.xlu0 %2439
        %2441 = vmax.xlane.f32.xlu0 %v2014
        %v2442 = vpop.xlane.xlu0 %2441
        %2443 = vmax.xlane.f32.xlu0 %v2015
        %v2444 = vpop.xlane.xlu0 %2443
        %2445 = vmax.xlane.f32.xlu0 %v2016
        %v2446 = vpop.xlane.xlu0 %2445
        %2447 = vmax.xlane.f32.xlu0 %v2017
        %v2448 = vpop.xlane.xlu0 %2447
        %2449 = vmax.xlane.f32.xlu0 %v2018
        %v2450 = vpop.xlane.xlu0 %2449
        %2451 = vmax.xlane.f32.xlu0 %v2019
        %v2452 = vpop.xlane.xlu0 %2451
        %2453 = vmax.xlane.f32.xlu0 %v2020
        %v2454 = vpop.xlane.xlu0 %2453
        %2455 = vmax.xlane.f32.xlu0 %v2021
        %v2456 = vpop.xlane.xlu0 %2455
        %2457 = vmax.xlane.f32.xlu0 %v2022
        %v2458 = vpop.xlane.xlu0 %2457
        %2459 = vmax.xlane.f32.xlu0 %v2023
        %v2460 = vpop.xlane.xlu0 %2459
        %2461 = vmax.xlane.f32.xlu0 %v2024
        %v2462 = vpop.xlane.xlu0 %2461
        %2463 = vmax.xlane.f32.xlu0 %v2025
        %v2464 = vpop.xlane.xlu0 %2463
        %2465 = vmax.xlane.f32.xlu0 %v2026
        %v2466 = vpop.xlane.xlu0 %2465
        %2467 = vmax.xlane.f32.xlu0 %v2027
        %v2468 = vpop.xlane.xlu0 %2467
        %2469 = vmax.xlane.f32.xlu0 %v2028
        %v2470 = vpop.xlane.xlu0 %2469
        %2471 = vmax.xlane.f32.xlu0 %v2029
        %v2472 = vpop.xlane.xlu0 %2471
        %2473 = vmax.xlane.f32.xlu0 %v2030
        %v2474 = vpop.xlane.xlu0 %2473
        %2475 = vmax.xlane.f32.xlu0 %v2031
        %v2476 = vpop.xlane.xlu0 %2475
        %2477 = vmax.xlane.f32.xlu0 %v2032
        %v2478 = vpop.xlane.xlu0 %2477
        %2479 = vmax.xlane.f32.xlu0 %v2033
        %v2480 = vpop.xlane.xlu0 %2479
        %2481 = vmax.xlane.f32.xlu0 %v2034
        %v2482 = vpop.xlane.xlu0 %2481
        %2483 = vmax.xlane.f32.xlu0 %v2035
        %v2484 = vpop.xlane.xlu0 %2483
        %2485 = vmax.xlane.f32.xlu0 %v2036
        %v2486 = vpop.xlane.xlu0 %2485
        %2487 = vmax.xlane.f32.xlu0 %v2037
        %v2488 = vpop.xlane.xlu0 %2487
        %2489 = vmax.xlane.f32.xlu0 %v2038
        %v2490 = vpop.xlane.xlu0 %2489
        %2491 = vmax.xlane.f32.xlu0 %v2039
        %v2492 = vpop.xlane.xlu0 %2491
        %2493 = vmax.xlane.f32.xlu0 %v2040
        %v2494 = vpop.xlane.xlu0 %2493
        %2495 = vmax.xlane.f32.xlu0 %v2041
        %v2496 = vpop.xlane.xlu0 %2495
        %2497 = vmax.xlane.f32.xlu0 %v2042
        %v2498 = vpop.xlane.xlu0 %2497
        %2499 = vmax.xlane.f32.xlu0 %v2043
        %v2500 = vpop.xlane.xlu0 %2499
        %2501 = vmax.xlane.f32.xlu0 %v2044
        %v2502 = vpop.xlane.xlu0 %2501
        %2503 = vmax.xlane.f32.xlu0 %v2045
        %v2504 = vpop.xlane.xlu0 %2503
        %2505 = vmax.xlane.f32.xlu0 %v2046
        %v2506 = vpop.xlane.xlu0 %2505
        %2507 = vmax.xlane.f32.xlu0 %v2047
        %v2508 = vpop.xlane.xlu0 %2507
        %2509 = vmax.xlane.f32.xlu0 %v2048
        %v2510 = vpop.xlane.xlu0 %2509
        %2511 = vmax.xlane.f32.xlu0 %v2049
        %v2512 = vpop.xlane.xlu0 %2511
        %2513 = vmax.xlane.f32.xlu0 %v2050
        %v2514 = vpop.xlane.xlu0 %2513
        %2515 = vmax.xlane.f32.xlu0 %v2051
        %v2516 = vpop.xlane.xlu0 %2515
        %2517 = vmax.xlane.f32.xlu0 %v2052
        %v2518 = vpop.xlane.xlu0 %2517
        %2519 = vmax.xlane.f32.xlu0 %v2053
        %v2520 = vpop.xlane.xlu0 %2519
        %2521 = vmax.xlane.f32.xlu0 %v2054
        %v2522 = vpop.xlane.xlu0 %2521
        %2523 = vmax.xlane.f32.xlu0 %v2055
        %v2524 = vpop.xlane.xlu0 %2523
        %2525 = vmax.xlane.f32.xlu0 %v2056
        %v2526 = vpop.xlane.xlu0 %2525
        %2527 = vmax.xlane.f32.xlu0 %v2057
        %v2528 = vpop.xlane.xlu0 %2527
        %2529 = vmax.xlane.f32.xlu0 %v2058
        %v2530 = vpop.xlane.xlu0 %2529
        %2531 = vmax.xlane.f32.xlu0 %v2059
        %v2532 = vpop.xlane.xlu0 %2531
        %2533 = vmax.xlane.f32.xlu0 %v2060
        %v2534 = vpop.xlane.xlu0 %2533
        %2535 = vmax.xlane.f32.xlu0 %v2061
        %v2536 = vpop.xlane.xlu0 %2535
        %2537 = vmax.xlane.f32.xlu0 %v2062
        %v2538 = vpop.xlane.xlu0 %2537
        %2539 = vmax.xlane.f32.xlu0 %v2063
        %v2540 = vpop.xlane.xlu0 %2539
        %2541 = vmax.xlane.f32.xlu0 %v2064
        %v2542 = vpop.xlane.xlu0 %2541
        %2543 = vmax.xlane.f32.xlu0 %v2065
        %v2544 = vpop.xlane.xlu0 %2543
        %2545 = vmax.xlane.f32.xlu0 %v2066
        %v2546 = vpop.xlane.xlu0 %2545
        %2547 = vmax.xlane.f32.xlu0 %v2067
        %v2548 = vpop.xlane.xlu0 %2547
        %2549 = vmax.xlane.f32.xlu0 %v2068
        %v2550 = vpop.xlane.xlu0 %2549
        %2551 = vmax.xlane.f32.xlu0 %v2069
        %v2552 = vpop.xlane.xlu0 %2551
        %2553 = vmax.xlane.f32.xlu0 %v2070
        %v2554 = vpop.xlane.xlu0 %2553
        %2555 = vmax.xlane.f32.xlu0 %v2071
        %v2556 = vpop.xlane.xlu0 %2555
        %2557 = vmax.xlane.f32.xlu0 %v2072
        %v2558 = vpop.xlane.xlu0 %2557
        %2559 = vmax.xlane.f32.xlu0 %v2073
        %v2560 = vpop.xlane.xlu0 %2559
        %2561 = vmax.xlane.f32.xlu0 %v2074
        %v2562 = vpop.xlane.xlu0 %2561
        %2563 = vmax.xlane.f32.xlu0 %v2075
        %v2564 = vpop.xlane.xlu0 %2563
        %2565 = vmax.xlane.f32.xlu0 %v2076
        %v2566 = vpop.xlane.xlu0 %2565
        %2567 = vmax.xlane.f32.xlu0 %v2077
        %v2568 = vpop.xlane.xlu0 %2567
        %2569 = vmax.xlane.f32.xlu0 %v2078
        %v2570 = vpop.xlane.xlu0 %2569
        %2571 = vmax.xlane.f32.xlu0 %v2079
        %v2572 = vpop.xlane.xlu0 %2571
        %2573 = vmax.xlane.f32.xlu0 %v2080
        %v2574 = vpop.xlane.xlu0 %2573
        %2575 = vmax.xlane.f32.xlu0 %v2081
        %v2576 = vpop.xlane.xlu0 %2575
        %2577 = vmax.xlane.f32.xlu0 %v2082
        %v2578 = vpop.xlane.xlu0 %2577
        %2579 = vmax.xlane.f32.xlu0 %v2083
        %v2580 = vpop.xlane.xlu0 %2579
        %2581 = vmax.xlane.f32.xlu0 %v2084
        %v2582 = vpop.xlane.xlu0 %2581
        %2583 = vmax.xlane.f32.xlu0 %v2085
        %v2584 = vpop.xlane.xlu0 %2583
        %2585 = vmax.xlane.f32.xlu0 %v2086
        %v2586 = vpop.xlane.xlu0 %2585
        %2587 = vmax.xlane.f32.xlu0 %v2087
        %v2588 = vpop.xlane.xlu0 %2587
        %2589 = vmax.xlane.f32.xlu0 %v2088
        %v2590 = vpop.xlane.xlu0 %2589
        %2591 = vmax.xlane.f32.xlu0 %v2089
        %v2592 = vpop.xlane.xlu0 %2591
        %2593 = vmax.xlane.f32.xlu0 %v2090
        %v2594 = vpop.xlane.xlu0 %2593
        %2595 = vmax.xlane.f32.xlu0 %v2091
        %v2596 = vpop.xlane.xlu0 %2595
        %2597 = vmax.xlane.f32.xlu0 %v2092
        %v2598 = vpop.xlane.xlu0 %2597
        %2599 = vmax.xlane.f32.xlu0 %v2093
        %v2600 = vpop.xlane.xlu0 %2599
        %2601 = vmax.xlane.f32.xlu0 %v2094
        %v2602 = vpop.xlane.xlu0 %2601
        %2603 = vmax.xlane.f32.xlu0 %v2095
        %v2604 = vpop.xlane.xlu0 %2603
        %2605 = vmax.xlane.f32.xlu0 %v2096
        %v2606 = vpop.xlane.xlu0 %2605
        %2607 = vmax.xlane.f32.xlu0 %v2097
        %v2608 = vpop.xlane.xlu0 %2607
        %2609 = vmax.xlane.f32.xlu0 %v2098
        %v2610 = vpop.xlane.xlu0 %2609
        %2611 = vmax.xlane.f32.xlu0 %v2099
        %v2612 = vpop.xlane.xlu0 %2611
        %2613 = vmax.xlane.f32.xlu0 %v2100
        %v2614 = vpop.xlane.xlu0 %2613
        %2615 = vmax.xlane.f32.xlu0 %v2101
        %v2616 = vpop.xlane.xlu0 %2615
        %2617 = vmax.xlane.f32.xlu0 %v2102
        %v2618 = vpop.xlane.xlu0 %2617
        %2619 = vmax.xlane.f32.xlu0 %v2103
        %v2620 = vpop.xlane.xlu0 %2619
        %v2621 = vmax.f32 %v2237, %v2366
        %v2622 = vmax.f32 %v2238, %v2368
        %v2623 = vmax.f32 %v2239, %v2370
        %v2624 = vmax.f32 %v2240, %v2372
        %v2625 = vmax.f32 %v2241, %v2374
        %v2626 = vmax.f32 %v2242, %v2376
        %v2627 = vmax.f32 %v2243, %v2378
        %v2628 = vmax.f32 %v2244, %v2380
        %v2629 = vmax.f32 %v2245, %v2382
        %v2630 = vmax.f32 %v2246, %v2384
        %v2631 = vmax.f32 %v2247, %v2386
        %v2632 = vmax.f32 %v2248, %v2388
        %v2633 = vmax.f32 %v2249, %v2390
        %v2634 = vmax.f32 %v2250, %v2392
        %v2635 = vmax.f32 %v2251, %v2394
        %v2636 = vmax.f32 %v2252, %v2396
        %v2637 = vmax.f32 %v2253, %v2398
        %v2638 = vmax.f32 %v2254, %v2400
        %v2639 = vmax.f32 %v2255, %v2402
        %v2640 = vmax.f32 %v2256, %v2404
        %v2641 = vmax.f32 %v2257, %v2406
        %v2642 = vmax.f32 %v2258, %v2408
        %v2643 = vmax.f32 %v2259, %v2410
        %v2644 = vmax.f32 %v2260, %v2412
        %v2645 = vmax.f32 %v2261, %v2414
        %v2646 = vmax.f32 %v2262, %v2416
        %v2647 = vmax.f32 %v2263, %v2418
        %v2648 = vmax.f32 %v2264, %v2420
        %v2649 = vmax.f32 %v2265, %v2422
        %v2650 = vmax.f32 %v2266, %v2424
        %v2651 = vmax.f32 %v2267, %v2426
        %v2652 = vmax.f32 %v2268, %v2428
        %v2653 = vmax.f32 %v2269, %v2430
        %v2654 = vmax.f32 %v2270, %v2432
        %v2655 = vmax.f32 %v2271, %v2434
        %v2656 = vmax.f32 %v2272, %v2436
        %v2657 = vmax.f32 %v2273, %v2438
        %v2658 = vmax.f32 %v2274, %v2440
        %v2659 = vmax.f32 %v2275, %v2442
        %v2660 = vmax.f32 %v2276, %v2444
        %v2661 = vmax.f32 %v2277, %v2446
        %v2662 = vmax.f32 %v2278, %v2448
        %v2663 = vmax.f32 %v2279, %v2450
        %v2664 = vmax.f32 %v2280, %v2452
        %v2665 = vmax.f32 %v2281, %v2454
        %v2666 = vmax.f32 %v2282, %v2456
        %v2667 = vmax.f32 %v2283, %v2458
        %v2668 = vmax.f32 %v2284, %v2460
        %v2669 = vmax.f32 %v2285, %v2462
        %v2670 = vmax.f32 %v2286, %v2464
        %v2671 = vmax.f32 %v2287, %v2466
        %v2672 = vmax.f32 %v2288, %v2468
        %v2673 = vmax.f32 %v2289, %v2470
        %v2674 = vmax.f32 %v2290, %v2472
        %v2675 = vmax.f32 %v2291, %v2474
        %v2676 = vmax.f32 %v2292, %v2476
        %v2677 = vmax.f32 %v2293, %v2478
        %v2678 = vmax.f32 %v2294, %v2480
        %v2679 = vmax.f32 %v2295, %v2482
        %v2680 = vmax.f32 %v2296, %v2484
        %v2681 = vmax.f32 %v2297, %v2486
        %v2682 = vmax.f32 %v2298, %v2488
        %v2683 = vmax.f32 %v2299, %v2490
        %v2684 = vmax.f32 %v2300, %v2492
        %v2685 = vmax.f32 %v2301, %v2494
        %v2686 = vmax.f32 %v2302, %v2496
        %v2687 = vmax.f32 %v2303, %v2498
        %v2688 = vmax.f32 %v2304, %v2500
        %v2689 = vmax.f32 %v2305, %v2502
        %v2690 = vmax.f32 %v2306, %v2504
        %v2691 = vmax.f32 %v2307, %v2506
        %v2692 = vmax.f32 %v2308, %v2508
        %v2693 = vmax.f32 %v2309, %v2510
        %v2694 = vmax.f32 %v2310, %v2512
        %v2695 = vmax.f32 %v2311, %v2514
        %v2696 = vmax.f32 %v2312, %v2516
        %v2697 = vmax.f32 %v2313, %v2518
        %v2698 = vmax.f32 %v2314, %v2520
        %v2699 = vmax.f32 %v2315, %v2522
        %v2700 = vmax.f32 %v2316, %v2524
        %v2701 = vmax.f32 %v2317, %v2526
        %v2702 = vmax.f32 %v2318, %v2528
        %v2703 = vmax.f32 %v2319, %v2530
        %v2704 = vmax.f32 %v2320, %v2532
        %v2705 = vmax.f32 %v2321, %v2534
        %v2706 = vmax.f32 %v2322, %v2536
        %v2707 = vmax.f32 %v2323, %v2538
        %v2708 = vmax.f32 %v2324, %v2540
        %v2709 = vmax.f32 %v2325, %v2542
        %v2710 = vmax.f32 %v2326, %v2544
        %v2711 = vmax.f32 %v2327, %v2546
        %v2712 = vmax.f32 %v2328, %v2548
        %v2713 = vmax.f32 %v2329, %v2550
        %v2714 = vmax.f32 %v2330, %v2552
        %v2715 = vmax.f32 %v2331, %v2554
        %v2716 = vmax.f32 %v2332, %v2556
        %v2717 = vmax.f32 %v2333, %v2558
        %v2718 = vmax.f32 %v2334, %v2560
        %v2719 = vmax.f32 %v2335, %v2562
        %v2720 = vmax.f32 %v2336, %v2564
        %v2721 = vmax.f32 %v2337, %v2566
        %v2722 = vmax.f32 %v2338, %v2568
        %v2723 = vmax.f32 %v2339, %v2570
        %v2724 = vmax.f32 %v2340, %v2572
        %v2725 = vmax.f32 %v2341, %v2574
        %v2726 = vmax.f32 %v2342, %v2576
        %v2727 = vmax.f32 %v2343, %v2578
        %v2728 = vmax.f32 %v2344, %v2580
        %v2729 = vmax.f32 %v2345, %v2582
        %v2730 = vmax.f32 %v2346, %v2584
        %v2731 = vmax.f32 %v2347, %v2586
        %v2732 = vmax.f32 %v2348, %v2588
        %v2733 = vmax.f32 %v2349, %v2590
        %v2734 = vmax.f32 %v2350, %v2592
        %v2735 = vmax.f32 %v2351, %v2594
        %v2736 = vmax.f32 %v2352, %v2596
        %v2737 = vmax.f32 %v2353, %v2598
        %v2738 = vmax.f32 %v2354, %v2600
        %v2739 = vmax.f32 %v2355, %v2602
        %v2740 = vmax.f32 %v2356, %v2604
        %v2741 = vmax.f32 %v2357, %v2606
        %v2742 = vmax.f32 %v2358, %v2608
        %v2743 = vmax.f32 %v2359, %v2610
        %v2744 = vmax.f32 %v2360, %v2612
        %v2745 = vmax.f32 %v2361, %v2614
        %v2746 = vmax.f32 %v2362, %v2616
        %v2747 = vmax.f32 %v2363, %v2618
        %v2748 = vmax.f32 %v2364, %v2620
        %vm2749 = vcmask 7168
        %2750 = vst.msk [vmem:[%s324] sm:$0xff] %vm2749, %v2621
        %2751 = vst.msk [vmem:[%s324 + $0x8] sm:$0xff] %vm2749, %v2622
        %2752 = vst.msk [vmem:[%s324 + $0x10] sm:$0xff] %vm2749, %v2623
        %2753 = vst.msk [vmem:[%s324 + $0x18] sm:$0xff] %vm2749, %v2624
        %2754 = vst.msk [vmem:[%s324 + $0x20] sm:$0xff] %vm2749, %v2625
        %2755 = vst.msk [vmem:[%s324 + $0x28] sm:$0xff] %vm2749, %v2626
        %2756 = vst.msk [vmem:[%s324 + $0x30] sm:$0xff] %vm2749, %v2627
        %2757 = vst.msk [vmem:[%s324 + $0x38] sm:$0xff] %vm2749, %v2628
        %2758 = vst.msk [vmem:[%s324 + $0x40] sm:$0xff] %vm2749, %v2629
        %2759 = vst.msk [vmem:[%s324 + $0x48] sm:$0xff] %vm2749, %v2630
        %2760 = vst.msk [vmem:[%s324 + $0x50] sm:$0xff] %vm2749, %v2631
        %2761 = vst.msk [vmem:[%s324 + $0x58] sm:$0xff] %vm2749, %v2632
        %2762 = vst.msk [vmem:[%s324 + $0x60] sm:$0xff] %vm2749, %v2633
        %2763 = vst.msk [vmem:[%s324 + $0x68] sm:$0xff] %vm2749, %v2634
        %2764 = vst.msk [vmem:[%s324 + $0x70] sm:$0xff] %vm2749, %v2635
        %2765 = vst.msk [vmem:[%s324 + $0x78] sm:$0xff] %vm2749, %v2636
        %2766 = vst.msk [vmem:[%s324 + $0x80] sm:$0xff] %vm2749, %v2637
        %2767 = vst.msk [vmem:[%s324 + $0x88] sm:$0xff] %vm2749, %v2638
        %2768 = vst.msk [vmem:[%s324 + $0x90] sm:$0xff] %vm2749, %v2639
        %2769 = vst.msk [vmem:[%s324 + $0x98] sm:$0xff] %vm2749, %v2640
        %2770 = vst.msk [vmem:[%s324 + $0xa0] sm:$0xff] %vm2749, %v2641
        %2771 = vst.msk [vmem:[%s324 + $0xa8] sm:$0xff] %vm2749, %v2642
        %2772 = vst.msk [vmem:[%s324 + $0xb0] sm:$0xff] %vm2749, %v2643
        %2773 = vst.msk [vmem:[%s324 + $0xb8] sm:$0xff] %vm2749, %v2644
        %2774 = vst.msk [vmem:[%s324 + $0xc0] sm:$0xff] %vm2749, %v2645
        %2775 = vst.msk [vmem:[%s324 + $0xc8] sm:$0xff] %vm2749, %v2646
        %2776 = vst.msk [vmem:[%s324 + $0xd0] sm:$0xff] %vm2749, %v2647
        %2777 = vst.msk [vmem:[%s324 + $0xd8] sm:$0xff] %vm2749, %v2648
        %2778 = vst.msk [vmem:[%s324 + $0xe0] sm:$0xff] %vm2749, %v2649
        %2779 = vst.msk [vmem:[%s324 + $0xe8] sm:$0xff] %vm2749, %v2650
        %2780 = vst.msk [vmem:[%s324 + $0xf0] sm:$0xff] %vm2749, %v2651
        %2781 = vst.msk [vmem:[%s324 + $0xf8] sm:$0xff] %vm2749, %v2652
        %2782 = vst.msk [vmem:[%s324 + $0x100] sm:$0xff] %vm2749, %v2653
        %2783 = vst.msk [vmem:[%s324 + $0x108] sm:$0xff] %vm2749, %v2654
        %2784 = vst.msk [vmem:[%s324 + $0x110] sm:$0xff] %vm2749, %v2655
        %2785 = vst.msk [vmem:[%s324 + $0x118] sm:$0xff] %vm2749, %v2656
        %2786 = vst.msk [vmem:[%s324 + $0x120] sm:$0xff] %vm2749, %v2657
        %2787 = vst.msk [vmem:[%s324 + $0x128] sm:$0xff] %vm2749, %v2658
        %2788 = vst.msk [vmem:[%s324 + $0x130] sm:$0xff] %vm2749, %v2659
        %2789 = vst.msk [vmem:[%s324 + $0x138] sm:$0xff] %vm2749, %v2660
        %2790 = vst.msk [vmem:[%s324 + $0x140] sm:$0xff] %vm2749, %v2661
        %2791 = vst.msk [vmem:[%s324 + $0x148] sm:$0xff] %vm2749, %v2662
        %2792 = vst.msk [vmem:[%s324 + $0x150] sm:$0xff] %vm2749, %v2663
        %2793 = vst.msk [vmem:[%s324 + $0x158] sm:$0xff] %vm2749, %v2664
        %2794 = vst.msk [vmem:[%s324 + $0x160] sm:$0xff] %vm2749, %v2665
        %2795 = vst.msk [vmem:[%s324 + $0x168] sm:$0xff] %vm2749, %v2666
        %2796 = vst.msk [vmem:[%s324 + $0x170] sm:$0xff] %vm2749, %v2667
        %2797 = vst.msk [vmem:[%s324 + $0x178] sm:$0xff] %vm2749, %v2668
        %2798 = vst.msk [vmem:[%s324 + $0x180] sm:$0xff] %vm2749, %v2669
        %2799 = vst.msk [vmem:[%s324 + $0x188] sm:$0xff] %vm2749, %v2670
        %2800 = vst.msk [vmem:[%s324 + $0x190] sm:$0xff] %vm2749, %v2671
        %2801 = vst.msk [vmem:[%s324 + $0x198] sm:$0xff] %vm2749, %v2672
        %2802 = vst.msk [vmem:[%s324 + $0x1a0] sm:$0xff] %vm2749, %v2673
        %2803 = vst.msk [vmem:[%s324 + $0x1a8] sm:$0xff] %vm2749, %v2674
        %2804 = vst.msk [vmem:[%s324 + $0x1b0] sm:$0xff] %vm2749, %v2675
        %2805 = vst.msk [vmem:[%s324 + $0x1b8] sm:$0xff] %vm2749, %v2676
        %2806 = vst.msk [vmem:[%s324 + $0x1c0] sm:$0xff] %vm2749, %v2677
        %2807 = vst.msk [vmem:[%s324 + $0x1c8] sm:$0xff] %vm2749, %v2678
        %2808 = vst.msk [vmem:[%s324 + $0x1d0] sm:$0xff] %vm2749, %v2679
        %2809 = vst.msk [vmem:[%s324 + $0x1d8] sm:$0xff] %vm2749, %v2680
        %2810 = vst.msk [vmem:[%s324 + $0x1e0] sm:$0xff] %vm2749, %v2681
        %2811 = vst.msk [vmem:[%s324 + $0x1e8] sm:$0xff] %vm2749, %v2682
        %2812 = vst.msk [vmem:[%s324 + $0x1f0] sm:$0xff] %vm2749, %v2683
        %2813 = vst.msk [vmem:[%s324 + $0x1f8] sm:$0xff] %vm2749, %v2684
        %2814 = vst.msk [vmem:[%s324 + $0x200] sm:$0xff] %vm2749, %v2685
        %2815 = vst.msk [vmem:[%s324 + $0x208] sm:$0xff] %vm2749, %v2686
        %2816 = vst.msk [vmem:[%s324 + $0x210] sm:$0xff] %vm2749, %v2687
        %2817 = vst.msk [vmem:[%s324 + $0x218] sm:$0xff] %vm2749, %v2688
        %2818 = vst.msk [vmem:[%s324 + $0x220] sm:$0xff] %vm2749, %v2689
        %2819 = vst.msk [vmem:[%s324 + $0x228] sm:$0xff] %vm2749, %v2690
        %2820 = vst.msk [vmem:[%s324 + $0x230] sm:$0xff] %vm2749, %v2691
        %2821 = vst.msk [vmem:[%s324 + $0x238] sm:$0xff] %vm2749, %v2692
        %2822 = vst.msk [vmem:[%s324 + $0x240] sm:$0xff] %vm2749, %v2693
        %2823 = vst.msk [vmem:[%s324 + $0x248] sm:$0xff] %vm2749, %v2694
        %2824 = vst.msk [vmem:[%s324 + $0x250] sm:$0xff] %vm2749, %v2695
        %2825 = vst.msk [vmem:[%s324 + $0x258] sm:$0xff] %vm2749, %v2696
        %2826 = vst.msk [vmem:[%s324 + $0x260] sm:$0xff] %vm2749, %v2697
        %2827 = vst.msk [vmem:[%s324 + $0x268] sm:$0xff] %vm2749, %v2698
        %2828 = vst.msk [vmem:[%s324 + $0x270] sm:$0xff] %vm2749, %v2699
        %2829 = vst.msk [vmem:[%s324 + $0x278] sm:$0xff] %vm2749, %v2700
        %2830 = vst.msk [vmem:[%s324 + $0x280] sm:$0xff] %vm2749, %v2701
        %2831 = vst.msk [vmem:[%s324 + $0x288] sm:$0xff] %vm2749, %v2702
        %2832 = vst.msk [vmem:[%s324 + $0x290] sm:$0xff] %vm2749, %v2703
        %2833 = vst.msk [vmem:[%s324 + $0x298] sm:$0xff] %vm2749, %v2704
        %2834 = vst.msk [vmem:[%s324 + $0x2a0] sm:$0xff] %vm2749, %v2705
        %2835 = vst.msk [vmem:[%s324 + $0x2a8] sm:$0xff] %vm2749, %v2706
        %2836 = vst.msk [vmem:[%s324 + $0x2b0] sm:$0xff] %vm2749, %v2707
        %2837 = vst.msk [vmem:[%s324 + $0x2b8] sm:$0xff] %vm2749, %v2708
        %2838 = vst.msk [vmem:[%s324 + $0x2c0] sm:$0xff] %vm2749, %v2709
        %2839 = vst.msk [vmem:[%s324 + $0x2c8] sm:$0xff] %vm2749, %v2710
        %2840 = vst.msk [vmem:[%s324 + $0x2d0] sm:$0xff] %vm2749, %v2711
        %2841 = vst.msk [vmem:[%s324 + $0x2d8] sm:$0xff] %vm2749, %v2712
        %2842 = vst.msk [vmem:[%s324 + $0x2e0] sm:$0xff] %vm2749, %v2713
        %2843 = vst.msk [vmem:[%s324 + $0x2e8] sm:$0xff] %vm2749, %v2714
        %2844 = vst.msk [vmem:[%s324 + $0x2f0] sm:$0xff] %vm2749, %v2715
        %2845 = vst.msk [vmem:[%s324 + $0x2f8] sm:$0xff] %vm2749, %v2716
        %2846 = vst.msk [vmem:[%s324 + $0x300] sm:$0xff] %vm2749, %v2717
        %2847 = vst.msk [vmem:[%s324 + $0x308] sm:$0xff] %vm2749, %v2718
        %2848 = vst.msk [vmem:[%s324 + $0x310] sm:$0xff] %vm2749, %v2719
        %2849 = vst.msk [vmem:[%s324 + $0x318] sm:$0xff] %vm2749, %v2720
        %2850 = vst.msk [vmem:[%s324 + $0x320] sm:$0xff] %vm2749, %v2721
        %2851 = vst.msk [vmem:[%s324 + $0x328] sm:$0xff] %vm2749, %v2722
        %2852 = vst.msk [vmem:[%s324 + $0x330] sm:$0xff] %vm2749, %v2723
        %2853 = vst.msk [vmem:[%s324 + $0x338] sm:$0xff] %vm2749, %v2724
        %2854 = vst.msk [vmem:[%s324 + $0x340] sm:$0xff] %vm2749, %v2725
        %2855 = vst.msk [vmem:[%s324 + $0x348] sm:$0xff] %vm2749, %v2726
        %2856 = vst.msk [vmem:[%s324 + $0x350] sm:$0xff] %vm2749, %v2727
        %2857 = vst.msk [vmem:[%s324 + $0x358] sm:$0xff] %vm2749, %v2728
        %2858 = vst.msk [vmem:[%s324 + $0x360] sm:$0xff] %vm2749, %v2729
        %2859 = vst.msk [vmem:[%s324 + $0x368] sm:$0xff] %vm2749, %v2730
        %2860 = vst.msk [vmem:[%s324 + $0x370] sm:$0xff] %vm2749, %v2731
        %2861 = vst.msk [vmem:[%s324 + $0x378] sm:$0xff] %vm2749, %v2732
        %2862 = vst.msk [vmem:[%s324 + $0x380] sm:$0xff] %vm2749, %v2733
        %2863 = vst.msk [vmem:[%s324 + $0x388] sm:$0xff] %vm2749, %v2734
        %2864 = vst.msk [vmem:[%s324 + $0x390] sm:$0xff] %vm2749, %v2735
        %2865 = vst.msk [vmem:[%s324 + $0x398] sm:$0xff] %vm2749, %v2736
        %2866 = vst.msk [vmem:[%s324 + $0x3a0] sm:$0xff] %vm2749, %v2737
        %2867 = vst.msk [vmem:[%s324 + $0x3a8] sm:$0xff] %vm2749, %v2738
        %2868 = vst.msk [vmem:[%s324 + $0x3b0] sm:$0xff] %vm2749, %v2739
        %2869 = vst.msk [vmem:[%s324 + $0x3b8] sm:$0xff] %vm2749, %v2740
        %2870 = vst.msk [vmem:[%s324 + $0x3c0] sm:$0xff] %vm2749, %v2741
        %2871 = vst.msk [vmem:[%s324 + $0x3c8] sm:$0xff] %vm2749, %v2742
        %2872 = vst.msk [vmem:[%s324 + $0x3d0] sm:$0xff] %vm2749, %v2743
        %2873 = vst.msk [vmem:[%s324 + $0x3d8] sm:$0xff] %vm2749, %v2744
        %2874 = vst.msk [vmem:[%s324 + $0x3e0] sm:$0xff] %vm2749, %v2745
        %2875 = vst.msk [vmem:[%s324 + $0x3e8] sm:$0xff] %vm2749, %v2746
        %2876 = vst.msk [vmem:[%s324 + $0x3f0] sm:$0xff] %vm2749, %v2747
        %2877 = vst.msk [vmem:[%s324 + $0x3f8] sm:$0xff] %vm2749, %v2748
        %p2878 = scmp.lt.s32.totalorder %s26, 1
        %s2879 = scalar_select %p2878, %s26, 1
        %p2880 = scmp.lt.s32.totalorder %s27, 1
        %s2881 = scalar_select %p2880, %s27, 1
        %s2882 = smul.addr %s2881, 128
        %s2883 = smul.addr %s2879, 256
        %s2884 = sadd.s32 %s2882, %s2883
        %s2885 = smul.addr %s2884, 8
        %s2886 = scalar_lea.vmem %s6, %s2885
        // Predicated region
        $region57: #{tpu_custom_call.1} parent=43 // pred_check
          %p2887 = pneg %p197
        $region58: #{tpu_custom_call.1} parent=43 // pred_check_branch
          %2889 = sbr.rel (%p2887) target = $region60
        $region59: #{tpu_custom_call.1} parent=43 // pred_region
          _
        $region60: #{tpu_custom_call.1} parent=43 // pred_fallthru
          _
      $region44: #{tpu_custom_call.1} parent=5 // pred_fallthru
        _
      %p2890 = scmp.le.s32.totalorder 2, %s16
      // Predicated region
      $region61: #{tpu_custom_call.1} parent=5 // pred_check
        %p2891 = pneg %p2890
      $region62: #{tpu_custom_call.1} parent=5 // pred_check_branch
        %2893 = sbr.rel (%p2891) target = $region64
      $region63: #{tpu_custom_call.1} parent=5 // pred_region
        %s2894 = ssub.s32 %s16, 2
        // Predicated region
        $region65: #{tpu_custom_call.1} parent=63 // pred_check
          %p2895 = pneg %p203
        $region66: #{tpu_custom_call.1} parent=63 // pred_check_branch
          %2897 = sbr.rel (%p2895) target = $region68
        $region67: #{tpu_custom_call.1} parent=63 // pred_region
          %p2898 = scmp.lt.s32.totalorder %s29, 1
          %s2899 = scalar_select %p2898, %s29, 1
          %p2900 = scmp.lt.s32.totalorder %s30, 1
          %s2901 = scalar_select %p2900, %s30, 1
          %s2902 = smul.addr %s2901, 128
          %s2903 = smul.addr %s2899, 256
          %s2904 = sadd.s32 %s2902, %s2903
          %s2905 = smul.addr %s2904, 8
          %s2906 = scalar_lea.vmem %s6, %s2905
        $region68: #{tpu_custom_call.1} parent=63 // pred_fallthru
          _
      $region64: #{tpu_custom_call.1} parent=5 // pred_fallthru
        _
    $region6: #{tpu_custom_call.1} parent=1 // loop_footer
      %s20 = sadd.s32 1, %s16
    $region7: #{tpu_custom_call.1} parent=1 // loop_footer_branch
      %15 = sbr.rel target = $region3
    $region8: #{tpu_custom_call.1} parent=1 // loop_exit
      _
    %2907 = vsyncpa [#allocation3], 1
    %s2908 = scalar_lea.sflag [#allocation3], 1
    %2909 = vsyncpa %s2908, 1
    %2910 = vsyncpa [#allocation5], 1

</llo_original>
